<compile_context>
chip_gen: v5e
topology: v5e:2x2
jax: 0.10.0
libtpu: 0.0.40
codegen_flags: <defaults>
</compile_context>

<pallas_src>
import jax
import jax.numpy as jnp
from jax.experimental import pallas as pl
from jax.experimental.pallas import tpu as pltpu

d_k = d_v = 64
d_model = 512
n_heads = 8
SCALE = 1.0 / (d_k ** 0.5)
LN_EPS = 1e-5


# ----------------------------------------------------------------- kernel ---

def _mha_kernel(mask_ref, xq_ref, xk_ref, xv_ref,
                wq_ref, wk_ref, wv_ref, wfc_ref,
                out_ref, attn_ref):
    # Per grid step (one batch element):
    #   mask: (Lq, Lk) int8      xq: (Lq, d_model)   xk/xv: (Lk, d_model)
    #   weights: full (512, 512) tiles, resident across the grid
    #   out: (Lq, d_model)       attn: (H, Lq, Lk)
    xq = xq_ref[...]
    mask = mask_ref[...]

    # Fused Q/K/V projections (one activation read, weights already in VMEM).
    q = jnp.dot(xq, wq_ref[...], preferred_element_type=jnp.float32)        # (Lq, H*d_k)
    k = jnp.dot(xk_ref[...], wk_ref[...], preferred_element_type=jnp.float32)  # (Lk, H*d_k)
    v = jnp.dot(xv_ref[...], wv_ref[...], preferred_element_type=jnp.float32)  # (Lk, H*d_v)

    # Accumulate the output projection head-by-head onto the residual:
    #   y = input_Q + sum_h ctx_h @ W_fc[h*d_v:(h+1)*d_v, :]
    y = xq
    for h in range(n_heads):  # static unroll; all heads per grid step
        qh = q[:, h * d_k:(h + 1) * d_k]                                   # (Lq, d_k)
        kh = k[:, h * d_k:(h + 1) * d_k]                                   # (Lk, d_k)
        vh = v[:, h * d_v:(h + 1) * d_v]                                   # (Lk, d_v)

        s = jnp.dot(qh, kh.T, preferred_element_type=jnp.float32) * SCALE  # (Lq, Lk)
        s = jnp.where(mask != 0, jnp.float32(-1e9), s)

        m = jnp.max(s, axis=-1, keepdims=True)
        e = jnp.exp(s - m)
        denom = jnp.sum(e, axis=-1, keepdims=True)
        a = e * pl.reciprocal(denom, approx=False)                         # (Lq, Lk)
        attn_ref[h] = a

        ctx_h = jnp.dot(a, vh, preferred_element_type=jnp.float32)         # (Lq, d_v)
        y = y + jnp.dot(ctx_h, wfc_ref[h * d_v:(h + 1) * d_v, :],
                        preferred_element_type=jnp.float32)

    # LayerNorm(output + residual), gamma=1, beta=0 (fresh nn.LayerNorm init).
    mean = jnp.mean(y, axis=-1, keepdims=True)
    var = jnp.mean((y - mean) * (y - mean), axis=-1, keepdims=True)
    out_ref[...] = (y - mean) * jax.lax.rsqrt(var + LN_EPS)


# ---------------------------------------------------------------- wrapper ---

def multi_head_attention(params, input_Q, input_K, input_V, attn_mask):
    """input_Q/K/V: [B, L, d_model] f32; attn_mask: [B, L, L] bool (True = masked)."""
    B, Lq, _ = input_Q.shape
    Lk = input_K.shape[1]
    mask_i8 = attn_mask.astype(jnp.int8)

    out, attn = pl.pallas_call(
        _mha_kernel,
        out_shape=(
            jax.ShapeDtypeStruct((B, Lq, d_model), jnp.float32),
            jax.ShapeDtypeStruct((B, n_heads, Lq, Lk), jnp.float32),
        ),
        grid=(B,),
        in_specs=[
            pl.BlockSpec((None, Lq, Lk), lambda b: (b, 0, 0)),              # mask (int8)
            pl.BlockSpec((None, Lq, d_model), lambda b: (b, 0, 0)),         # input_Q
            pl.BlockSpec((None, Lk, d_model), lambda b: (b, 0, 0)),         # input_K
            pl.BlockSpec((None, Lk, d_model), lambda b: (b, 0, 0)),         # input_V
            pl.BlockSpec((d_model, n_heads * d_k), lambda b: (0, 0)),       # W_Q (resident)
            pl.BlockSpec((d_model, n_heads * d_k), lambda b: (0, 0)),       # W_K
            pl.BlockSpec((d_model, n_heads * d_v), lambda b: (0, 0)),       # W_V
            pl.BlockSpec((n_heads * d_v, d_model), lambda b: (0, 0)),       # W_fc
        ],
        out_specs=(
            pl.BlockSpec((None, Lq, d_model), lambda b: (b, 0, 0)),
            pl.BlockSpec((None, n_heads, Lq, Lk), lambda b: (b, 0, 0, 0)),
        ),
        compiler_params=pltpu.CompilerParams(
            dimension_semantics=("parallel",),
            vmem_limit_bytes=32 * 1024 * 1024,
        ),
    )(mask_i8, input_Q, input_K, input_V,
      params["W_Q"], params["W_K"], params["W_V"], params["W_fc"])
    return out, attn


# -------------------------------------------------------------- reference ---

def _reference(params, input_Q, input_K, input_V, attn_mask):
    B, Lq, _ = input_Q.shape
    Lk = input_K.shape[1]
    Q = (input_Q @ params["W_Q"]).reshape(B, Lq, n_heads, d_k).transpose(0, 2, 1, 3)
    K = (input_K @ params["W_K"]).reshape(B, Lk, n_heads, d_k).transpose(0, 2, 1, 3)
    V = (input_V @ params["W_V"]).reshape(B, Lk, n_heads, d_v).transpose(0, 2, 1, 3)
    scores = jnp.einsum("bhqd,bhkd->bhqk", Q, K) * SCALE
    scores = jnp.where(attn_mask[:, None, :, :], -1e9, scores)
    attn = jax.nn.softmax(scores, axis=-1)
    ctx = jnp.einsum("bhqk,bhkd->bhqd", attn, V)
    ctx = ctx.transpose(0, 2, 1, 3).reshape(B, Lq, n_heads * d_v)
    y = ctx @ params["W_fc"] + input_Q
    mean = y.mean(-1, keepdims=True)
    var = ((y - mean) ** 2).mean(-1, keepdims=True)
    return (y - mean) / jnp.sqrt(var + LN_EPS), attn


# ------------------------------------------------------------------- main ---

if __name__ == "__main__":
    B, L = 2, 8  # small shapes; d_model/n_heads/d_k fixed by the module

    key = jax.random.PRNGKey(0)
    k1, k2, k3, k4, k5, k6, k7 = jax.random.split(key, 7)

    params = {
        "W_Q": 0.02 * jax.random.normal(k1, (d_model, n_heads * d_k), jnp.float32),
        "W_K": 0.02 * jax.random.normal(k2, (d_model, n_heads * d_k), jnp.float32),
        "W_V": 0.02 * jax.random.normal(k3, (d_model, n_heads * d_v), jnp.float32),
        "W_fc": 0.02 * jax.random.normal(k4, (n_heads * d_v, d_model), jnp.float32),
    }

    input_Q = jax.random.normal(k5, (B, L, d_model), jnp.float32)
    input_K = jax.random.normal(k6, (B, L, d_model), jnp.float32)
    input_V = jax.random.normal(k7, (B, L, d_model), jnp.float32)
    # causal-style mask: True where key position > query position (masked out)
    attn_mask = jnp.triu(jnp.ones((L, L), dtype=bool), k=1)[None].repeat(B, axis=0)

    out, attn = multi_head_attention(params, input_Q, input_K, input_V, attn_mask)
    out = jax.block_until_ready(out)
    attn = jax.block_until_ready(attn)

    ref_out, ref_attn = _reference(params, input_Q, input_K, input_V, attn_mask)
    assert out.shape == (B, L, d_model)
    assert attn.shape == (B, n_heads, L, L)
    assert jnp.allclose(out, ref_out, atol=1e-4, rtol=1e-4)
    assert jnp.allclose(attn, ref_attn, atol=1e-5, rtol=1e-5)

    print("KERNEL_OK")
</pallas_src>

<mosaic_0001>
module attributes {stable_mosaic.version = 11 : i64} {
  func.func @_mha_kernel(%arg0: i32, %arg1: memref<1x8x8xi8, #tpu.memory_space<vmem>>, %arg2: memref<1x8x512xf32, #tpu.memory_space<vmem>>, %arg3: memref<1x8x512xf32, #tpu.memory_space<vmem>>, %arg4: memref<1x8x512xf32, #tpu.memory_space<vmem>>, %arg5: memref<512x512xf32, #tpu.memory_space<vmem>>, %arg6: memref<512x512xf32, #tpu.memory_space<vmem>>, %arg7: memref<512x512xf32, #tpu.memory_space<vmem>>, %arg8: memref<512x512xf32, #tpu.memory_space<vmem>>, %arg9: memref<1x8x512xf32, #tpu.memory_space<vmem>>, %arg10: memref<1x8x8x8xf32, #tpu.memory_space<vmem>>) attributes {dimension_semantics = [#tpu.dimension_semantics<parallel>], iteration_bounds = array<i64: 2>, scalar_prefetch = 0 : i64, scratch_operands = 0 : i64, tpu.core_type = #tpu.core_type<tc>, window_params = [{transform_indices = @transform_0, window_bounds = array<i64: 1, 8, 8>}, {transform_indices = @transform_1, window_bounds = array<i64: 1, 8, 512>}, {transform_indices = @transform_2, window_bounds = array<i64: 1, 8, 512>}, {transform_indices = @transform_3, window_bounds = array<i64: 1, 8, 512>}, {pipeline_mode = #tpu.pipeline_mode<synchronous>, transform_indices = @transform_4, window_bounds = array<i64: 512, 512>}, {pipeline_mode = #tpu.pipeline_mode<synchronous>, transform_indices = @transform_5, window_bounds = array<i64: 512, 512>}, {pipeline_mode = #tpu.pipeline_mode<synchronous>, transform_indices = @transform_6, window_bounds = array<i64: 512, 512>}, {pipeline_mode = #tpu.pipeline_mode<synchronous>, transform_indices = @transform_7, window_bounds = array<i64: 512, 512>}, {transform_indices = @transform_8, window_bounds = array<i64: 1, 8, 512>}, {transform_indices = @transform_9, window_bounds = array<i64: 1, 8, 8, 8>}]} {
    %c0 = arith.constant 0 : index
    %c0_0 = arith.constant 0 : index
    %c0_1 = arith.constant 0 : index
    %0 = vector.load %arg2[%c0, %c0_0, %c0_1] : memref<1x8x512xf32, #tpu.memory_space<vmem>>, vector<1x8x512xf32>
    %1 = vector.shape_cast %0 : vector<1x8x512xf32> to vector<8x512xf32>
    %c0_2 = arith.constant 0 : index
    %c0_3 = arith.constant 0 : index
    %c0_4 = arith.constant 0 : index
    %2 = vector.load %arg1[%c0_2, %c0_3, %c0_4] : memref<1x8x8xi8, #tpu.memory_space<vmem>>, vector<1x8x8xi8>
    %3 = vector.shape_cast %2 : vector<1x8x8xi8> to vector<8x8xi8>
    %c0_5 = arith.constant 0 : index
    %c0_6 = arith.constant 0 : index
    %4 = vector.load %arg5[%c0_5, %c0_6] : memref<512x512xf32, #tpu.memory_space<vmem>>, vector<512x512xf32>
    %cst = arith.constant dense<0.000000e+00> : vector<8x512xf32>
    %5 = tpu.matmul %1, %4, %cst {dimension_numbers = #tpu.dot_dimension_numbers<[1], [0], [0], [1], [0, 0, 1, 1], [], []>} : vector<8x512xf32>, vector<512x512xf32>, vector<8x512xf32> -> vector<8x512xf32>
    %c0_7 = arith.constant 0 : index
    %c0_8 = arith.constant 0 : index
    %c0_9 = arith.constant 0 : index
    %6 = vector.load %arg3[%c0_7, %c0_8, %c0_9] : memref<1x8x512xf32, #tpu.memory_space<vmem>>, vector<1x8x512xf32>
    %7 = vector.shape_cast %6 : vector<1x8x512xf32> to vector<8x512xf32>
    %c0_10 = arith.constant 0 : index
    %c0_11 = arith.constant 0 : index
    %8 = vector.load %arg6[%c0_10, %c0_11] : memref<512x512xf32, #tpu.memory_space<vmem>>, vector<512x512xf32>
    %cst_12 = arith.constant dense<0.000000e+00> : vector<8x512xf32>
    %9 = tpu.matmul %7, %8, %cst_12 {dimension_numbers = #tpu.dot_dimension_numbers<[1], [0], [0], [1], [0, 0, 1, 1], [], []>} : vector<8x512xf32>, vector<512x512xf32>, vector<8x512xf32> -> vector<8x512xf32>
    %c0_13 = arith.constant 0 : index
    %c0_14 = arith.constant 0 : index
    %c0_15 = arith.constant 0 : index
    %10 = vector.load %arg4[%c0_13, %c0_14, %c0_15] : memref<1x8x512xf32, #tpu.memory_space<vmem>>, vector<1x8x512xf32>
    %11 = vector.shape_cast %10 : vector<1x8x512xf32> to vector<8x512xf32>
    %c0_16 = arith.constant 0 : index
    %c0_17 = arith.constant 0 : index
    %12 = vector.load %arg7[%c0_16, %c0_17] : memref<512x512xf32, #tpu.memory_space<vmem>>, vector<512x512xf32>
    %cst_18 = arith.constant dense<0.000000e+00> : vector<8x512xf32>
    %13 = tpu.matmul %11, %12, %cst_18 {dimension_numbers = #tpu.dot_dimension_numbers<[1], [0], [0], [1], [0, 0, 1, 1], [], []>} : vector<8x512xf32>, vector<512x512xf32>, vector<8x512xf32> -> vector<8x512xf32>
    %14 = vector.extract_strided_slice %5 {offsets = [0, 0], sizes = [8, 64], strides = [1, 1]} : vector<8x512xf32> to vector<8x64xf32>
    %15 = vector.extract_strided_slice %9 {offsets = [0, 0], sizes = [8, 64], strides = [1, 1]} : vector<8x512xf32> to vector<8x64xf32>
    %16 = vector.extract_strided_slice %13 {offsets = [0, 0], sizes = [8, 64], strides = [1, 1]} : vector<8x512xf32> to vector<8x64xf32>
    %17 = tpu.transpose %15, [1, 0] : vector<8x64xf32> -> vector<64x8xf32>
    %cst_19 = arith.constant dense<0.000000e+00> : vector<8x8xf32>
    %18 = tpu.matmul %14, %17, %cst_19 {dimension_numbers = #tpu.dot_dimension_numbers<[1], [0], [0], [1], [0, 0, 1, 1], [], []>} : vector<8x64xf32>, vector<64x8xf32>, vector<8x8xf32> -> vector<8x8xf32>
    %cst_20 = arith.constant 1.250000e-01 : f32
    %19 = vector.broadcast %cst_20 : f32 to vector<8x8xf32>
    %20 = arith.mulf %18, %19 : vector<8x8xf32>
    %c0_i8 = arith.constant 0 : i8
    %21 = vector.broadcast %c0_i8 : i8 to vector<8x8xi8>
    %22 = arith.cmpi ne, %3, %21 : vector<8x8xi8>
    %cst_21 = arith.constant -1.000000e+09 : f32
    %23 = vector.broadcast %cst_21 : f32 to vector<8x8xf32>
    %24 = arith.select %22, %23, %20 : vector<8x8xi1>, vector<8x8xf32>
    %cst_22 = arith.constant dense<0xFF800000> : vector<8xf32>
    %25 = vector.multi_reduction <maximumf>, %24, %cst_22 [1] : vector<8x8xf32> to vector<8xf32>
    %26 = vector.shape_cast %25 : vector<8xf32> to vector<8x1xf32>
    %27 = vector.broadcast %26 : vector<8x1xf32> to vector<8x8xf32>
    %28 = arith.subf %24, %27 : vector<8x8xf32>
    %29 = math.exp %28 : vector<8x8xf32>
    %cst_23 = arith.constant dense<0.000000e+00> : vector<8xf32>
    %30 = vector.multi_reduction <add>, %29, %cst_23 [1] : vector<8x8xf32> to vector<8xf32>
    %31 = vector.shape_cast %30 : vector<8xf32> to vector<8x1xf32>
    %32 = tpu.reciprocal %31 : vector<8x1xf32> -> vector<8x1xf32>
    %33 = vector.broadcast %32 : vector<8x1xf32> to vector<8x8xf32>
    %34 = arith.mulf %29, %33 : vector<8x8xf32>
    %c0_24 = arith.constant 0 : index
    %c0_25 = arith.constant 0 : index
    %c0_26 = arith.constant 0 : index
    %c0_27 = arith.constant 0 : index
    %35 = vector.load %arg10[%c0_24, %c0_25, %c0_26, %c0_27] : memref<1x8x8x8xf32, #tpu.memory_space<vmem>>, vector<1x1x8x8xf32>
    %36 = vector.shape_cast %35 : vector<1x1x8x8xf32> to vector<8x8xf32>
    %37 = vector.shape_cast %34 : vector<8x8xf32> to vector<1x1x8x8xf32>
    tpu.vector_store %arg10[%c0_24, %c0_25, %c0_26, %c0_27], %37 {strides = array<i32>} : memref<1x8x8x8xf32, #tpu.memory_space<vmem>>, vector<1x1x8x8xf32>,
    %cst_28 = arith.constant dense<0.000000e+00> : vector<8x64xf32>
    %38 = tpu.matmul %34, %16, %cst_28 {dimension_numbers = #tpu.dot_dimension_numbers<[1], [0], [0], [1], [0, 0, 1, 1], [], []>} : vector<8x8xf32>, vector<8x64xf32>, vector<8x64xf32> -> vector<8x64xf32>
    %c0_29 = arith.constant 0 : index
    %c0_30 = arith.constant 0 : index
    %39 = vector.load %arg8[%c0_29, %c0_30] : memref<512x512xf32, #tpu.memory_space<vmem>>, vector<64x512xf32>
    %cst_31 = arith.constant dense<0.000000e+00> : vector<8x512xf32>
    %40 = tpu.matmul %38, %39, %cst_31 {dimension_numbers = #tpu.dot_dimension_numbers<[1], [0], [0], [1], [0, 0, 1, 1], [], []>} : vector<8x64xf32>, vector<64x512xf32>, vector<8x512xf32> -> vector<8x512xf32>
    %41 = arith.addf %1, %40 : vector<8x512xf32>
    %42 = vector.extract_strided_slice %5 {offsets = [0, 64], sizes = [8, 64], strides = [1, 1]} : vector<8x512xf32> to vector<8x64xf32>
    %43 = vector.extract_strided_slice %9 {offsets = [0, 64], sizes = [8, 64], strides = [1, 1]} : vector<8x512xf32> to vector<8x64xf32>
    %44 = vector.extract_strided_slice %13 {offsets = [0, 64], sizes = [8, 64], strides = [1, 1]} : vector<8x512xf32> to vector<8x64xf32>
    %45 = tpu.transpose %43, [1, 0] : vector<8x64xf32> -> vector<64x8xf32>
    %cst_32 = arith.constant dense<0.000000e+00> : vector<8x8xf32>
    %46 = tpu.matmul %42, %45, %cst_32 {dimension_numbers = #tpu.dot_dimension_numbers<[1], [0], [0], [1], [0, 0, 1, 1], [], []>} : vector<8x64xf32>, vector<64x8xf32>, vector<8x8xf32> -> vector<8x8xf32>
    %cst_33 = arith.constant 1.250000e-01 : f32
    %47 = vector.broadcast %cst_33 : f32 to vector<8x8xf32>
    %48 = arith.mulf %46, %47 : vector<8x8xf32>
    %c0_i8_34 = arith.constant 0 : i8
    %49 = vector.broadcast %c0_i8_34 : i8 to vector<8x8xi8>
    %50 = arith.cmpi ne, %3, %49 : vector<8x8xi8>
    %cst_35 = arith.constant -1.000000e+09 : f32
    %51 = vector.broadcast %cst_35 : f32 to vector<8x8xf32>
    %52 = arith.select %50, %51, %48 : vector<8x8xi1>, vector<8x8xf32>
    %cst_36 = arith.constant dense<0xFF800000> : vector<8xf32>
    %53 = vector.multi_reduction <maximumf>, %52, %cst_36 [1] : vector<8x8xf32> to vector<8xf32>
    %54 = vector.shape_cast %53 : vector<8xf32> to vector<8x1xf32>
    %55 = vector.broadcast %54 : vector<8x1xf32> to vector<8x8xf32>
    %56 = arith.subf %52, %55 : vector<8x8xf32>
    %57 = math.exp %56 : vector<8x8xf32>
    %cst_37 = arith.constant dense<0.000000e+00> : vector<8xf32>
    %58 = vector.multi_reduction <add>, %57, %cst_37 [1] : vector<8x8xf32> to vector<8xf32>
    %59 = vector.shape_cast %58 : vector<8xf32> to vector<8x1xf32>
    %60 = tpu.reciprocal %59 : vector<8x1xf32> -> vector<8x1xf32>
    %61 = vector.broadcast %60 : vector<8x1xf32> to vector<8x8xf32>
    %62 = arith.mulf %57, %61 : vector<8x8xf32>
    %c0_38 = arith.constant 0 : index
    %c1 = arith.constant 1 : index
    %c0_39 = arith.constant 0 : index
    %c0_40 = arith.constant 0 : index
    %63 = vector.load %arg10[%c0_38, %c1, %c0_39, %c0_40] : memref<1x8x8x8xf32, #tpu.memory_space<vmem>>, vector<1x1x8x8xf32>
    %64 = vector.shape_cast %63 : vector<1x1x8x8xf32> to vector<8x8xf32>
    %65 = vector.shape_cast %62 : vector<8x8xf32> to vector<1x1x8x8xf32>
    tpu.vector_store %arg10[%c0_38, %c1, %c0_39, %c0_40], %65 {strides = array<i32>} : memref<1x8x8x8xf32, #tpu.memory_space<vmem>>, vector<1x1x8x8xf32>,
    %cst_41 = arith.constant dense<0.000000e+00> : vector<8x64xf32>
    %66 = tpu.matmul %62, %44, %cst_41 {dimension_numbers = #tpu.dot_dimension_numbers<[1], [0], [0], [1], [0, 0, 1, 1], [], []>} : vector<8x8xf32>, vector<8x64xf32>, vector<8x64xf32> -> vector<8x64xf32>
    %c64 = arith.constant 64 : index
    %c0_42 = arith.constant 0 : index
    %67 = vector.load %arg8[%c64, %c0_42] : memref<512x512xf32, #tpu.memory_space<vmem>>, vector<64x512xf32>
    %cst_43 = arith.constant dense<0.000000e+00> : vector<8x512xf32>
    %68 = tpu.matmul %66, %67, %cst_43 {dimension_numbers = #tpu.dot_dimension_numbers<[1], [0], [0], [1], [0, 0, 1, 1], [], []>} : vector<8x64xf32>, vector<64x512xf32>, vector<8x512xf32> -> vector<8x512xf32>
    %69 = arith.addf %41, %68 : vector<8x512xf32>
    %70 = vector.extract_strided_slice %5 {offsets = [0, 128], sizes = [8, 64], strides = [1, 1]} : vector<8x512xf32> to vector<8x64xf32>
    %71 = vector.extract_strided_slice %9 {offsets = [0, 128], sizes = [8, 64], strides = [1, 1]} : vector<8x512xf32> to vector<8x64xf32>
    %72 = vector.extract_strided_slice %13 {offsets = [0, 128], sizes = [8, 64], strides = [1, 1]} : vector<8x512xf32> to vector<8x64xf32>
    %73 = tpu.transpose %71, [1, 0] : vector<8x64xf32> -> vector<64x8xf32>
    %cst_44 = arith.constant dense<0.000000e+00> : vector<8x8xf32>
    %74 = tpu.matmul %70, %73, %cst_44 {dimension_numbers = #tpu.dot_dimension_numbers<[1], [0], [0], [1], [0, 0, 1, 1], [], []>} : vector<8x64xf32>, vector<64x8xf32>, vector<8x8xf32> -> vector<8x8xf32>
    %cst_45 = arith.constant 1.250000e-01 : f32
    %75 = vector.broadcast %cst_45 : f32 to vector<8x8xf32>
    %76 = arith.mulf %74, %75 : vector<8x8xf32>
    %c0_i8_46 = arith.constant 0 : i8
    %77 = vector.broadcast %c0_i8_46 : i8 to vector<8x8xi8>
    %78 = arith.cmpi ne, %3, %77 : vector<8x8xi8>
    %cst_47 = arith.constant -1.000000e+09 : f32
    %79 = vector.broadcast %cst_47 : f32 to vector<8x8xf32>
    %80 = arith.select %78, %79, %76 : vector<8x8xi1>, vector<8x8xf32>
    %cst_48 = arith.constant dense<0xFF800000> : vector<8xf32>
    %81 = vector.multi_reduction <maximumf>, %80, %cst_48 [1] : vector<8x8xf32> to vector<8xf32>
    %82 = vector.shape_cast %81 : vector<8xf32> to vector<8x1xf32>
    %83 = vector.broadcast %82 : vector<8x1xf32> to vector<8x8xf32>
    %84 = arith.subf %80, %83 : vector<8x8xf32>
    %85 = math.exp %84 : vector<8x8xf32>
    %cst_49 = arith.constant dense<0.000000e+00> : vector<8xf32>
    %86 = vector.multi_reduction <add>, %85, %cst_49 [1] : vector<8x8xf32> to vector<8xf32>
    %87 = vector.shape_cast %86 : vector<8xf32> to vector<8x1xf32>
    %88 = tpu.reciprocal %87 : vector<8x1xf32> -> vector<8x1xf32>
    %89 = vector.broadcast %88 : vector<8x1xf32> to vector<8x8xf32>
    %90 = arith.mulf %85, %89 : vector<8x8xf32>
    %c0_50 = arith.constant 0 : index
    %c2 = arith.constant 2 : index
    %c0_51 = arith.constant 0 : index
    %c0_52 = arith.constant 0 : index
    %91 = vector.load %arg10[%c0_50, %c2, %c0_51, %c0_52] : memref<1x8x8x8xf32, #tpu.memory_space<vmem>>, vector<1x1x8x8xf32>
    %92 = vector.shape_cast %91 : vector<1x1x8x8xf32> to vector<8x8xf32>
    %93 = vector.shape_cast %90 : vector<8x8xf32> to vector<1x1x8x8xf32>
    tpu.vector_store %arg10[%c0_50, %c2, %c0_51, %c0_52], %93 {strides = array<i32>} : memref<1x8x8x8xf32, #tpu.memory_space<vmem>>, vector<1x1x8x8xf32>,
    %cst_53 = arith.constant dense<0.000000e+00> : vector<8x64xf32>
    %94 = tpu.matmul %90, %72, %cst_53 {dimension_numbers = #tpu.dot_dimension_numbers<[1], [0], [0], [1], [0, 0, 1, 1], [], []>} : vector<8x8xf32>, vector<8x64xf32>, vector<8x64xf32> -> vector<8x64xf32>
    %c128 = arith.constant 128 : index
    %c0_54 = arith.constant 0 : index
    %95 = vector.load %arg8[%c128, %c0_54] : memref<512x512xf32, #tpu.memory_space<vmem>>, vector<64x512xf32>
    %cst_55 = arith.constant dense<0.000000e+00> : vector<8x512xf32>
    %96 = tpu.matmul %94, %95, %cst_55 {dimension_numbers = #tpu.dot_dimension_numbers<[1], [0], [0], [1], [0, 0, 1, 1], [], []>} : vector<8x64xf32>, vector<64x512xf32>, vector<8x512xf32> -> vector<8x512xf32>
    %97 = arith.addf %69, %96 : vector<8x512xf32>
    %98 = vector.extract_strided_slice %5 {offsets = [0, 192], sizes = [8, 64], strides = [1, 1]} : vector<8x512xf32> to vector<8x64xf32>
    %99 = vector.extract_strided_slice %9 {offsets = [0, 192], sizes = [8, 64], strides = [1, 1]} : vector<8x512xf32> to vector<8x64xf32>
    %100 = vector.extract_strided_slice %13 {offsets = [0, 192], sizes = [8, 64], strides = [1, 1]} : vector<8x512xf32> to vector<8x64xf32>
    %101 = tpu.transpose %99, [1, 0] : vector<8x64xf32> -> vector<64x8xf32>
    %cst_56 = arith.constant dense<0.000000e+00> : vector<8x8xf32>
    %102 = tpu.matmul %98, %101, %cst_56 {dimension_numbers = #tpu.dot_dimension_numbers<[1], [0], [0], [1], [0, 0, 1, 1], [], []>} : vector<8x64xf32>, vector<64x8xf32>, vector<8x8xf32> -> vector<8x8xf32>
    %cst_57 = arith.constant 1.250000e-01 : f32
    %103 = vector.broadcast %cst_57 : f32 to vector<8x8xf32>
    %104 = arith.mulf %102, %103 : vector<8x8xf32>
    %c0_i8_58 = arith.constant 0 : i8
    %105 = vector.broadcast %c0_i8_58 : i8 to vector<8x8xi8>
    %106 = arith.cmpi ne, %3, %105 : vector<8x8xi8>
    %cst_59 = arith.constant -1.000000e+09 : f32
    %107 = vector.broadcast %cst_59 : f32 to vector<8x8xf32>
    %108 = arith.select %106, %107, %104 : vector<8x8xi1>, vector<8x8xf32>
    %cst_60 = arith.constant dense<0xFF800000> : vector<8xf32>
    %109 = vector.multi_reduction <maximumf>, %108, %cst_60 [1] : vector<8x8xf32> to vector<8xf32>
    %110 = vector.shape_cast %109 : vector<8xf32> to vector<8x1xf32>
    %111 = vector.broadcast %110 : vector<8x1xf32> to vector<8x8xf32>
    %112 = arith.subf %108, %111 : vector<8x8xf32>
    %113 = math.exp %112 : vector<8x8xf32>
    %cst_61 = arith.constant dense<0.000000e+00> : vector<8xf32>
    %114 = vector.multi_reduction <add>, %113, %cst_61 [1] : vector<8x8xf32> to vector<8xf32>
    %115 = vector.shape_cast %114 : vector<8xf32> to vector<8x1xf32>
    %116 = tpu.reciprocal %115 : vector<8x1xf32> -> vector<8x1xf32>
    %117 = vector.broadcast %116 : vector<8x1xf32> to vector<8x8xf32>
    %118 = arith.mulf %113, %117 : vector<8x8xf32>
    %c0_62 = arith.constant 0 : index
    %c3 = arith.constant 3 : index
    %c0_63 = arith.constant 0 : index
    %c0_64 = arith.constant 0 : index
    %119 = vector.load %arg10[%c0_62, %c3, %c0_63, %c0_64] : memref<1x8x8x8xf32, #tpu.memory_space<vmem>>, vector<1x1x8x8xf32>
    %120 = vector.shape_cast %119 : vector<1x1x8x8xf32> to vector<8x8xf32>
    %121 = vector.shape_cast %118 : vector<8x8xf32> to vector<1x1x8x8xf32>
    tpu.vector_store %arg10[%c0_62, %c3, %c0_63, %c0_64], %121 {strides = array<i32>} : memref<1x8x8x8xf32, #tpu.memory_space<vmem>>, vector<1x1x8x8xf32>,
    %cst_65 = arith.constant dense<0.000000e+00> : vector<8x64xf32>
    %122 = tpu.matmul %118, %100, %cst_65 {dimension_numbers = #tpu.dot_dimension_numbers<[1], [0], [0], [1], [0, 0, 1, 1], [], []>} : vector<8x8xf32>, vector<8x64xf32>, vector<8x64xf32> -> vector<8x64xf32>
    %c192 = arith.constant 192 : index
    %c0_66 = arith.constant 0 : index
    %123 = vector.load %arg8[%c192, %c0_66] : memref<512x512xf32, #tpu.memory_space<vmem>>, vector<64x512xf32>
    %cst_67 = arith.constant dense<0.000000e+00> : vector<8x512xf32>
    %124 = tpu.matmul %122, %123, %cst_67 {dimension_numbers = #tpu.dot_dimension_numbers<[1], [0], [0], [1], [0, 0, 1, 1], [], []>} : vector<8x64xf32>, vector<64x512xf32>, vector<8x512xf32> -> vector<8x512xf32>
    %125 = arith.addf %97, %124 : vector<8x512xf32>
    %126 = vector.extract_strided_slice %5 {offsets = [0, 256], sizes = [8, 64], strides = [1, 1]} : vector<8x512xf32> to vector<8x64xf32>
    %127 = vector.extract_strided_slice %9 {offsets = [0, 256], sizes = [8, 64], strides = [1, 1]} : vector<8x512xf32> to vector<8x64xf32>
    %128 = vector.extract_strided_slice %13 {offsets = [0, 256], sizes = [8, 64], strides = [1, 1]} : vector<8x512xf32> to vector<8x64xf32>
    %129 = tpu.transpose %127, [1, 0] : vector<8x64xf32> -> vector<64x8xf32>
    %cst_68 = arith.constant dense<0.000000e+00> : vector<8x8xf32>
    %130 = tpu.matmul %126, %129, %cst_68 {dimension_numbers = #tpu.dot_dimension_numbers<[1], [0], [0], [1], [0, 0, 1, 1], [], []>} : vector<8x64xf32>, vector<64x8xf32>, vector<8x8xf32> -> vector<8x8xf32>
    %cst_69 = arith.constant 1.250000e-01 : f32
    %131 = vector.broadcast %cst_69 : f32 to vector<8x8xf32>
    %132 = arith.mulf %130, %131 : vector<8x8xf32>
    %c0_i8_70 = arith.constant 0 : i8
    %133 = vector.broadcast %c0_i8_70 : i8 to vector<8x8xi8>
    %134 = arith.cmpi ne, %3, %133 : vector<8x8xi8>
    %cst_71 = arith.constant -1.000000e+09 : f32
    %135 = vector.broadcast %cst_71 : f32 to vector<8x8xf32>
    %136 = arith.select %134, %135, %132 : vector<8x8xi1>, vector<8x8xf32>
    %cst_72 = arith.constant dense<0xFF800000> : vector<8xf32>
    %137 = vector.multi_reduction <maximumf>, %136, %cst_72 [1] : vector<8x8xf32> to vector<8xf32>
    %138 = vector.shape_cast %137 : vector<8xf32> to vector<8x1xf32>
    %139 = vector.broadcast %138 : vector<8x1xf32> to vector<8x8xf32>
    %140 = arith.subf %136, %139 : vector<8x8xf32>
    %141 = math.exp %140 : vector<8x8xf32>
    %cst_73 = arith.constant dense<0.000000e+00> : vector<8xf32>
    %142 = vector.multi_reduction <add>, %141, %cst_73 [1] : vector<8x8xf32> to vector<8xf32>
    %143 = vector.shape_cast %142 : vector<8xf32> to vector<8x1xf32>
    %144 = tpu.reciprocal %143 : vector<8x1xf32> -> vector<8x1xf32>
    %145 = vector.broadcast %144 : vector<8x1xf32> to vector<8x8xf32>
    %146 = arith.mulf %141, %145 : vector<8x8xf32>
    %c0_74 = arith.constant 0 : index
    %c4 = arith.constant 4 : index
    %c0_75 = arith.constant 0 : index
    %c0_76 = arith.constant 0 : index
    %147 = vector.load %arg10[%c0_74, %c4, %c0_75, %c0_76] : memref<1x8x8x8xf32, #tpu.memory_space<vmem>>, vector<1x1x8x8xf32>
    %148 = vector.shape_cast %147 : vector<1x1x8x8xf32> to vector<8x8xf32>
    %149 = vector.shape_cast %146 : vector<8x8xf32> to vector<1x1x8x8xf32>
    tpu.vector_store %arg10[%c0_74, %c4, %c0_75, %c0_76], %149 {strides = array<i32>} : memref<1x8x8x8xf32, #tpu.memory_space<vmem>>, vector<1x1x8x8xf32>,
    %cst_77 = arith.constant dense<0.000000e+00> : vector<8x64xf32>
    %150 = tpu.matmul %146, %128, %cst_77 {dimension_numbers = #tpu.dot_dimension_numbers<[1], [0], [0], [1], [0, 0, 1, 1], [], []>} : vector<8x8xf32>, vector<8x64xf32>, vector<8x64xf32> -> vector<8x64xf32>
    %c256 = arith.constant 256 : index
    %c0_78 = arith.constant 0 : index
    %151 = vector.load %arg8[%c256, %c0_78] : memref<512x512xf32, #tpu.memory_space<vmem>>, vector<64x512xf32>
    %cst_79 = arith.constant dense<0.000000e+00> : vector<8x512xf32>
    %152 = tpu.matmul %150, %151, %cst_79 {dimension_numbers = #tpu.dot_dimension_numbers<[1], [0], [0], [1], [0, 0, 1, 1], [], []>} : vector<8x64xf32>, vector<64x512xf32>, vector<8x512xf32> -> vector<8x512xf32>
    %153 = arith.addf %125, %152 : vector<8x512xf32>
    %154 = vector.extract_strided_slice %5 {offsets = [0, 320], sizes = [8, 64], strides = [1, 1]} : vector<8x512xf32> to vector<8x64xf32>
    %155 = vector.extract_strided_slice %9 {offsets = [0, 320], sizes = [8, 64], strides = [1, 1]} : vector<8x512xf32> to vector<8x64xf32>
    %156 = vector.extract_strided_slice %13 {offsets = [0, 320], sizes = [8, 64], strides = [1, 1]} : vector<8x512xf32> to vector<8x64xf32>
    %157 = tpu.transpose %155, [1, 0] : vector<8x64xf32> -> vector<64x8xf32>
    %cst_80 = arith.constant dense<0.000000e+00> : vector<8x8xf32>
    %158 = tpu.matmul %154, %157, %cst_80 {dimension_numbers = #tpu.dot_dimension_numbers<[1], [0], [0], [1], [0, 0, 1, 1], [], []>} : vector<8x64xf32>, vector<64x8xf32>, vector<8x8xf32> -> vector<8x8xf32>
    %cst_81 = arith.constant 1.250000e-01 : f32
    %159 = vector.broadcast %cst_81 : f32 to vector<8x8xf32>
    %160 = arith.mulf %158, %159 : vector<8x8xf32>
    %c0_i8_82 = arith.constant 0 : i8
    %161 = vector.broadcast %c0_i8_82 : i8 to vector<8x8xi8>
    %162 = arith.cmpi ne, %3, %161 : vector<8x8xi8>
    %cst_83 = arith.constant -1.000000e+09 : f32
    %163 = vector.broadcast %cst_83 : f32 to vector<8x8xf32>
    %164 = arith.select %162, %163, %160 : vector<8x8xi1>, vector<8x8xf32>
    %cst_84 = arith.constant dense<0xFF800000> : vector<8xf32>
    %165 = vector.multi_reduction <maximumf>, %164, %cst_84 [1] : vector<8x8xf32> to vector<8xf32>
    %166 = vector.shape_cast %165 : vector<8xf32> to vector<8x1xf32>
    %167 = vector.broadcast %166 : vector<8x1xf32> to vector<8x8xf32>
    %168 = arith.subf %164, %167 : vector<8x8xf32>
    %169 = math.exp %168 : vector<8x8xf32>
    %cst_85 = arith.constant dense<0.000000e+00> : vector<8xf32>
    %170 = vector.multi_reduction <add>, %169, %cst_85 [1] : vector<8x8xf32> to vector<8xf32>
    %171 = vector.shape_cast %170 : vector<8xf32> to vector<8x1xf32>
    %172 = tpu.reciprocal %171 : vector<8x1xf32> -> vector<8x1xf32>
    %173 = vector.broadcast %172 : vector<8x1xf32> to vector<8x8xf32>
    %174 = arith.mulf %169, %173 : vector<8x8xf32>
    %c0_86 = arith.constant 0 : index
    %c5 = arith.constant 5 : index
    %c0_87 = arith.constant 0 : index
    %c0_88 = arith.constant 0 : index
    %175 = vector.load %arg10[%c0_86, %c5, %c0_87, %c0_88] : memref<1x8x8x8xf32, #tpu.memory_space<vmem>>, vector<1x1x8x8xf32>
    %176 = vector.shape_cast %175 : vector<1x1x8x8xf32> to vector<8x8xf32>
    %177 = vector.shape_cast %174 : vector<8x8xf32> to vector<1x1x8x8xf32>
    tpu.vector_store %arg10[%c0_86, %c5, %c0_87, %c0_88], %177 {strides = array<i32>} : memref<1x8x8x8xf32, #tpu.memory_space<vmem>>, vector<1x1x8x8xf32>,
    %cst_89 = arith.constant dense<0.000000e+00> : vector<8x64xf32>
    %178 = tpu.matmul %174, %156, %cst_89 {dimension_numbers = #tpu.dot_dimension_numbers<[1], [0], [0], [1], [0, 0, 1, 1], [], []>} : vector<8x8xf32>, vector<8x64xf32>, vector<8x64xf32> -> vector<8x64xf32>
    %c320 = arith.constant 320 : index
    %c0_90 = arith.constant 0 : index
    %179 = vector.load %arg8[%c320, %c0_90] : memref<512x512xf32, #tpu.memory_space<vmem>>, vector<64x512xf32>
    %cst_91 = arith.constant dense<0.000000e+00> : vector<8x512xf32>
    %180 = tpu.matmul %178, %179, %cst_91 {dimension_numbers = #tpu.dot_dimension_numbers<[1], [0], [0], [1], [0, 0, 1, 1], [], []>} : vector<8x64xf32>, vector<64x512xf32>, vector<8x512xf32> -> vector<8x512xf32>
    %181 = arith.addf %153, %180 : vector<8x512xf32>
    %182 = vector.extract_strided_slice %5 {offsets = [0, 384], sizes = [8, 64], strides = [1, 1]} : vector<8x512xf32> to vector<8x64xf32>
    %183 = vector.extract_strided_slice %9 {offsets = [0, 384], sizes = [8, 64], strides = [1, 1]} : vector<8x512xf32> to vector<8x64xf32>
    %184 = vector.extract_strided_slice %13 {offsets = [0, 384], sizes = [8, 64], strides = [1, 1]} : vector<8x512xf32> to vector<8x64xf32>
    %185 = tpu.transpose %183, [1, 0] : vector<8x64xf32> -> vector<64x8xf32>
    %cst_92 = arith.constant dense<0.000000e+00> : vector<8x8xf32>
    %186 = tpu.matmul %182, %185, %cst_92 {dimension_numbers = #tpu.dot_dimension_numbers<[1], [0], [0], [1], [0, 0, 1, 1], [], []>} : vector<8x64xf32>, vector<64x8xf32>, vector<8x8xf32> -> vector<8x8xf32>
    %cst_93 = arith.constant 1.250000e-01 : f32
    %187 = vector.broadcast %cst_93 : f32 to vector<8x8xf32>
    %188 = arith.mulf %186, %187 : vector<8x8xf32>
    %c0_i8_94 = arith.constant 0 : i8
    %189 = vector.broadcast %c0_i8_94 : i8 to vector<8x8xi8>
    %190 = arith.cmpi ne, %3, %189 : vector<8x8xi8>
    %cst_95 = arith.constant -1.000000e+09 : f32
    %191 = vector.broadcast %cst_95 : f32 to vector<8x8xf32>
    %192 = arith.select %190, %191, %188 : vector<8x8xi1>, vector<8x8xf32>
    %cst_96 = arith.constant dense<0xFF800000> : vector<8xf32>
    %193 = vector.multi_reduction <maximumf>, %192, %cst_96 [1] : vector<8x8xf32> to vector<8xf32>
    %194 = vector.shape_cast %193 : vector<8xf32> to vector<8x1xf32>
    %195 = vector.broadcast %194 : vector<8x1xf32> to vector<8x8xf32>
    %196 = arith.subf %192, %195 : vector<8x8xf32>
    %197 = math.exp %196 : vector<8x8xf32>
    %cst_97 = arith.constant dense<0.000000e+00> : vector<8xf32>
    %198 = vector.multi_reduction <add>, %197, %cst_97 [1] : vector<8x8xf32> to vector<8xf32>
    %199 = vector.shape_cast %198 : vector<8xf32> to vector<8x1xf32>
    %200 = tpu.reciprocal %199 : vector<8x1xf32> -> vector<8x1xf32>
    %201 = vector.broadcast %200 : vector<8x1xf32> to vector<8x8xf32>
    %202 = arith.mulf %197, %201 : vector<8x8xf32>
    %c0_98 = arith.constant 0 : index
    %c6 = arith.constant 6 : index
    %c0_99 = arith.constant 0 : index
    %c0_100 = arith.constant 0 : index
    %203 = vector.load %arg10[%c0_98, %c6, %c0_99, %c0_100] : memref<1x8x8x8xf32, #tpu.memory_space<vmem>>, vector<1x1x8x8xf32>
    %204 = vector.shape_cast %203 : vector<1x1x8x8xf32> to vector<8x8xf32>
    %205 = vector.shape_cast %202 : vector<8x8xf32> to vector<1x1x8x8xf32>
    tpu.vector_store %arg10[%c0_98, %c6, %c0_99, %c0_100], %205 {strides = array<i32>} : memref<1x8x8x8xf32, #tpu.memory_space<vmem>>, vector<1x1x8x8xf32>,
    %cst_101 = arith.constant dense<0.000000e+00> : vector<8x64xf32>
    %206 = tpu.matmul %202, %184, %cst_101 {dimension_numbers = #tpu.dot_dimension_numbers<[1], [0], [0], [1], [0, 0, 1, 1], [], []>} : vector<8x8xf32>, vector<8x64xf32>, vector<8x64xf32> -> vector<8x64xf32>
    %c384 = arith.constant 384 : index
    %c0_102 = arith.constant 0 : index
    %207 = vector.load %arg8[%c384, %c0_102] : memref<512x512xf32, #tpu.memory_space<vmem>>, vector<64x512xf32>
    %cst_103 = arith.constant dense<0.000000e+00> : vector<8x512xf32>
    %208 = tpu.matmul %206, %207, %cst_103 {dimension_numbers = #tpu.dot_dimension_numbers<[1], [0], [0], [1], [0, 0, 1, 1], [], []>} : vector<8x64xf32>, vector<64x512xf32>, vector<8x512xf32> -> vector<8x512xf32>
    %209 = arith.addf %181, %208 : vector<8x512xf32>
    %210 = vector.extract_strided_slice %5 {offsets = [0, 448], sizes = [8, 64], strides = [1, 1]} : vector<8x512xf32> to vector<8x64xf32>
    %211 = vector.extract_strided_slice %9 {offsets = [0, 448], sizes = [8, 64], strides = [1, 1]} : vector<8x512xf32> to vector<8x64xf32>
    %212 = vector.extract_strided_slice %13 {offsets = [0, 448], sizes = [8, 64], strides = [1, 1]} : vector<8x512xf32> to vector<8x64xf32>
    %213 = tpu.transpose %211, [1, 0] : vector<8x64xf32> -> vector<64x8xf32>
    %cst_104 = arith.constant dense<0.000000e+00> : vector<8x8xf32>
    %214 = tpu.matmul %210, %213, %cst_104 {dimension_numbers = #tpu.dot_dimension_numbers<[1], [0], [0], [1], [0, 0, 1, 1], [], []>} : vector<8x64xf32>, vector<64x8xf32>, vector<8x8xf32> -> vector<8x8xf32>
    %cst_105 = arith.constant 1.250000e-01 : f32
    %215 = vector.broadcast %cst_105 : f32 to vector<8x8xf32>
    %216 = arith.mulf %214, %215 : vector<8x8xf32>
    %c0_i8_106 = arith.constant 0 : i8
    %217 = vector.broadcast %c0_i8_106 : i8 to vector<8x8xi8>
    %218 = arith.cmpi ne, %3, %217 : vector<8x8xi8>
    %cst_107 = arith.constant -1.000000e+09 : f32
    %219 = vector.broadcast %cst_107 : f32 to vector<8x8xf32>
    %220 = arith.select %218, %219, %216 : vector<8x8xi1>, vector<8x8xf32>
    %cst_108 = arith.constant dense<0xFF800000> : vector<8xf32>
    %221 = vector.multi_reduction <maximumf>, %220, %cst_108 [1] : vector<8x8xf32> to vector<8xf32>
    %222 = vector.shape_cast %221 : vector<8xf32> to vector<8x1xf32>
    %223 = vector.broadcast %222 : vector<8x1xf32> to vector<8x8xf32>
    %224 = arith.subf %220, %223 : vector<8x8xf32>
    %225 = math.exp %224 : vector<8x8xf32>
    %cst_109 = arith.constant dense<0.000000e+00> : vector<8xf32>
    %226 = vector.multi_reduction <add>, %225, %cst_109 [1] : vector<8x8xf32> to vector<8xf32>
    %227 = vector.shape_cast %226 : vector<8xf32> to vector<8x1xf32>
    %228 = tpu.reciprocal %227 : vector<8x1xf32> -> vector<8x1xf32>
    %229 = vector.broadcast %228 : vector<8x1xf32> to vector<8x8xf32>
    %230 = arith.mulf %225, %229 : vector<8x8xf32>
    %c0_110 = arith.constant 0 : index
    %c7 = arith.constant 7 : index
    %c0_111 = arith.constant 0 : index
    %c0_112 = arith.constant 0 : index
    %231 = vector.load %arg10[%c0_110, %c7, %c0_111, %c0_112] : memref<1x8x8x8xf32, #tpu.memory_space<vmem>>, vector<1x1x8x8xf32>
    %232 = vector.shape_cast %231 : vector<1x1x8x8xf32> to vector<8x8xf32>
    %233 = vector.shape_cast %230 : vector<8x8xf32> to vector<1x1x8x8xf32>
    tpu.vector_store %arg10[%c0_110, %c7, %c0_111, %c0_112], %233 {strides = array<i32>} : memref<1x8x8x8xf32, #tpu.memory_space<vmem>>, vector<1x1x8x8xf32>,
    %cst_113 = arith.constant dense<0.000000e+00> : vector<8x64xf32>
    %234 = tpu.matmul %230, %212, %cst_113 {dimension_numbers = #tpu.dot_dimension_numbers<[1], [0], [0], [1], [0, 0, 1, 1], [], []>} : vector<8x8xf32>, vector<8x64xf32>, vector<8x64xf32> -> vector<8x64xf32>
    %c448 = arith.constant 448 : index
    %c0_114 = arith.constant 0 : index
    %235 = vector.load %arg8[%c448, %c0_114] : memref<512x512xf32, #tpu.memory_space<vmem>>, vector<64x512xf32>
    %cst_115 = arith.constant dense<0.000000e+00> : vector<8x512xf32>
    %236 = tpu.matmul %234, %235, %cst_115 {dimension_numbers = #tpu.dot_dimension_numbers<[1], [0], [0], [1], [0, 0, 1, 1], [], []>} : vector<8x64xf32>, vector<64x512xf32>, vector<8x512xf32> -> vector<8x512xf32>
    %237 = arith.addf %209, %236 : vector<8x512xf32>
    %cst_116 = arith.constant dense<0.000000e+00> : vector<8xf32>
    %238 = vector.multi_reduction <add>, %237, %cst_116 [1] : vector<8x512xf32> to vector<8xf32>
    %239 = vector.shape_cast %238 : vector<8xf32> to vector<8x1xf32>
    %cst_117 = arith.constant 5.120000e+02 : f32
    %240 = vector.broadcast %cst_117 : f32 to vector<8x1xf32>
    %241 = arith.divf %239, %240 : vector<8x1xf32>
    %242 = vector.broadcast %241 : vector<8x1xf32> to vector<8x512xf32>
    %243 = arith.subf %237, %242 : vector<8x512xf32>
    %244 = vector.broadcast %241 : vector<8x1xf32> to vector<8x512xf32>
    %245 = arith.subf %237, %244 : vector<8x512xf32>
    %246 = arith.mulf %243, %245 : vector<8x512xf32>
    %cst_118 = arith.constant dense<0.000000e+00> : vector<8xf32>
    %247 = vector.multi_reduction <add>, %246, %cst_118 [1] : vector<8x512xf32> to vector<8xf32>
    %248 = vector.shape_cast %247 : vector<8xf32> to vector<8x1xf32>
    %cst_119 = arith.constant 5.120000e+02 : f32
    %249 = vector.broadcast %cst_119 : f32 to vector<8x1xf32>
    %250 = arith.divf %248, %249 : vector<8x1xf32>
    %251 = vector.broadcast %241 : vector<8x1xf32> to vector<8x512xf32>
    %252 = arith.subf %237, %251 : vector<8x512xf32>
    %cst_120 = arith.constant 9.99999974E-6 : f32
    %253 = vector.broadcast %cst_120 : f32 to vector<8x1xf32>
    %254 = arith.addf %250, %253 : vector<8x1xf32>
    %255 = math.rsqrt %254 : vector<8x1xf32>
    %256 = vector.broadcast %255 : vector<8x1xf32> to vector<8x512xf32>
    %257 = arith.mulf %252, %256 : vector<8x512xf32>
    %c0_121 = arith.constant 0 : index
    %c0_122 = arith.constant 0 : index
    %c0_123 = arith.constant 0 : index
    %258 = vector.load %arg9[%c0_121, %c0_122, %c0_123] : memref<1x8x512xf32, #tpu.memory_space<vmem>>, vector<1x8x512xf32>
    %259 = vector.shape_cast %258 : vector<1x8x512xf32> to vector<8x512xf32>
    %260 = vector.shape_cast %257 : vector<8x512xf32> to vector<1x8x512xf32>
    tpu.vector_store %arg9[%c0_121, %c0_122, %c0_123], %260 {strides = array<i32>} : memref<1x8x512xf32, #tpu.memory_space<vmem>>, vector<1x8x512xf32>,
    return
  }
  func.func @transform_0(%arg0: i32) -> (i32, i32, i32) {
    %c0_i32 = arith.constant 0 : i32
    %c0_i32_0 = arith.constant 0 : i32
    %c0_i32_1 = arith.constant 0 : i32
    return %arg0, %c0_i32, %c0_i32_0 : i32, i32, i32
  }
  func.func @transform_1(%arg0: i32) -> (i32, i32, i32) {
    %c0_i32 = arith.constant 0 : i32
    %c0_i32_0 = arith.constant 0 : i32
    %c0_i32_1 = arith.constant 0 : i32
    return %arg0, %c0_i32, %c0_i32_0 : i32, i32, i32
  }
  func.func @transform_2(%arg0: i32) -> (i32, i32, i32) {
    %c0_i32 = arith.constant 0 : i32
    %c0_i32_0 = arith.constant 0 : i32
    %c0_i32_1 = arith.constant 0 : i32
    return %arg0, %c0_i32, %c0_i32_0 : i32, i32, i32
  }
  func.func @transform_3(%arg0: i32) -> (i32, i32, i32) {
    %c0_i32 = arith.constant 0 : i32
    %c0_i32_0 = arith.constant 0 : i32
    %c0_i32_1 = arith.constant 0 : i32
    return %arg0, %c0_i32, %c0_i32_0 : i32, i32, i32
  }
  func.func @transform_4(%arg0: i32) -> (i32, i32) {
    %c0_i32 = arith.constant 0 : i32
    %c0_i32_0 = arith.constant 0 : i32
    %c0_i32_1 = arith.constant 0 : i32
    return %c0_i32, %c0_i32_0 : i32, i32
  }
  func.func @transform_5(%arg0: i32) -> (i32, i32) {
    %c0_i32 = arith.constant 0 : i32
    %c0_i32_0 = arith.constant 0 : i32
    %c0_i32_1 = arith.constant 0 : i32
    return %c0_i32, %c0_i32_0 : i32, i32
  }
  func.func @transform_6(%arg0: i32) -> (i32, i32) {
    %c0_i32 = arith.constant 0 : i32
    %c0_i32_0 = arith.constant 0 : i32
    %c0_i32_1 = arith.constant 0 : i32
    return %c0_i32, %c0_i32_0 : i32, i32
  }
  func.func @transform_7(%arg0: i32) -> (i32, i32) {
    %c0_i32 = arith.constant 0 : i32
    %c0_i32_0 = arith.constant 0 : i32
    %c0_i32_1 = arith.constant 0 : i32
    return %c0_i32, %c0_i32_0 : i32, i32
  }
  func.func @transform_8(%arg0: i32) -> (i32, i32, i32) {
    %c0_i32 = arith.constant 0 : i32
    %c0_i32_0 = arith.constant 0 : i32
    %c0_i32_1 = arith.constant 0 : i32
    return %arg0, %c0_i32, %c0_i32_0 : i32, i32, i32
  }
  func.func @transform_9(%arg0: i32) -> (i32, i32, i32, i32) {
    %c0_i32 = arith.constant 0 : i32
    %c0_i32_0 = arith.constant 0 : i32
    %c0_i32_1 = arith.constant 0 : i32
    %c0_i32_2 = arith.constant 0 : i32
    return %arg0, %c0_i32, %c0_i32_0, %c0_i32_1 : i32, i32, i32, i32
  }
}

</mosaic_0001>

<llo_original>
// kernel: tpu_custom_call.1
$region0: #{tpu_custom_call.1}
  #allocation0 [shape = 'u32[]', space=smem, size = 0x4, offset = 0x4, fixed_abs, tag = 'smem constant byte address 0x4 - core index']
  #allocation1 [shape = 'u32[72,128]{1,0:T(1,128)}', space=vmem, size = 0x9000, scoped, tag = 'internal scratch']
  %s0 = inlined_call_operand.hbm [shape: s8[2,8,8], index: 0, kind: input, shape index: {}]
  %s1 = inlined_call_operand.hbm [shape: f32[2,8,512], index: 1, kind: input, shape index: {}]
  %s2 = inlined_call_operand.hbm [shape: f32[2,8,512], index: 2, kind: input, shape index: {}]
  %s3 = inlined_call_operand.hbm [shape: f32[2,8,512], index: 3, kind: input, shape index: {}]
  %s4 = inlined_call_operand.hbm [shape: f32[512,512], index: 4, kind: input, shape index: {}]
  %s5 = inlined_call_operand.hbm [shape: f32[512,512], index: 5, kind: input, shape index: {}]
  %s6 = inlined_call_operand.hbm [shape: f32[512,512], index: 6, kind: input, shape index: {}]
  %s7 = inlined_call_operand.hbm [shape: f32[512,512], index: 7, kind: input, shape index: {}]
  %s8 = inlined_call_operand.hbm [shape: f32[2,8,512], index: 8, kind: output, shape index: {0}]
  %s9 = inlined_call_operand.hbm [shape: f32[2,8,8,8], index: 9, kind: output, shape index: {1}]
  %10 = xla_tuple %s8, %s9
  %s11 = sld [smem:[#allocation0]]
  $region105: #{tpu_custom_call.1} parent=0
    _
  %s13 = ssub.s32 1, %s11
  %s14 = scalar_select 0, %s13, %s11
  $region1: #{tpu_custom_call.1} parent=0
    #allocation2 [shape = 'u8[2048]{0}', space=vmem, size = 0x800, scoped, tag = 'input window, operand 0']
    #allocation3 [shape = 's32[2]{0}', space=sflag, size = 0x8, scoped, tag = 'scoped memory for tpu_custom_call.1']
    #allocation4 [shape = 's32[2]{0}', space=sflag, size = 0x8, scoped, tag = 'scoped memory for tpu_custom_call.1']
    #allocation5 [shape = 'u8[32768]{0}', space=vmem, size = 0x8000, scoped, tag = 'input window, operand 1']
    #allocation6 [shape = 's32[2]{0}', space=sflag, size = 0x8, scoped, tag = 'scoped memory for tpu_custom_call.1']
    #allocation7 [shape = 'u8[32768]{0}', space=vmem, size = 0x8000, scoped, tag = 'input window, operand 2']
    #allocation8 [shape = 'u8[32768]{0}', space=vmem, size = 0x8000, scoped, tag = 'input window, operand 3']
    #allocation9 [shape = 's32[2]{0}', space=sflag, size = 0x8, scoped, tag = 'scoped memory for tpu_custom_call.1']
    #allocation10 [shape = 'u8[1048576]{0}', space=vmem, size = 0x100000, scoped, tag = 'input window, operand 4, single buffered']
    #allocation11 [shape = 'u8[1048576]{0}', space=vmem, size = 0x100000, scoped, tag = 'input window, operand 5, single buffered']
    #allocation12 [shape = 's32[1]{0}', space=sflag, size = 0x4, scoped, tag = 'scoped memory for tpu_custom_call.1']
    #allocation13 [shape = 'u8[1048576]{0}', space=vmem, size = 0x100000, scoped, tag = 'input window, operand 6, single buffered']
    #allocation14 [shape = 'u8[1048576]{0}', space=vmem, size = 0x100000, scoped, tag = 'input window, operand 7, single buffered']
    #allocation15 [shape = 's32[1]{0}', space=sflag, size = 0x4, scoped, tag = 'scoped memory for tpu_custom_call.1']
    #allocation16 [shape = 'u8[32768]{0}', space=vmem, size = 0x8000, scoped, tag = 'output window, operand 0']
    #allocation17 [shape = 'u8[65536]{0}', space=vmem, size = 0x10000, scoped, tag = 'output window, operand 1']
    #allocation18 [shape = 's32[2]{0}', space=sflag, size = 0x8, scoped, tag = 'scoped memory for tpu_custom_call.1']
    %15 = vsyncpa [#allocation3], 0
    %s16 = scalar_lea.sflag [#allocation3], 1
    %17 = vsyncpa %s16, 0
    %18 = vsyncpa [#allocation6], 0
    %s19 = scalar_lea.sflag [#allocation6], 1
    %20 = vsyncpa %s19, 0
    %21 = vsyncpa [#allocation9], 0
    %s22 = scalar_lea.sflag [#allocation9], 1
    %23 = vsyncpa %s22, 0
    %24 = vsyncpa [#allocation12], 0
    %25 = vsyncpa [#allocation15], 0
    %26 = vsyncpa [#allocation4], 0
    %s27 = scalar_lea.sflag [#allocation4], 1
    %28 = vsyncpa %s27, 0
    %29 = vsyncpa [#allocation18], 0
    %s30 = scalar_lea.sflag [#allocation18], 1
    %31 = vsyncpa %s30, 0
    loop: start=0, step=1, limit=4
    $region2: #{tpu_custom_call.1} parent=1 // loop_pre_header
      _
    $region3: #{tpu_custom_call.1} parent=1 // loop_header
      %s33 = sphi 0, %s37
      %p34 = scmp.ge.s32.totalorder %s33, 4
      %s43 = sphi 0, %s45
      %s46 = sphi 0, %s43
      %s47 = sphi 0, %s46
      %s63 = sphi 0, %s47
      %s69 = sphi 0, %s71
      %s72 = sphi 0, %s69
      %s73 = sphi 0, %s72
      %s89 = sphi 0, %s73
      %s95 = sphi 0, %s97
      %s98 = sphi 0, %s95
      %s99 = sphi 0, %s98
      %s115 = sphi 0, %s99
      %s121 = sphi 0, %s123
      %s124 = sphi 0, %s121
      %s125 = sphi 0, %s124
      %s141 = sphi 0, %s125
      %s145 = sphi 0, %s145
      %s147 = sphi 0, %s145
      %s148 = sphi 0, %s147
      %s162 = sphi 0, %s148
      %s166 = sphi 0, %s166
      %s168 = sphi 0, %s166
      %s169 = sphi 0, %s168
      %s183 = sphi 0, %s169
      %s187 = sphi 0, %s187
      %s189 = sphi 0, %s187
      %s190 = sphi 0, %s189
      %s204 = sphi 0, %s190
      %s208 = sphi 0, %s208
      %s210 = sphi 0, %s208
      %s211 = sphi 0, %s210
      %s225 = sphi 0, %s211
      %s231 = sphi 0, %s233
      %s234 = sphi 0, %s231
      %s235 = sphi 0, %s234
      %s251 = sphi 0, %s235
      %s257 = sphi 0, %s259
      %s260 = sphi 0, %s257
      %s261 = sphi 0, %s260
      %s277 = sphi 0, %s261
    $region4: #{tpu_custom_call.1} parent=1 // loop_header_branch
      %36 = sbr.rel (%p34) target = $region8
    $region5: #{tpu_custom_call.1} parent=1 // loop_body
      %s38 = ssub.s32 %s33, 1
      %s39 = ssub.s32 %s33, 2
      %s40 = sadd.s32 %s33, 1
      %s41 = ssub.s32 %s33, %s40
      %p42 = scmp.eq.s32.totalorder %s41, 0
      %s44 = sadd.s32 %s43, 1
      %s45 = scalar_select %p42, %s43, %s44
      %p48 = pneg %p42
      %p49 = scmp.eq.s32.totalorder %s33, 1
      %p50 = por %p48, %p49
      %p51 = scmp.ne.s32.totalorder %s43, %s46
      %p52 = scmp.eq.s32.totalorder %s33, 0
      %p53 = por %p51, %p52
      %p54 = scmp.ne.s32.totalorder %s43, %s46
      %p55 = scmp.eq.s32.totalorder %s38, 1
      %p56 = por %p54, %p55
      %p57 = scmp.ne.s32.totalorder %s46, %s47
      %p58 = scmp.eq.s32.totalorder %s38, 0
      %p59 = por %p57, %p58
      %p60 = scmp.ne.s32.totalorder %s46, %s47
      %p61 = scmp.eq.s32.totalorder %s39, 1
      %p62 = por %p60, %p61
      %p64 = scmp.ne.s32.totalorder %s47, %s63
      %p65 = scmp.eq.s32.totalorder %s39, 0
      %p66 = por %p64, %p65
      %s67 = ssub.s32 %s33, %s40
      %p68 = scmp.eq.s32.totalorder %s67, 0
      %s70 = sadd.s32 %s69, 1
      %s71 = scalar_select %p68, %s69, %s70
      %p74 = pneg %p68
      %p75 = scmp.eq.s32.totalorder %s33, 1
      %p76 = por %p74, %p75
      %p77 = scmp.ne.s32.totalorder %s69, %s72
      %p78 = scmp.eq.s32.totalorder %s33, 0
      %p79 = por %p77, %p78
      %p80 = scmp.ne.s32.totalorder %s69, %s72
      %p81 = scmp.eq.s32.totalorder %s38, 1
      %p82 = por %p80, %p81
      %p83 = scmp.ne.s32.totalorder %s72, %s73
      %p84 = scmp.eq.s32.totalorder %s38, 0
      %p85 = por %p83, %p84
      %p86 = scmp.ne.s32.totalorder %s72, %s73
      %p87 = scmp.eq.s32.totalorder %s39, 1
      %p88 = por %p86, %p87
      %p90 = scmp.ne.s32.totalorder %s73, %s89
      %p91 = scmp.eq.s32.totalorder %s39, 0
      %p92 = por %p90, %p91
      %s93 = ssub.s32 %s33, %s40
      %p94 = scmp.eq.s32.totalorder %s93, 0
      %s96 = sadd.s32 %s95, 1
      %s97 = scalar_select %p94, %s95, %s96
      %p100 = pneg %p94
      %p101 = scmp.eq.s32.totalorder %s33, 1
      %p102 = por %p100, %p101
      %p103 = scmp.ne.s32.totalorder %s95, %s98
      %p104 = scmp.eq.s32.totalorder %s33, 0
      %p105 = por %p103, %p104
      %p106 = scmp.ne.s32.totalorder %s95, %s98
      %p107 = scmp.eq.s32.totalorder %s38, 1
      %p108 = por %p106, %p107
      %p109 = scmp.ne.s32.totalorder %s98, %s99
      %p110 = scmp.eq.s32.totalorder %s38, 0
      %p111 = por %p109, %p110
      %p112 = scmp.ne.s32.totalorder %s98, %s99
      %p113 = scmp.eq.s32.totalorder %s39, 1
      %p114 = por %p112, %p113
      %p116 = scmp.ne.s32.totalorder %s99, %s115
      %p117 = scmp.eq.s32.totalorder %s39, 0
      %p118 = por %p116, %p117
      %s119 = ssub.s32 %s33, %s40
      %p120 = scmp.eq.s32.totalorder %s119, 0
      %s122 = sadd.s32 %s121, 1
      %s123 = scalar_select %p120, %s121, %s122
      %p126 = pneg %p120
      %p127 = scmp.eq.s32.totalorder %s33, 1
      %p128 = por %p126, %p127
      %p129 = scmp.ne.s32.totalorder %s121, %s124
      %p130 = scmp.eq.s32.totalorder %s33, 0
      %p131 = por %p129, %p130
      %p132 = scmp.ne.s32.totalorder %s121, %s124
      %p133 = scmp.eq.s32.totalorder %s38, 1
      %p134 = por %p132, %p133
      %p135 = scmp.ne.s32.totalorder %s124, %s125
      %p136 = scmp.eq.s32.totalorder %s38, 0
      %p137 = por %p135, %p136
      %p138 = scmp.ne.s32.totalorder %s124, %s125
      %p139 = scmp.eq.s32.totalorder %s39, 1
      %p140 = por %p138, %p139
      %p142 = scmp.ne.s32.totalorder %s125, %s141
      %p143 = scmp.eq.s32.totalorder %s39, 0
      %p144 = por %p142, %p143
      %s146 = sadd.s32 %s145, 1
      %p149 = scmp.eq.s32.totalorder %s33, 1
      %p150 = scmp.ne.s32.totalorder %s145, %s147
      %p151 = scmp.eq.s32.totalorder %s33, 0
      %p152 = por %p150, %p151
      %p153 = scmp.ne.s32.totalorder %s145, %s147
      %p154 = scmp.eq.s32.totalorder %s38, 1
      %p155 = por %p153, %p154
      %p156 = scmp.ne.s32.totalorder %s147, %s148
      %p157 = scmp.eq.s32.totalorder %s38, 0
      %p158 = por %p156, %p157
      %p159 = scmp.ne.s32.totalorder %s147, %s148
      %p160 = scmp.eq.s32.totalorder %s39, 1
      %p161 = por %p159, %p160
      %p163 = scmp.ne.s32.totalorder %s148, %s162
      %p164 = scmp.eq.s32.totalorder %s39, 0
      %p165 = por %p163, %p164
      %s167 = sadd.s32 %s166, 1
      %p170 = scmp.eq.s32.totalorder %s33, 1
      %p171 = scmp.ne.s32.totalorder %s166, %s168
      %p172 = scmp.eq.s32.totalorder %s33, 0
      %p173 = por %p171, %p172
      %p174 = scmp.ne.s32.totalorder %s166, %s168
      %p175 = scmp.eq.s32.totalorder %s38, 1
      %p176 = por %p174, %p175
      %p177 = scmp.ne.s32.totalorder %s168, %s169
      %p178 = scmp.eq.s32.totalorder %s38, 0
      %p179 = por %p177, %p178
      %p180 = scmp.ne.s32.totalorder %s168, %s169
      %p181 = scmp.eq.s32.totalorder %s39, 1
      %p182 = por %p180, %p181
      %p184 = scmp.ne.s32.totalorder %s169, %s183
      %p185 = scmp.eq.s32.totalorder %s39, 0
      %p186 = por %p184, %p185
      %s188 = sadd.s32 %s187, 1
      %p191 = scmp.eq.s32.totalorder %s33, 1
      %p192 = scmp.ne.s32.totalorder %s187, %s189
      %p193 = scmp.eq.s32.totalorder %s33, 0
      %p194 = por %p192, %p193
      %p195 = scmp.ne.s32.totalorder %s187, %s189
      %p196 = scmp.eq.s32.totalorder %s38, 1
      %p197 = por %p195, %p196
      %p198 = scmp.ne.s32.totalorder %s189, %s190
      %p199 = scmp.eq.s32.totalorder %s38, 0
      %p200 = por %p198, %p199
      %p201 = scmp.ne.s32.totalorder %s189, %s190
      %p202 = scmp.eq.s32.totalorder %s39, 1
      %p203 = por %p201, %p202
      %p205 = scmp.ne.s32.totalorder %s190, %s204
      %p206 = scmp.eq.s32.totalorder %s39, 0
      %p207 = por %p205, %p206
      %s209 = sadd.s32 %s208, 1
      %p212 = scmp.eq.s32.totalorder %s33, 1
      %p213 = scmp.ne.s32.totalorder %s208, %s210
      %p214 = scmp.eq.s32.totalorder %s33, 0
      %p215 = por %p213, %p214
      %p216 = scmp.ne.s32.totalorder %s208, %s210
      %p217 = scmp.eq.s32.totalorder %s38, 1
      %p218 = por %p216, %p217
      %p219 = scmp.ne.s32.totalorder %s210, %s211
      %p220 = scmp.eq.s32.totalorder %s38, 0
      %p221 = por %p219, %p220
      %p222 = scmp.ne.s32.totalorder %s210, %s211
      %p223 = scmp.eq.s32.totalorder %s39, 1
      %p224 = por %p222, %p223
      %p226 = scmp.ne.s32.totalorder %s211, %s225
      %p227 = scmp.eq.s32.totalorder %s39, 0
      %p228 = por %p226, %p227
      %s229 = ssub.s32 %s33, %s40
      %p230 = scmp.eq.s32.totalorder %s229, 0
      %s232 = sadd.s32 %s231, 1
      %s233 = scalar_select %p230, %s231, %s232
      %p236 = pneg %p230
      %p237 = scmp.eq.s32.totalorder %s33, 1
      %p238 = por %p236, %p237
      %p239 = scmp.ne.s32.totalorder %s231, %s234
      %p240 = scmp.eq.s32.totalorder %s33, 0
      %p241 = por %p239, %p240
      %p242 = scmp.ne.s32.totalorder %s231, %s234
      %p243 = scmp.eq.s32.totalorder %s38, 1
      %p244 = por %p242, %p243
      %p245 = scmp.ne.s32.totalorder %s234, %s235
      %p246 = scmp.eq.s32.totalorder %s38, 0
      %p247 = por %p245, %p246
      %p248 = scmp.ne.s32.totalorder %s234, %s235
      %p249 = scmp.eq.s32.totalorder %s39, 1
      %p250 = por %p248, %p249
      %p252 = scmp.ne.s32.totalorder %s235, %s251
      %p253 = scmp.eq.s32.totalorder %s39, 0
      %p254 = por %p252, %p253
      %s255 = ssub.s32 %s33, %s40
      %p256 = scmp.eq.s32.totalorder %s255, 0
      %s258 = sadd.s32 %s257, 1
      %s259 = scalar_select %p256, %s257, %s258
      %p262 = pneg %p256
      %p263 = scmp.eq.s32.totalorder %s33, 1
      %p264 = por %p262, %p263
      %p265 = scmp.ne.s32.totalorder %s257, %s260
      %p266 = scmp.eq.s32.totalorder %s33, 0
      %p267 = por %p265, %p266
      %p268 = scmp.ne.s32.totalorder %s257, %s260
      %p269 = scmp.eq.s32.totalorder %s38, 1
      %p270 = por %p268, %p269
      %p271 = scmp.ne.s32.totalorder %s260, %s261
      %p272 = scmp.eq.s32.totalorder %s38, 0
      %p273 = por %p271, %p272
      %p274 = scmp.ne.s32.totalorder %s260, %s261
      %p275 = scmp.eq.s32.totalorder %s39, 1
      %p276 = por %p274, %p275
      %p278 = scmp.ne.s32.totalorder %s261, %s277
      %p279 = scmp.eq.s32.totalorder %s39, 0
      %p280 = por %p278, %p279
      %p281 = scmp.le.s32.totalorder 1, %s33
      %p282 = scmp.lt.s32.totalorder %s33, 3
      %p283 = pnand %p281, %p282
      %p284 = pneg %p283
      // Predicated region
      $region9: #{tpu_custom_call.1} parent=5 // pred_check
        _
      $region10: #{tpu_custom_call.1} parent=5 // pred_check_branch
        %286 = sbr.rel (%p283) target = $region12
      $region11: #{tpu_custom_call.1} parent=5 // pred_region
        %s287 = ssub.s32 %s33, 1
        // Predicated region
        $region13: #{tpu_custom_call.1} parent=11 // pred_check
          %p288 = pneg %p158
        $region14: #{tpu_custom_call.1} parent=11 // pred_check_branch
          %290 = sbr.rel (%p288) target = $region16
        $region15: #{tpu_custom_call.1} parent=11 // pred_region
          %292 = vsyncadd [#allocation9], 0
          %s293 = sshll.u32 %s4, 4
          %s294 = int_to_ptr.hbm [resolvable:$true] %s293
          %s295 = sshll.u32 [#allocation10], 4
          %s296 = int_to_ptr.vmem [resolvable:$true] %s295
          %301 = dma.hbm_to_vmem [thread:$0]  %s294, 32768, %s296, [#allocation9], 512, 512, 32
        $region16: #{tpu_custom_call.1} parent=11 // pred_fallthru
          _
        // Predicated region
        $region17: #{tpu_custom_call.1} parent=11 // pred_check
          %p302 = pneg %p179
        $region18: #{tpu_custom_call.1} parent=11 // pred_check_branch
          %304 = sbr.rel (%p302) target = $region20
        $region19: #{tpu_custom_call.1} parent=11 // pred_region
          %306 = vsyncadd [#allocation12], 0
          %s307 = sshll.u32 %s5, 4
          %s308 = int_to_ptr.hbm [resolvable:$true] %s307
          %s309 = sshll.u32 [#allocation11], 4
          %s310 = int_to_ptr.vmem [resolvable:$true] %s309
          %315 = dma.hbm_to_vmem [thread:$0]  %s308, 32768, %s310, [#allocation12], 512, 512, 32
        $region20: #{tpu_custom_call.1} parent=11 // pred_fallthru
          _
        // Predicated region
        $region21: #{tpu_custom_call.1} parent=11 // pred_check
          %p316 = pneg %p200
        $region22: #{tpu_custom_call.1} parent=11 // pred_check_branch
          %318 = sbr.rel (%p316) target = $region24
        $region23: #{tpu_custom_call.1} parent=11 // pred_region
          %320 = vsyncadd [#allocation12], 0
          %s321 = sshll.u32 %s6, 4
          %s322 = int_to_ptr.hbm [resolvable:$true] %s321
          %s323 = sshll.u32 [#allocation13], 4
          %s324 = int_to_ptr.vmem [resolvable:$true] %s323
          %329 = dma.hbm_to_vmem [thread:$0]  %s322, 32768, %s324, [#allocation12], 512, 512, 32
        $region24: #{tpu_custom_call.1} parent=11 // pred_fallthru
          _
        // Predicated region
        $region25: #{tpu_custom_call.1} parent=11 // pred_check
          %p330 = pneg %p221
        $region26: #{tpu_custom_call.1} parent=11 // pred_check_branch
          %332 = sbr.rel (%p330) target = $region28
        $region27: #{tpu_custom_call.1} parent=11 // pred_region
          %334 = vsyncadd [#allocation15], 0
          %s335 = sshll.u32 %s7, 4
          %s336 = int_to_ptr.hbm [resolvable:$true] %s335
          %s337 = sshll.u32 [#allocation14], 4
          %s338 = int_to_ptr.vmem [resolvable:$true] %s337
          %343 = dma.hbm_to_vmem [thread:$0]  %s336, 32768, %s338, [#allocation15], 512, 512, 32
        $region28: #{tpu_custom_call.1} parent=11 // pred_fallthru
          _
      $region12: #{tpu_custom_call.1} parent=5 // pred_fallthru
        _
      %p344 = scmp.lt.s32.totalorder %s33, 2
      // Predicated region
      $region29: #{tpu_custom_call.1} parent=5 // pred_check
        %p345 = pneg %p344
      $region30: #{tpu_custom_call.1} parent=5 // pred_check_branch
        %347 = sbr.rel (%p345) target = $region32
      $region31: #{tpu_custom_call.1} parent=5 // pred_region
        // Predicated region
        $region33: #{tpu_custom_call.1} parent=31 // pred_check
          %p348 = pneg %p53
        $region34: #{tpu_custom_call.1} parent=31 // pred_check_branch
          %350 = sbr.rel (%p348) target = $region36
        $region35: #{tpu_custom_call.1} parent=31 // pred_region
          %s351 = sand.u32 %s43, 1
          %s352 = scalar_lea.sflag [#allocation3], %s351
          %s353 = sand.u32 %s43, 1
          %s354 = smul.addr %s353, 2
          %s355 = scalar_lea.vmem [#allocation2], %s354
          %357 = vsyncadd %s352, 0
          %s358 = smul.addr %s33, 2
          %s359 = scalar_lea.hbm %s0, %s358
          %s361 = sshll.u32 %s359, 4
          %s362 = int_to_ptr.hbm [resolvable:$true] %s361
          %s363 = sshll.u32 %s355, 4
          %s364 = int_to_ptr.vmem [resolvable:$true] %s363
          %366 = dma.hbm_to_vmem [thread:$0]  %s362, 32, %s364, %s352
        $region36: #{tpu_custom_call.1} parent=31 // pred_fallthru
          _
        // Predicated region
        $region37: #{tpu_custom_call.1} parent=31 // pred_check
          %p367 = pneg %p79
        $region38: #{tpu_custom_call.1} parent=31 // pred_check_branch
          %369 = sbr.rel (%p367) target = $region40
        $region39: #{tpu_custom_call.1} parent=31 // pred_region
          %s370 = sand.u32 %s33, 1
          %s371 = scalar_lea.sflag [#allocation6], %s370
          %s372 = sand.u32 %s69, 1
          %s373 = smul.addr %s372, 32
          %s374 = scalar_lea.vmem [#allocation5], %s373
          %376 = vsyncadd %s371, 0
          %s377 = smul.addr %s33, 4
          %s378 = smul.addr %s377, 8
          %s379 = scalar_lea.hbm %s1, %s378
          %s381 = sshll.u32 %s379, 4
          %s382 = int_to_ptr.hbm [resolvable:$true] %s381
          %s383 = sshll.u32 %s374, 4
          %s384 = int_to_ptr.vmem [resolvable:$true] %s383
          %386 = dma.hbm_to_vmem [thread:$0]  %s382, 512, %s384, %s371
        $region40: #{tpu_custom_call.1} parent=31 // pred_fallthru
          _
        // Predicated region
        $region41: #{tpu_custom_call.1} parent=31 // pred_check
          %p387 = pneg %p105
        $region42: #{tpu_custom_call.1} parent=31 // pred_check_branch
          %389 = sbr.rel (%p387) target = $region44
        $region43: #{tpu_custom_call.1} parent=31 // pred_region
          %s390 = sand.u32 %s33, 1
          %s391 = scalar_lea.sflag [#allocation6], %s390
          %s392 = sand.u32 %s95, 1
          %s393 = smul.addr %s392, 32
          %s394 = scalar_lea.vmem [#allocation7], %s393
          %396 = vsyncadd %s391, 0
          %s397 = smul.addr %s33, 4
          %s398 = smul.addr %s397, 8
          %s399 = scalar_lea.hbm %s2, %s398
          %s401 = sshll.u32 %s399, 4
          %s402 = int_to_ptr.hbm [resolvable:$true] %s401
          %s403 = sshll.u32 %s394, 4
          %s404 = int_to_ptr.vmem [resolvable:$true] %s403
          %406 = dma.hbm_to_vmem [thread:$0]  %s402, 512, %s404, %s391
        $region44: #{tpu_custom_call.1} parent=31 // pred_fallthru
          _
        // Predicated region
        $region45: #{tpu_custom_call.1} parent=31 // pred_check
          %p407 = pneg %p131
        $region46: #{tpu_custom_call.1} parent=31 // pred_check_branch
          %409 = sbr.rel (%p407) target = $region48
        $region47: #{tpu_custom_call.1} parent=31 // pred_region
          %s410 = sand.u32 %s33, 1
          %s411 = scalar_lea.sflag [#allocation9], %s410
          %s412 = sand.u32 %s121, 1
          %s413 = smul.addr %s412, 32
          %s414 = scalar_lea.vmem [#allocation8], %s413
          %416 = vsyncadd %s411, 0
          %s417 = smul.addr %s33, 4
          %s418 = smul.addr %s417, 8
          %s419 = scalar_lea.hbm %s3, %s418
          %s421 = sshll.u32 %s419, 4
          %s422 = int_to_ptr.hbm [resolvable:$true] %s421
          %s423 = sshll.u32 %s414, 4
          %s424 = int_to_ptr.vmem [resolvable:$true] %s423
          %426 = dma.hbm_to_vmem [thread:$0]  %s422, 512, %s424, %s411
        $region48: #{tpu_custom_call.1} parent=31 // pred_fallthru
          _
      $region32: #{tpu_custom_call.1} parent=5 // pred_fallthru
        _
      %p427 = scmp.le.s32.totalorder 1, %s33
      %p428 = scmp.lt.s32.totalorder %s33, 3
      %p429 = pnand %p427, %p428
      %p430 = pneg %p429
      // Predicated region
      $region49: #{tpu_custom_call.1} parent=5 // pred_check
        _
      $region50: #{tpu_custom_call.1} parent=5 // pred_check_branch
        %432 = sbr.rel (%p429) target = $region52
      $region51: #{tpu_custom_call.1} parent=5 // pred_region
        %s433 = ssub.s32 %s33, 1
        %s434 = sand.u32 %s46, 1
        %s435 = scalar_lea.sflag [#allocation3], %s434
        %s436 = sand.u32 %s46, 1
        %s437 = smul.addr %s436, 2
        %s438 = scalar_lea.vmem [#allocation2], %s437
        // Predicated region
        $region53: #{tpu_custom_call.1} parent=51 // pred_check
          %p439 = pneg %p59
        $region54: #{tpu_custom_call.1} parent=51 // pred_check_branch
          %441 = sbr.rel (%p439) target = $region56
        $region55: #{tpu_custom_call.1} parent=51 // pred_region
          %443 = dma.done %s435, 32
        $region56: #{tpu_custom_call.1} parent=51 // pred_fallthru
          _
        %s444 = sand.u32 %s38, 1
        %s445 = scalar_lea.sflag [#allocation6], %s444
        %s446 = sand.u32 %s72, 1
        %s447 = smul.addr %s446, 32
        %s448 = scalar_lea.vmem [#allocation5], %s447
        // Predicated region
        $region57: #{tpu_custom_call.1} parent=51 // pred_check
          %p449 = pneg %p85
        $region58: #{tpu_custom_call.1} parent=51 // pred_check_branch
          %451 = sbr.rel (%p449) target = $region60
        $region59: #{tpu_custom_call.1} parent=51 // pred_region
          %453 = dma.done %s445, 512
        $region60: #{tpu_custom_call.1} parent=51 // pred_fallthru
          _
        %s454 = sand.u32 %s38, 1
        %s455 = scalar_lea.sflag [#allocation6], %s454
        %s456 = sand.u32 %s98, 1
        %s457 = smul.addr %s456, 32
        %s458 = scalar_lea.vmem [#allocation7], %s457
        // Predicated region
        $region61: #{tpu_custom_call.1} parent=51 // pred_check
          %p459 = pneg %p111
        $region62: #{tpu_custom_call.1} parent=51 // pred_check_branch
          %461 = sbr.rel (%p459) target = $region64
        $region63: #{tpu_custom_call.1} parent=51 // pred_region
          %463 = dma.done %s455, 512
        $region64: #{tpu_custom_call.1} parent=51 // pred_fallthru
          _
        %s464 = sand.u32 %s38, 1
        %s465 = scalar_lea.sflag [#allocation9], %s464
        %s466 = sand.u32 %s124, 1
        %s467 = smul.addr %s466, 32
        %s468 = scalar_lea.vmem [#allocation8], %s467
        // Predicated region
        $region65: #{tpu_custom_call.1} parent=51 // pred_check
          %p469 = pneg %p137
        $region66: #{tpu_custom_call.1} parent=51 // pred_check_branch
          %471 = sbr.rel (%p469) target = $region68
        $region67: #{tpu_custom_call.1} parent=51 // pred_region
          %473 = dma.done %s465, 512
        $region68: #{tpu_custom_call.1} parent=51 // pred_fallthru
          _
        // Predicated region
        $region69: #{tpu_custom_call.1} parent=51 // pred_check
          %p474 = pneg %p158
        $region70: #{tpu_custom_call.1} parent=51 // pred_check_branch
          %476 = sbr.rel (%p474) target = $region72
        $region71: #{tpu_custom_call.1} parent=51 // pred_region
          %478 = dma.done [#allocation9], 32768
        $region72: #{tpu_custom_call.1} parent=51 // pred_fallthru
          _
        // Predicated region
        $region73: #{tpu_custom_call.1} parent=51 // pred_check
          %p479 = pneg %p179
        $region74: #{tpu_custom_call.1} parent=51 // pred_check_branch
          %481 = sbr.rel (%p479) target = $region76
        $region75: #{tpu_custom_call.1} parent=51 // pred_region
          %483 = dma.done [#allocation12], 32768
        $region76: #{tpu_custom_call.1} parent=51 // pred_fallthru
          _
        // Predicated region
        $region77: #{tpu_custom_call.1} parent=51 // pred_check
          %p484 = pneg %p200
        $region78: #{tpu_custom_call.1} parent=51 // pred_check_branch
          %486 = sbr.rel (%p484) target = $region80
        $region79: #{tpu_custom_call.1} parent=51 // pred_region
          %488 = dma.done [#allocation12], 32768
        $region80: #{tpu_custom_call.1} parent=51 // pred_fallthru
          _
        // Predicated region
        $region81: #{tpu_custom_call.1} parent=51 // pred_check
          %p489 = pneg %p221
        $region82: #{tpu_custom_call.1} parent=51 // pred_check_branch
          %491 = sbr.rel (%p489) target = $region84
        $region83: #{tpu_custom_call.1} parent=51 // pred_region
          %493 = dma.done [#allocation15], 32768
        $region84: #{tpu_custom_call.1} parent=51 // pred_fallthru
          _
        %s494 = sand.u32 %s46, 1
        %s495 = scalar_lea.sflag [#allocation3], %s494
        %s496 = sand.u32 %s46, 1
        %s497 = smul.addr %s496, 2
        %s498 = scalar_lea.vmem [#allocation2], %s497
        %p499 = pneg %p59
        %p500 = pneg %p56
        %s501 = sand.u32 %s38, 1
        %s502 = scalar_lea.sflag [#allocation6], %s501
        %s503 = sand.u32 %s72, 1
        %s504 = smul.addr %s503, 32
        %s505 = scalar_lea.vmem [#allocation5], %s504
        %p506 = pneg %p85
        %p507 = pneg %p82
        %s508 = sand.u32 %s38, 1
        %s509 = scalar_lea.sflag [#allocation6], %s508
        %s510 = sand.u32 %s98, 1
        %s511 = smul.addr %s510, 32
        %s512 = scalar_lea.vmem [#allocation7], %s511
        %p513 = pneg %p111
        %p514 = pneg %p108
        %s515 = sand.u32 %s38, 1
        %s516 = scalar_lea.sflag [#allocation9], %s515
        %s517 = sand.u32 %s124, 1
        %s518 = smul.addr %s517, 32
        %s519 = scalar_lea.vmem [#allocation8], %s518
        %p520 = pneg %p137
        %p521 = pneg %p134
        %p522 = pneg %p158
        %p523 = pneg %p155
        %p524 = pneg %p179
        %p525 = pneg %p176
        %p526 = pneg %p200
        %p527 = pneg %p197
        %p528 = pneg %p221
        %p529 = pneg %p218
        %p530 = pneg %p247
        %p531 = pneg %p244
        %s532 = sand.u32 %s234, 1
        %s533 = scalar_lea.sflag [#allocation4], %s532
        %s534 = sand.u32 %s234, 1
        %s535 = smul.addr %s534, 32
        %s536 = scalar_lea.vmem [#allocation16], %s535
        %p537 = pneg %p273
        %p538 = pneg %p270
        %s539 = sand.u32 %s260, 1
        %s540 = scalar_lea.sflag [#allocation18], %s539
        %s541 = sand.u32 %s260, 1
        %s542 = smul.addr %s541, 64
        %s543 = scalar_lea.vmem [#allocation17], %s542
        %v546 = vld [vmem:[%s448] sm:$0xff]
        %v547 = vld [vmem:[%s448 + $0x8] sm:$0xff]
        %v548 = vld [vmem:[%s448 + $0x10] sm:$0xff]
        %v549 = vld [vmem:[%s448 + $0x18] sm:$0xff]
        %v550 = vld [vmem:[%s438] sm:$0x3]
        %v551 = vld [vmem:[#allocation10] sm:$0xff]
        %v552 = vld [vmem:[#allocation10 + $0x8] sm:$0xff]
        %v553 = vld [vmem:[#allocation10 + $0x10] sm:$0xff]
        %v554 = vld [vmem:[#allocation10 + $0x18] sm:$0xff]
        %v555 = vld [vmem:[#allocation10 + $0x20] sm:$0xff]
        %v556 = vld [vmem:[#allocation10 + $0x28] sm:$0xff]
        %v557 = vld [vmem:[#allocation10 + $0x30] sm:$0xff]
        %v558 = vld [vmem:[#allocation10 + $0x38] sm:$0xff]
        %v559 = vld [vmem:[#allocation10 + $0x40] sm:$0xff]
        %v560 = vld [vmem:[#allocation10 + $0x48] sm:$0xff]
        %v561 = vld [vmem:[#allocation10 + $0x50] sm:$0xff]
        %v562 = vld [vmem:[#allocation10 + $0x58] sm:$0xff]
        %v563 = vld [vmem:[#allocation10 + $0x60] sm:$0xff]
        %v564 = vld [vmem:[#allocation10 + $0x68] sm:$0xff]
        %v565 = vld [vmem:[#allocation10 + $0x70] sm:$0xff]
        %v566 = vld [vmem:[#allocation10 + $0x78] sm:$0xff]
        %v567 = vld [vmem:[#allocation10 + $0x80] sm:$0xff]
        %v568 = vld [vmem:[#allocation10 + $0x88] sm:$0xff]
        %v569 = vld [vmem:[#allocation10 + $0x90] sm:$0xff]
        %v570 = vld [vmem:[#allocation10 + $0x98] sm:$0xff]
        %v571 = vld [vmem:[#allocation10 + $0xa0] sm:$0xff]
        %v572 = vld [vmem:[#allocation10 + $0xa8] sm:$0xff]
        %v573 = vld [vmem:[#allocation10 + $0xb0] sm:$0xff]
        %v574 = vld [vmem:[#allocation10 + $0xb8] sm:$0xff]
        %v575 = vld [vmem:[#allocation10 + $0xc0] sm:$0xff]
        %v576 = vld [vmem:[#allocation10 + $0xc8] sm:$0xff]
        %v577 = vld [vmem:[#allocation10 + $0xd0] sm:$0xff]
        %v578 = vld [vmem:[#allocation10 + $0xd8] sm:$0xff]
        %v579 = vld [vmem:[#allocation10 + $0xe0] sm:$0xff]
        %v580 = vld [vmem:[#allocation10 + $0xe8] sm:$0xff]
        %v581 = vld [vmem:[#allocation10 + $0xf0] sm:$0xff]
        %v582 = vld [vmem:[#allocation10 + $0xf8] sm:$0xff]
        %v583 = vld [vmem:[#allocation10 + $0x100] sm:$0xff]
        %v584 = vld [vmem:[#allocation10 + $0x108] sm:$0xff]
        %v585 = vld [vmem:[#allocation10 + $0x110] sm:$0xff]
        %v586 = vld [vmem:[#allocation10 + $0x118] sm:$0xff]
        %v587 = vld [vmem:[#allocation10 + $0x120] sm:$0xff]
        %v588 = vld [vmem:[#allocation10 + $0x128] sm:$0xff]
        %v589 = vld [vmem:[#allocation10 + $0x130] sm:$0xff]
        %v590 = vld [vmem:[#allocation10 + $0x138] sm:$0xff]
        %v591 = vld [vmem:[#allocation10 + $0x140] sm:$0xff]
        %v592 = vld [vmem:[#allocation10 + $0x148] sm:$0xff]
        %v593 = vld [vmem:[#allocation10 + $0x150] sm:$0xff]
        %v594 = vld [vmem:[#allocation10 + $0x158] sm:$0xff]
        %v595 = vld [vmem:[#allocation10 + $0x160] sm:$0xff]
        %v596 = vld [vmem:[#allocation10 + $0x168] sm:$0xff]
        %v597 = vld [vmem:[#allocation10 + $0x170] sm:$0xff]
        %v598 = vld [vmem:[#allocation10 + $0x178] sm:$0xff]
        %v599 = vld [vmem:[#allocation10 + $0x180] sm:$0xff]
        %v600 = vld [vmem:[#allocation10 + $0x188] sm:$0xff]
        %v601 = vld [vmem:[#allocation10 + $0x190] sm:$0xff]
        %v602 = vld [vmem:[#allocation10 + $0x198] sm:$0xff]
        %v603 = vld [vmem:[#allocation10 + $0x1a0] sm:$0xff]
        %v604 = vld [vmem:[#allocation10 + $0x1a8] sm:$0xff]
        %v605 = vld [vmem:[#allocation10 + $0x1b0] sm:$0xff]
        %v606 = vld [vmem:[#allocation10 + $0x1b8] sm:$0xff]
        %v607 = vld [vmem:[#allocation10 + $0x1c0] sm:$0xff]
        %v608 = vld [vmem:[#allocation10 + $0x1c8] sm:$0xff]
        %v609 = vld [vmem:[#allocation10 + $0x1d0] sm:$0xff]
        %v610 = vld [vmem:[#allocation10 + $0x1d8] sm:$0xff]
        %v611 = vld [vmem:[#allocation10 + $0x1e0] sm:$0xff]
        %v612 = vld [vmem:[#allocation10 + $0x1e8] sm:$0xff]
        %v613 = vld [vmem:[#allocation10 + $0x1f0] sm:$0xff]
        %v614 = vld [vmem:[#allocation10 + $0x1f8] sm:$0xff]
        %v615 = vld [vmem:[#allocation10 + $0x200] sm:$0xff]
        %v616 = vld [vmem:[#allocation10 + $0x208] sm:$0xff]
        %v617 = vld [vmem:[#allocation10 + $0x210] sm:$0xff]
        %v618 = vld [vmem:[#allocation10 + $0x218] sm:$0xff]
        %v619 = vld [vmem:[#allocation10 + $0x220] sm:$0xff]
        %v620 = vld [vmem:[#allocation10 + $0x228] sm:$0xff]
        %v621 = vld [vmem:[#allocation10 + $0x230] sm:$0xff]
        %v622 = vld [vmem:[#allocation10 + $0x238] sm:$0xff]
        %v623 = vld [vmem:[#allocation10 + $0x240] sm:$0xff]
        %v624 = vld [vmem:[#allocation10 + $0x248] sm:$0xff]
        %v625 = vld [vmem:[#allocation10 + $0x250] sm:$0xff]
        %v626 = vld [vmem:[#allocation10 + $0x258] sm:$0xff]
        %v627 = vld [vmem:[#allocation10 + $0x260] sm:$0xff]
        %v628 = vld [vmem:[#allocation10 + $0x268] sm:$0xff]
        %v629 = vld [vmem:[#allocation10 + $0x270] sm:$0xff]
        %v630 = vld [vmem:[#allocation10 + $0x278] sm:$0xff]
        %v631 = vld [vmem:[#allocation10 + $0x280] sm:$0xff]
        %v632 = vld [vmem:[#allocation10 + $0x288] sm:$0xff]
        %v633 = vld [vmem:[#allocation10 + $0x290] sm:$0xff]
        %v634 = vld [vmem:[#allocation10 + $0x298] sm:$0xff]
        %v635 = vld [vmem:[#allocation10 + $0x2a0] sm:$0xff]
        %v636 = vld [vmem:[#allocation10 + $0x2a8] sm:$0xff]
        %v637 = vld [vmem:[#allocation10 + $0x2b0] sm:$0xff]
        %v638 = vld [vmem:[#allocation10 + $0x2b8] sm:$0xff]
        %v639 = vld [vmem:[#allocation10 + $0x2c0] sm:$0xff]
        %v640 = vld [vmem:[#allocation10 + $0x2c8] sm:$0xff]
        %v641 = vld [vmem:[#allocation10 + $0x2d0] sm:$0xff]
        %v642 = vld [vmem:[#allocation10 + $0x2d8] sm:$0xff]
        %v643 = vld [vmem:[#allocation10 + $0x2e0] sm:$0xff]
        %v644 = vld [vmem:[#allocation10 + $0x2e8] sm:$0xff]
        %v645 = vld [vmem:[#allocation10 + $0x2f0] sm:$0xff]
        %v646 = vld [vmem:[#allocation10 + $0x2f8] sm:$0xff]
        %v647 = vld [vmem:[#allocation10 + $0x300] sm:$0xff]
        %v648 = vld [vmem:[#allocation10 + $0x308] sm:$0xff]
        %v649 = vld [vmem:[#allocation10 + $0x310] sm:$0xff]
        %v650 = vld [vmem:[#allocation10 + $0x318] sm:$0xff]
        %v651 = vld [vmem:[#allocation10 + $0x320] sm:$0xff]
        %v652 = vld [vmem:[#allocation10 + $0x328] sm:$0xff]
        %v653 = vld [vmem:[#allocation10 + $0x330] sm:$0xff]
        %v654 = vld [vmem:[#allocation10 + $0x338] sm:$0xff]
        %v655 = vld [vmem:[#allocation10 + $0x340] sm:$0xff]
        %v656 = vld [vmem:[#allocation10 + $0x348] sm:$0xff]
        %v657 = vld [vmem:[#allocation10 + $0x350] sm:$0xff]
        %v658 = vld [vmem:[#allocation10 + $0x358] sm:$0xff]
        %v659 = vld [vmem:[#allocation10 + $0x360] sm:$0xff]
        %v660 = vld [vmem:[#allocation10 + $0x368] sm:$0xff]
        %v661 = vld [vmem:[#allocation10 + $0x370] sm:$0xff]
        %v662 = vld [vmem:[#allocation10 + $0x378] sm:$0xff]
        %v663 = vld [vmem:[#allocation10 + $0x380] sm:$0xff]
        %v664 = vld [vmem:[#allocation10 + $0x388] sm:$0xff]
        %v665 = vld [vmem:[#allocation10 + $0x390] sm:$0xff]
        %v666 = vld [vmem:[#allocation10 + $0x398] sm:$0xff]
        %v667 = vld [vmem:[#allocation10 + $0x3a0] sm:$0xff]
        %v668 = vld [vmem:[#allocation10 + $0x3a8] sm:$0xff]
        %v669 = vld [vmem:[#allocation10 + $0x3b0] sm:$0xff]
        %v670 = vld [vmem:[#allocation10 + $0x3b8] sm:$0xff]
        %v671 = vld [vmem:[#allocation10 + $0x3c0] sm:$0xff]
        %v672 = vld [vmem:[#allocation10 + $0x3c8] sm:$0xff]
        %v673 = vld [vmem:[#allocation10 + $0x3d0] sm:$0xff]
        %v674 = vld [vmem:[#allocation10 + $0x3d8] sm:$0xff]
        %v675 = vld [vmem:[#allocation10 + $0x3e0] sm:$0xff]
        %v676 = vld [vmem:[#allocation10 + $0x3e8] sm:$0xff]
        %v677 = vld [vmem:[#allocation10 + $0x3f0] sm:$0xff]
        %v678 = vld [vmem:[#allocation10 + $0x3f8] sm:$0xff]
        %v679 = vld [vmem:[#allocation10 + $0x400] sm:$0xff]
        %v680 = vld [vmem:[#allocation10 + $0x408] sm:$0xff]
        %v681 = vld [vmem:[#allocation10 + $0x410] sm:$0xff]
        %v682 = vld [vmem:[#allocation10 + $0x418] sm:$0xff]
        %v683 = vld [vmem:[#allocation10 + $0x420] sm:$0xff]
        %v684 = vld [vmem:[#allocation10 + $0x428] sm:$0xff]
        %v685 = vld [vmem:[#allocation10 + $0x430] sm:$0xff]
        %v686 = vld [vmem:[#allocation10 + $0x438] sm:$0xff]
        %v687 = vld [vmem:[#allocation10 + $0x440] sm:$0xff]
        %v688 = vld [vmem:[#allocation10 + $0x448] sm:$0xff]
        %v689 = vld [vmem:[#allocation10 + $0x450] sm:$0xff]
        %v690 = vld [vmem:[#allocation10 + $0x458] sm:$0xff]
        %v691 = vld [vmem:[#allocation10 + $0x460] sm:$0xff]
        %v692 = vld [vmem:[#allocation10 + $0x468] sm:$0xff]
        %v693 = vld [vmem:[#allocation10 + $0x470] sm:$0xff]
        %v694 = vld [vmem:[#allocation10 + $0x478] sm:$0xff]
        %v695 = vld [vmem:[#allocation10 + $0x480] sm:$0xff]
        %v696 = vld [vmem:[#allocation10 + $0x488] sm:$0xff]
        %v697 = vld [vmem:[#allocation10 + $0x490] sm:$0xff]
        %v698 = vld [vmem:[#allocation10 + $0x498] sm:$0xff]
        %v699 = vld [vmem:[#allocation10 + $0x4a0] sm:$0xff]
        %v700 = vld [vmem:[#allocation10 + $0x4a8] sm:$0xff]
        %v701 = vld [vmem:[#allocation10 + $0x4b0] sm:$0xff]
        %v702 = vld [vmem:[#allocation10 + $0x4b8] sm:$0xff]
        %v703 = vld [vmem:[#allocation10 + $0x4c0] sm:$0xff]
        %v704 = vld [vmem:[#allocation10 + $0x4c8] sm:$0xff]
        %v705 = vld [vmem:[#allocation10 + $0x4d0] sm:$0xff]
        %v706 = vld [vmem:[#allocation10 + $0x4d8] sm:$0xff]
        %v707 = vld [vmem:[#allocation10 + $0x4e0] sm:$0xff]
        %v708 = vld [vmem:[#allocation10 + $0x4e8] sm:$0xff]
        %v709 = vld [vmem:[#allocation10 + $0x4f0] sm:$0xff]
        %v710 = vld [vmem:[#allocation10 + $0x4f8] sm:$0xff]
        %v711 = vld [vmem:[#allocation10 + $0x500] sm:$0xff]
        %v712 = vld [vmem:[#allocation10 + $0x508] sm:$0xff]
        %v713 = vld [vmem:[#allocation10 + $0x510] sm:$0xff]
        %v714 = vld [vmem:[#allocation10 + $0x518] sm:$0xff]
        %v715 = vld [vmem:[#allocation10 + $0x520] sm:$0xff]
        %v716 = vld [vmem:[#allocation10 + $0x528] sm:$0xff]
        %v717 = vld [vmem:[#allocation10 + $0x530] sm:$0xff]
        %v718 = vld [vmem:[#allocation10 + $0x538] sm:$0xff]
        %v719 = vld [vmem:[#allocation10 + $0x540] sm:$0xff]
        %v720 = vld [vmem:[#allocation10 + $0x548] sm:$0xff]
        %v721 = vld [vmem:[#allocation10 + $0x550] sm:$0xff]
        %v722 = vld [vmem:[#allocation10 + $0x558] sm:$0xff]
        %v723 = vld [vmem:[#allocation10 + $0x560] sm:$0xff]
        %v724 = vld [vmem:[#allocation10 + $0x568] sm:$0xff]
        %v725 = vld [vmem:[#allocation10 + $0x570] sm:$0xff]
        %v726 = vld [vmem:[#allocation10 + $0x578] sm:$0xff]
        %v727 = vld [vmem:[#allocation10 + $0x580] sm:$0xff]
        %v728 = vld [vmem:[#allocation10 + $0x588] sm:$0xff]
        %v729 = vld [vmem:[#allocation10 + $0x590] sm:$0xff]
        %v730 = vld [vmem:[#allocation10 + $0x598] sm:$0xff]
        %v731 = vld [vmem:[#allocation10 + $0x5a0] sm:$0xff]
        %v732 = vld [vmem:[#allocation10 + $0x5a8] sm:$0xff]
        %v733 = vld [vmem:[#allocation10 + $0x5b0] sm:$0xff]
        %v734 = vld [vmem:[#allocation10 + $0x5b8] sm:$0xff]
        %v735 = vld [vmem:[#allocation10 + $0x5c0] sm:$0xff]
        %v736 = vld [vmem:[#allocation10 + $0x5c8] sm:$0xff]
        %v737 = vld [vmem:[#allocation10 + $0x5d0] sm:$0xff]
        %v738 = vld [vmem:[#allocation10 + $0x5d8] sm:$0xff]
        %v739 = vld [vmem:[#allocation10 + $0x5e0] sm:$0xff]
        %v740 = vld [vmem:[#allocation10 + $0x5e8] sm:$0xff]
        %v741 = vld [vmem:[#allocation10 + $0x5f0] sm:$0xff]
        %v742 = vld [vmem:[#allocation10 + $0x5f8] sm:$0xff]
        %v743 = vld [vmem:[#allocation10 + $0x600] sm:$0xff]
        %v744 = vld [vmem:[#allocation10 + $0x608] sm:$0xff]
        %v745 = vld [vmem:[#allocation10 + $0x610] sm:$0xff]
        %v746 = vld [vmem:[#allocation10 + $0x618] sm:$0xff]
        %v747 = vld [vmem:[#allocation10 + $0x620] sm:$0xff]
        %v748 = vld [vmem:[#allocation10 + $0x628] sm:$0xff]
        %v749 = vld [vmem:[#allocation10 + $0x630] sm:$0xff]
        %v750 = vld [vmem:[#allocation10 + $0x638] sm:$0xff]
        %v751 = vld [vmem:[#allocation10 + $0x640] sm:$0xff]
        %v752 = vld [vmem:[#allocation10 + $0x648] sm:$0xff]
        %v753 = vld [vmem:[#allocation10 + $0x650] sm:$0xff]
        %v754 = vld [vmem:[#allocation10 + $0x658] sm:$0xff]
        %v755 = vld [vmem:[#allocation10 + $0x660] sm:$0xff]
        %v756 = vld [vmem:[#allocation10 + $0x668] sm:$0xff]
        %v757 = vld [vmem:[#allocation10 + $0x670] sm:$0xff]
        %v758 = vld [vmem:[#allocation10 + $0x678] sm:$0xff]
        %v759 = vld [vmem:[#allocation10 + $0x680] sm:$0xff]
        %v760 = vld [vmem:[#allocation10 + $0x688] sm:$0xff]
        %v761 = vld [vmem:[#allocation10 + $0x690] sm:$0xff]
        %v762 = vld [vmem:[#allocation10 + $0x698] sm:$0xff]
        %v763 = vld [vmem:[#allocation10 + $0x6a0] sm:$0xff]
        %v764 = vld [vmem:[#allocation10 + $0x6a8] sm:$0xff]
        %v765 = vld [vmem:[#allocation10 + $0x6b0] sm:$0xff]
        %v766 = vld [vmem:[#allocation10 + $0x6b8] sm:$0xff]
        %v767 = vld [vmem:[#allocation10 + $0x6c0] sm:$0xff]
        %v768 = vld [vmem:[#allocation10 + $0x6c8] sm:$0xff]
        %v769 = vld [vmem:[#allocation10 + $0x6d0] sm:$0xff]
        %v770 = vld [vmem:[#allocation10 + $0x6d8] sm:$0xff]
        %v771 = vld [vmem:[#allocation10 + $0x6e0] sm:$0xff]
        %v772 = vld [vmem:[#allocation10 + $0x6e8] sm:$0xff]
        %v773 = vld [vmem:[#allocation10 + $0x6f0] sm:$0xff]
        %v774 = vld [vmem:[#allocation10 + $0x6f8] sm:$0xff]
        %v775 = vld [vmem:[#allocation10 + $0x700] sm:$0xff]
        %v776 = vld [vmem:[#allocation10 + $0x708] sm:$0xff]
        %v777 = vld [vmem:[#allocation10 + $0x710] sm:$0xff]
        %v778 = vld [vmem:[#allocation10 + $0x718] sm:$0xff]
        %v779 = vld [vmem:[#allocation10 + $0x720] sm:$0xff]
        %v780 = vld [vmem:[#allocation10 + $0x728] sm:$0xff]
        %v781 = vld [vmem:[#allocation10 + $0x730] sm:$0xff]
        %v782 = vld [vmem:[#allocation10 + $0x738] sm:$0xff]
        %v783 = vld [vmem:[#allocation10 + $0x740] sm:$0xff]
        %v784 = vld [vmem:[#allocation10 + $0x748] sm:$0xff]
        %v785 = vld [vmem:[#allocation10 + $0x750] sm:$0xff]
        %v786 = vld [vmem:[#allocation10 + $0x758] sm:$0xff]
        %v787 = vld [vmem:[#allocation10 + $0x760] sm:$0xff]
        %v788 = vld [vmem:[#allocation10 + $0x768] sm:$0xff]
        %v789 = vld [vmem:[#allocation10 + $0x770] sm:$0xff]
        %v790 = vld [vmem:[#allocation10 + $0x778] sm:$0xff]
        %v791 = vld [vmem:[#allocation10 + $0x780] sm:$0xff]
        %v792 = vld [vmem:[#allocation10 + $0x788] sm:$0xff]
        %v793 = vld [vmem:[#allocation10 + $0x790] sm:$0xff]
        %v794 = vld [vmem:[#allocation10 + $0x798] sm:$0xff]
        %v795 = vld [vmem:[#allocation10 + $0x7a0] sm:$0xff]
        %v796 = vld [vmem:[#allocation10 + $0x7a8] sm:$0xff]
        %v797 = vld [vmem:[#allocation10 + $0x7b0] sm:$0xff]
        %v798 = vld [vmem:[#allocation10 + $0x7b8] sm:$0xff]
        %v799 = vld [vmem:[#allocation10 + $0x7c0] sm:$0xff]
        %v800 = vld [vmem:[#allocation10 + $0x7c8] sm:$0xff]
        %v801 = vld [vmem:[#allocation10 + $0x7d0] sm:$0xff]
        %v802 = vld [vmem:[#allocation10 + $0x7d8] sm:$0xff]
        %v803 = vld [vmem:[#allocation10 + $0x7e0] sm:$0xff]
        %v804 = vld [vmem:[#allocation10 + $0x7e8] sm:$0xff]
        %v805 = vld [vmem:[#allocation10 + $0x7f0] sm:$0xff]
        %v806 = vld [vmem:[#allocation10 + $0x7f8] sm:$0xff]
        %807 = vmatpush.msra.mxu0 %v611
        %808 = vmatpush.msra.mxu0 %v607
        %809 = vmatpush.msra.mxu0 %v603
        %810 = vmatpush.msra.mxu0 %v599
        %811 = vmatpush.msra.mxu0 %v595
        %812 = vmatpush.msra.mxu0 %v591
        %813 = vmatpush.msra.mxu0 %v587
        %814 = vmatpush.msra.mxu0 %v583
        %815 = vmatpush.msra.mxu0 %v579
        %816 = vmatpush.msra.mxu0 %v575
        %817 = vmatpush.msra.mxu0 %v571
        %818 = vmatpush.msra.mxu0 %v567
        %819 = vmatpush.msra.mxu0 %v563
        %820 = vmatpush.msra.mxu0 %v559
        %821 = vmatpush.msra.mxu0 %v555
        %822 = vmatpush.msra.mxu0 %v551
        %823 = vmatmul.f32.gmra.mxu0 %v546
        %v824 = vpop.f32.mrf.mxu0
        %v825 = vadd.f32 0.0, %v824
        %826 = vdwg.mxu0
        %827 = vmatpush.msra.mxu0 %v675
        %828 = vmatpush.msra.mxu0 %v671
        %829 = vmatpush.msra.mxu0 %v667
        %830 = vmatpush.msra.mxu0 %v663
        %831 = vmatpush.msra.mxu0 %v659
        %832 = vmatpush.msra.mxu0 %v655
        %833 = vmatpush.msra.mxu0 %v651
        %834 = vmatpush.msra.mxu0 %v647
        %835 = vmatpush.msra.mxu0 %v643
        %836 = vmatpush.msra.mxu0 %v639
        %837 = vmatpush.msra.mxu0 %v635
        %838 = vmatpush.msra.mxu0 %v631
        %839 = vmatpush.msra.mxu0 %v627
        %840 = vmatpush.msra.mxu0 %v623
        %841 = vmatpush.msra.mxu0 %v619
        %842 = vmatpush.msra.mxu0 %v615
        %843 = vmatmul.f32.gmra.mxu0 %v547
        %v844 = vpop.f32.mrf.mxu0
        %v845 = vadd.f32 %v825, %v844
        %846 = vdwg.mxu0
        %847 = vmatpush.msra.mxu0 %v739
        %848 = vmatpush.msra.mxu0 %v735
        %849 = vmatpush.msra.mxu0 %v731
        %850 = vmatpush.msra.mxu0 %v727
        %851 = vmatpush.msra.mxu0 %v723
        %852 = vmatpush.msra.mxu0 %v719
        %853 = vmatpush.msra.mxu0 %v715
        %854 = vmatpush.msra.mxu0 %v711
        %855 = vmatpush.msra.mxu0 %v707
        %856 = vmatpush.msra.mxu0 %v703
        %857 = vmatpush.msra.mxu0 %v699
        %858 = vmatpush.msra.mxu0 %v695
        %859 = vmatpush.msra.mxu0 %v691
        %860 = vmatpush.msra.mxu0 %v687
        %861 = vmatpush.msra.mxu0 %v683
        %862 = vmatpush.msra.mxu0 %v679
        %863 = vmatmul.f32.gmra.mxu0 %v548
        %v864 = vpop.f32.mrf.mxu0
        %v865 = vadd.f32 %v845, %v864
        %866 = vdwg.mxu0
        %867 = vmatpush.msra.mxu0 %v803
        %868 = vmatpush.msra.mxu0 %v799
        %869 = vmatpush.msra.mxu0 %v795
        %870 = vmatpush.msra.mxu0 %v791
        %871 = vmatpush.msra.mxu0 %v787
        %872 = vmatpush.msra.mxu0 %v783
        %873 = vmatpush.msra.mxu0 %v779
        %874 = vmatpush.msra.mxu0 %v775
        %875 = vmatpush.msra.mxu0 %v771
        %876 = vmatpush.msra.mxu0 %v767
        %877 = vmatpush.msra.mxu0 %v763
        %878 = vmatpush.msra.mxu0 %v759
        %879 = vmatpush.msra.mxu0 %v755
        %880 = vmatpush.msra.mxu0 %v751
        %881 = vmatpush.msra.mxu0 %v747
        %882 = vmatpush.msra.mxu0 %v743
        %883 = vmatmul.f32.gmra.mxu0 %v549
        %v884 = vpop.f32.mrf.mxu0
        %v885 = vadd.f32 %v865, %v884
        %886 = vdwg.mxu0
        %887 = vmatpush.msra.mxu0 %v612
        %888 = vmatpush.msra.mxu0 %v608
        %889 = vmatpush.msra.mxu0 %v604
        %890 = vmatpush.msra.mxu0 %v600
        %891 = vmatpush.msra.mxu0 %v596
        %892 = vmatpush.msra.mxu0 %v592
        %893 = vmatpush.msra.mxu0 %v588
        %894 = vmatpush.msra.mxu0 %v584
        %895 = vmatpush.msra.mxu0 %v580
        %896 = vmatpush.msra.mxu0 %v576
        %897 = vmatpush.msra.mxu0 %v572
        %898 = vmatpush.msra.mxu0 %v568
        %899 = vmatpush.msra.mxu0 %v564
        %900 = vmatpush.msra.mxu0 %v560
        %901 = vmatpush.msra.mxu0 %v556
        %902 = vmatpush.msra.mxu0 %v552
        %903 = vmatmul.f32.gmra.mxu0 %v546
        %v904 = vpop.f32.mrf.mxu0
        %v905 = vadd.f32 0.0, %v904
        %906 = vdwg.mxu0
        %907 = vmatpush.msra.mxu0 %v676
        %908 = vmatpush.msra.mxu0 %v672
        %909 = vmatpush.msra.mxu0 %v668
        %910 = vmatpush.msra.mxu0 %v664
        %911 = vmatpush.msra.mxu0 %v660
        %912 = vmatpush.msra.mxu0 %v656
        %913 = vmatpush.msra.mxu0 %v652
        %914 = vmatpush.msra.mxu0 %v648
        %915 = vmatpush.msra.mxu0 %v644
        %916 = vmatpush.msra.mxu0 %v640
        %917 = vmatpush.msra.mxu0 %v636
        %918 = vmatpush.msra.mxu0 %v632
        %919 = vmatpush.msra.mxu0 %v628
        %920 = vmatpush.msra.mxu0 %v624
        %921 = vmatpush.msra.mxu0 %v620
        %922 = vmatpush.msra.mxu0 %v616
        %923 = vmatmul.f32.gmra.mxu0 %v547
        %v924 = vpop.f32.mrf.mxu0
        %v925 = vadd.f32 %v905, %v924
        %926 = vdwg.mxu0
        %927 = vmatpush.msra.mxu0 %v740
        %928 = vmatpush.msra.mxu0 %v736
        %929 = vmatpush.msra.mxu0 %v732
        %930 = vmatpush.msra.mxu0 %v728
        %931 = vmatpush.msra.mxu0 %v724
        %932 = vmatpush.msra.mxu0 %v720
        %933 = vmatpush.msra.mxu0 %v716
        %934 = vmatpush.msra.mxu0 %v712
        %935 = vmatpush.msra.mxu0 %v708
        %936 = vmatpush.msra.mxu0 %v704
        %937 = vmatpush.msra.mxu0 %v700
        %938 = vmatpush.msra.mxu0 %v696
        %939 = vmatpush.msra.mxu0 %v692
        %940 = vmatpush.msra.mxu0 %v688
        %941 = vmatpush.msra.mxu0 %v684
        %942 = vmatpush.msra.mxu0 %v680
        %943 = vmatmul.f32.gmra.mxu0 %v548
        %v944 = vpop.f32.mrf.mxu0
        %v945 = vadd.f32 %v925, %v944
        %946 = vdwg.mxu0
        %947 = vmatpush.msra.mxu0 %v804
        %948 = vmatpush.msra.mxu0 %v800
        %949 = vmatpush.msra.mxu0 %v796
        %950 = vmatpush.msra.mxu0 %v792
        %951 = vmatpush.msra.mxu0 %v788
        %952 = vmatpush.msra.mxu0 %v784
        %953 = vmatpush.msra.mxu0 %v780
        %954 = vmatpush.msra.mxu0 %v776
        %955 = vmatpush.msra.mxu0 %v772
        %956 = vmatpush.msra.mxu0 %v768
        %957 = vmatpush.msra.mxu0 %v764
        %958 = vmatpush.msra.mxu0 %v760
        %959 = vmatpush.msra.mxu0 %v756
        %960 = vmatpush.msra.mxu0 %v752
        %961 = vmatpush.msra.mxu0 %v748
        %962 = vmatpush.msra.mxu0 %v744
        %963 = vmatmul.f32.gmra.mxu0 %v549
        %v964 = vpop.f32.mrf.mxu0
        %v965 = vadd.f32 %v945, %v964
        %966 = vdwg.mxu0
        %967 = vmatpush.msra.mxu0 %v613
        %968 = vmatpush.msra.mxu0 %v609
        %969 = vmatpush.msra.mxu0 %v605
        %970 = vmatpush.msra.mxu0 %v601
        %971 = vmatpush.msra.mxu0 %v597
        %972 = vmatpush.msra.mxu0 %v593
        %973 = vmatpush.msra.mxu0 %v589
        %974 = vmatpush.msra.mxu0 %v585
        %975 = vmatpush.msra.mxu0 %v581
        %976 = vmatpush.msra.mxu0 %v577
        %977 = vmatpush.msra.mxu0 %v573
        %978 = vmatpush.msra.mxu0 %v569
        %979 = vmatpush.msra.mxu0 %v565
        %980 = vmatpush.msra.mxu0 %v561
        %981 = vmatpush.msra.mxu0 %v557
        %982 = vmatpush.msra.mxu0 %v553
        %983 = vmatmul.f32.gmra.mxu0 %v546
        %v984 = vpop.f32.mrf.mxu0
        %v985 = vadd.f32 0.0, %v984
        %986 = vdwg.mxu0
        %987 = vmatpush.msra.mxu0 %v677
        %988 = vmatpush.msra.mxu0 %v673
        %989 = vmatpush.msra.mxu0 %v669
        %990 = vmatpush.msra.mxu0 %v665
        %991 = vmatpush.msra.mxu0 %v661
        %992 = vmatpush.msra.mxu0 %v657
        %993 = vmatpush.msra.mxu0 %v653
        %994 = vmatpush.msra.mxu0 %v649
        %995 = vmatpush.msra.mxu0 %v645
        %996 = vmatpush.msra.mxu0 %v641
        %997 = vmatpush.msra.mxu0 %v637
        %998 = vmatpush.msra.mxu0 %v633
        %999 = vmatpush.msra.mxu0 %v629
        %1000 = vmatpush.msra.mxu0 %v625
        %1001 = vmatpush.msra.mxu0 %v621
        %1002 = vmatpush.msra.mxu0 %v617
        %1003 = vmatmul.f32.gmra.mxu0 %v547
        %v1004 = vpop.f32.mrf.mxu0
        %v1005 = vadd.f32 %v985, %v1004
        %1006 = vdwg.mxu0
        %1007 = vmatpush.msra.mxu0 %v741
        %1008 = vmatpush.msra.mxu0 %v737
        %1009 = vmatpush.msra.mxu0 %v733
        %1010 = vmatpush.msra.mxu0 %v729
        %1011 = vmatpush.msra.mxu0 %v725
        %1012 = vmatpush.msra.mxu0 %v721
        %1013 = vmatpush.msra.mxu0 %v717
        %1014 = vmatpush.msra.mxu0 %v713
        %1015 = vmatpush.msra.mxu0 %v709
        %1016 = vmatpush.msra.mxu0 %v705
        %1017 = vmatpush.msra.mxu0 %v701
        %1018 = vmatpush.msra.mxu0 %v697
        %1019 = vmatpush.msra.mxu0 %v693
        %1020 = vmatpush.msra.mxu0 %v689
        %1021 = vmatpush.msra.mxu0 %v685
        %1022 = vmatpush.msra.mxu0 %v681
        %1023 = vmatmul.f32.gmra.mxu0 %v548
        %v1024 = vpop.f32.mrf.mxu0
        %v1025 = vadd.f32 %v1005, %v1024
        %1026 = vdwg.mxu0
        %1027 = vmatpush.msra.mxu0 %v805
        %1028 = vmatpush.msra.mxu0 %v801
        %1029 = vmatpush.msra.mxu0 %v797
        %1030 = vmatpush.msra.mxu0 %v793
        %1031 = vmatpush.msra.mxu0 %v789
        %1032 = vmatpush.msra.mxu0 %v785
        %1033 = vmatpush.msra.mxu0 %v781
        %1034 = vmatpush.msra.mxu0 %v777
        %1035 = vmatpush.msra.mxu0 %v773
        %1036 = vmatpush.msra.mxu0 %v769
        %1037 = vmatpush.msra.mxu0 %v765
        %1038 = vmatpush.msra.mxu0 %v761
        %1039 = vmatpush.msra.mxu0 %v757
        %1040 = vmatpush.msra.mxu0 %v753
        %1041 = vmatpush.msra.mxu0 %v749
        %1042 = vmatpush.msra.mxu0 %v745
        %1043 = vmatmul.f32.gmra.mxu0 %v549
        %v1044 = vpop.f32.mrf.mxu0
        %v1045 = vadd.f32 %v1025, %v1044
        %1046 = vdwg.mxu0
        %1047 = vmatpush.msra.mxu0 %v614
        %1048 = vmatpush.msra.mxu0 %v610
        %1049 = vmatpush.msra.mxu0 %v606
        %1050 = vmatpush.msra.mxu0 %v602
        %1051 = vmatpush.msra.mxu0 %v598
        %1052 = vmatpush.msra.mxu0 %v594
        %1053 = vmatpush.msra.mxu0 %v590
        %1054 = vmatpush.msra.mxu0 %v586
        %1055 = vmatpush.msra.mxu0 %v582
        %1056 = vmatpush.msra.mxu0 %v578
        %1057 = vmatpush.msra.mxu0 %v574
        %1058 = vmatpush.msra.mxu0 %v570
        %1059 = vmatpush.msra.mxu0 %v566
        %1060 = vmatpush.msra.mxu0 %v562
        %1061 = vmatpush.msra.mxu0 %v558
        %1062 = vmatpush.msra.mxu0 %v554
        %1063 = vmatmul.f32.gmra.mxu0 %v546
        %v1064 = vpop.f32.mrf.mxu0
        %v1065 = vadd.f32 0.0, %v1064
        %1066 = vdwg.mxu0
        %1067 = vmatpush.msra.mxu0 %v678
        %1068 = vmatpush.msra.mxu0 %v674
        %1069 = vmatpush.msra.mxu0 %v670
        %1070 = vmatpush.msra.mxu0 %v666
        %1071 = vmatpush.msra.mxu0 %v662
        %1072 = vmatpush.msra.mxu0 %v658
        %1073 = vmatpush.msra.mxu0 %v654
        %1074 = vmatpush.msra.mxu0 %v650
        %1075 = vmatpush.msra.mxu0 %v646
        %1076 = vmatpush.msra.mxu0 %v642
        %1077 = vmatpush.msra.mxu0 %v638
        %1078 = vmatpush.msra.mxu0 %v634
        %1079 = vmatpush.msra.mxu0 %v630
        %1080 = vmatpush.msra.mxu0 %v626
        %1081 = vmatpush.msra.mxu0 %v622
        %1082 = vmatpush.msra.mxu0 %v618
        %1083 = vmatmul.f32.gmra.mxu0 %v547
        %v1084 = vpop.f32.mrf.mxu0
        %v1085 = vadd.f32 %v1065, %v1084
        %1086 = vdwg.mxu0
        %1087 = vmatpush.msra.mxu0 %v742
        %1088 = vmatpush.msra.mxu0 %v738
        %1089 = vmatpush.msra.mxu0 %v734
        %1090 = vmatpush.msra.mxu0 %v730
        %1091 = vmatpush.msra.mxu0 %v726
        %1092 = vmatpush.msra.mxu0 %v722
        %1093 = vmatpush.msra.mxu0 %v718
        %1094 = vmatpush.msra.mxu0 %v714
        %1095 = vmatpush.msra.mxu0 %v710
        %1096 = vmatpush.msra.mxu0 %v706
        %1097 = vmatpush.msra.mxu0 %v702
        %1098 = vmatpush.msra.mxu0 %v698
        %1099 = vmatpush.msra.mxu0 %v694
        %1100 = vmatpush.msra.mxu0 %v690
        %1101 = vmatpush.msra.mxu0 %v686
        %1102 = vmatpush.msra.mxu0 %v682
        %1103 = vmatmul.f32.gmra.mxu0 %v548
        %v1104 = vpop.f32.mrf.mxu0
        %v1105 = vadd.f32 %v1085, %v1104
        %1106 = vdwg.mxu0
        %1107 = vmatpush.msra.mxu0 %v806
        %1108 = vmatpush.msra.mxu0 %v802
        %1109 = vmatpush.msra.mxu0 %v798
        %1110 = vmatpush.msra.mxu0 %v794
        %1111 = vmatpush.msra.mxu0 %v790
        %1112 = vmatpush.msra.mxu0 %v786
        %1113 = vmatpush.msra.mxu0 %v782
        %1114 = vmatpush.msra.mxu0 %v778
        %1115 = vmatpush.msra.mxu0 %v774
        %1116 = vmatpush.msra.mxu0 %v770
        %1117 = vmatpush.msra.mxu0 %v766
        %1118 = vmatpush.msra.mxu0 %v762
        %1119 = vmatpush.msra.mxu0 %v758
        %1120 = vmatpush.msra.mxu0 %v754
        %1121 = vmatpush.msra.mxu0 %v750
        %1122 = vmatpush.msra.mxu0 %v746
        %1123 = vmatmul.f32.gmra.mxu0 %v549
        %v1124 = vpop.f32.mrf.mxu0
        %v1125 = vadd.f32 %v1105, %v1124
        %1126 = vdwg.mxu0
        %v1127 = vld [vmem:[%s458] sm:$0xff]
        %v1128 = vld [vmem:[%s458 + $0x8] sm:$0xff]
        %v1129 = vld [vmem:[%s458 + $0x10] sm:$0xff]
        %v1130 = vld [vmem:[%s458 + $0x18] sm:$0xff]
        %v1131 = vld [vmem:[#allocation11] sm:$0xff]
        %v1132 = vld [vmem:[#allocation11 + $0x8] sm:$0xff]
        %v1133 = vld [vmem:[#allocation11 + $0x10] sm:$0xff]
        %v1134 = vld [vmem:[#allocation11 + $0x18] sm:$0xff]
        %v1135 = vld [vmem:[#allocation11 + $0x20] sm:$0xff]
        %v1136 = vld [vmem:[#allocation11 + $0x28] sm:$0xff]
        %v1137 = vld [vmem:[#allocation11 + $0x30] sm:$0xff]
        %v1138 = vld [vmem:[#allocation11 + $0x38] sm:$0xff]
        %v1139 = vld [vmem:[#allocation11 + $0x40] sm:$0xff]
        %v1140 = vld [vmem:[#allocation11 + $0x48] sm:$0xff]
        %v1141 = vld [vmem:[#allocation11 + $0x50] sm:$0xff]
        %v1142 = vld [vmem:[#allocation11 + $0x58] sm:$0xff]
        %v1143 = vld [vmem:[#allocation11 + $0x60] sm:$0xff]
        %v1144 = vld [vmem:[#allocation11 + $0x68] sm:$0xff]
        %v1145 = vld [vmem:[#allocation11 + $0x70] sm:$0xff]
        %v1146 = vld [vmem:[#allocation11 + $0x78] sm:$0xff]
        %v1147 = vld [vmem:[#allocation11 + $0x80] sm:$0xff]
        %v1148 = vld [vmem:[#allocation11 + $0x88] sm:$0xff]
        %v1149 = vld [vmem:[#allocation11 + $0x90] sm:$0xff]
        %v1150 = vld [vmem:[#allocation11 + $0x98] sm:$0xff]
        %v1151 = vld [vmem:[#allocation11 + $0xa0] sm:$0xff]
        %v1152 = vld [vmem:[#allocation11 + $0xa8] sm:$0xff]
        %v1153 = vld [vmem:[#allocation11 + $0xb0] sm:$0xff]
        %v1154 = vld [vmem:[#allocation11 + $0xb8] sm:$0xff]
        %v1155 = vld [vmem:[#allocation11 + $0xc0] sm:$0xff]
        %v1156 = vld [vmem:[#allocation11 + $0xc8] sm:$0xff]
        %v1157 = vld [vmem:[#allocation11 + $0xd0] sm:$0xff]
        %v1158 = vld [vmem:[#allocation11 + $0xd8] sm:$0xff]
        %v1159 = vld [vmem:[#allocation11 + $0xe0] sm:$0xff]
        %v1160 = vld [vmem:[#allocation11 + $0xe8] sm:$0xff]
        %v1161 = vld [vmem:[#allocation11 + $0xf0] sm:$0xff]
        %v1162 = vld [vmem:[#allocation11 + $0xf8] sm:$0xff]
        %v1163 = vld [vmem:[#allocation11 + $0x100] sm:$0xff]
        %v1164 = vld [vmem:[#allocation11 + $0x108] sm:$0xff]
        %v1165 = vld [vmem:[#allocation11 + $0x110] sm:$0xff]
        %v1166 = vld [vmem:[#allocation11 + $0x118] sm:$0xff]
        %v1167 = vld [vmem:[#allocation11 + $0x120] sm:$0xff]
        %v1168 = vld [vmem:[#allocation11 + $0x128] sm:$0xff]
        %v1169 = vld [vmem:[#allocation11 + $0x130] sm:$0xff]
        %v1170 = vld [vmem:[#allocation11 + $0x138] sm:$0xff]
        %v1171 = vld [vmem:[#allocation11 + $0x140] sm:$0xff]
        %v1172 = vld [vmem:[#allocation11 + $0x148] sm:$0xff]
        %v1173 = vld [vmem:[#allocation11 + $0x150] sm:$0xff]
        %v1174 = vld [vmem:[#allocation11 + $0x158] sm:$0xff]
        %v1175 = vld [vmem:[#allocation11 + $0x160] sm:$0xff]
        %v1176 = vld [vmem:[#allocation11 + $0x168] sm:$0xff]
        %v1177 = vld [vmem:[#allocation11 + $0x170] sm:$0xff]
        %v1178 = vld [vmem:[#allocation11 + $0x178] sm:$0xff]
        %v1179 = vld [vmem:[#allocation11 + $0x180] sm:$0xff]
        %v1180 = vld [vmem:[#allocation11 + $0x188] sm:$0xff]
        %v1181 = vld [vmem:[#allocation11 + $0x190] sm:$0xff]
        %v1182 = vld [vmem:[#allocation11 + $0x198] sm:$0xff]
        %v1183 = vld [vmem:[#allocation11 + $0x1a0] sm:$0xff]
        %v1184 = vld [vmem:[#allocation11 + $0x1a8] sm:$0xff]
        %v1185 = vld [vmem:[#allocation11 + $0x1b0] sm:$0xff]
        %v1186 = vld [vmem:[#allocation11 + $0x1b8] sm:$0xff]
        %v1187 = vld [vmem:[#allocation11 + $0x1c0] sm:$0xff]
        %v1188 = vld [vmem:[#allocation11 + $0x1c8] sm:$0xff]
        %v1189 = vld [vmem:[#allocation11 + $0x1d0] sm:$0xff]
        %v1190 = vld [vmem:[#allocation11 + $0x1d8] sm:$0xff]
        %v1191 = vld [vmem:[#allocation11 + $0x1e0] sm:$0xff]
        %v1192 = vld [vmem:[#allocation11 + $0x1e8] sm:$0xff]
        %v1193 = vld [vmem:[#allocation11 + $0x1f0] sm:$0xff]
        %v1194 = vld [vmem:[#allocation11 + $0x1f8] sm:$0xff]
        %v1195 = vld [vmem:[#allocation11 + $0x200] sm:$0xff]
        %v1196 = vld [vmem:[#allocation11 + $0x208] sm:$0xff]
        %v1197 = vld [vmem:[#allocation11 + $0x210] sm:$0xff]
        %v1198 = vld [vmem:[#allocation11 + $0x218] sm:$0xff]
        %v1199 = vld [vmem:[#allocation11 + $0x220] sm:$0xff]
        %v1200 = vld [vmem:[#allocation11 + $0x228] sm:$0xff]
        %v1201 = vld [vmem:[#allocation11 + $0x230] sm:$0xff]
        %v1202 = vld [vmem:[#allocation11 + $0x238] sm:$0xff]
        %v1203 = vld [vmem:[#allocation11 + $0x240] sm:$0xff]
        %v1204 = vld [vmem:[#allocation11 + $0x248] sm:$0xff]
        %v1205 = vld [vmem:[#allocation11 + $0x250] sm:$0xff]
        %v1206 = vld [vmem:[#allocation11 + $0x258] sm:$0xff]
        %v1207 = vld [vmem:[#allocation11 + $0x260] sm:$0xff]
        %v1208 = vld [vmem:[#allocation11 + $0x268] sm:$0xff]
        %v1209 = vld [vmem:[#allocation11 + $0x270] sm:$0xff]
        %v1210 = vld [vmem:[#allocation11 + $0x278] sm:$0xff]
        %v1211 = vld [vmem:[#allocation11 + $0x280] sm:$0xff]
        %v1212 = vld [vmem:[#allocation11 + $0x288] sm:$0xff]
        %v1213 = vld [vmem:[#allocation11 + $0x290] sm:$0xff]
        %v1214 = vld [vmem:[#allocation11 + $0x298] sm:$0xff]
        %v1215 = vld [vmem:[#allocation11 + $0x2a0] sm:$0xff]
        %v1216 = vld [vmem:[#allocation11 + $0x2a8] sm:$0xff]
        %v1217 = vld [vmem:[#allocation11 + $0x2b0] sm:$0xff]
        %v1218 = vld [vmem:[#allocation11 + $0x2b8] sm:$0xff]
        %v1219 = vld [vmem:[#allocation11 + $0x2c0] sm:$0xff]
        %v1220 = vld [vmem:[#allocation11 + $0x2c8] sm:$0xff]
        %v1221 = vld [vmem:[#allocation11 + $0x2d0] sm:$0xff]
        %v1222 = vld [vmem:[#allocation11 + $0x2d8] sm:$0xff]
        %v1223 = vld [vmem:[#allocation11 + $0x2e0] sm:$0xff]
        %v1224 = vld [vmem:[#allocation11 + $0x2e8] sm:$0xff]
        %v1225 = vld [vmem:[#allocation11 + $0x2f0] sm:$0xff]
        %v1226 = vld [vmem:[#allocation11 + $0x2f8] sm:$0xff]
        %v1227 = vld [vmem:[#allocation11 + $0x300] sm:$0xff]
        %v1228 = vld [vmem:[#allocation11 + $0x308] sm:$0xff]
        %v1229 = vld [vmem:[#allocation11 + $0x310] sm:$0xff]
        %v1230 = vld [vmem:[#allocation11 + $0x318] sm:$0xff]
        %v1231 = vld [vmem:[#allocation11 + $0x320] sm:$0xff]
        %v1232 = vld [vmem:[#allocation11 + $0x328] sm:$0xff]
        %v1233 = vld [vmem:[#allocation11 + $0x330] sm:$0xff]
        %v1234 = vld [vmem:[#allocation11 + $0x338] sm:$0xff]
        %v1235 = vld [vmem:[#allocation11 + $0x340] sm:$0xff]
        %v1236 = vld [vmem:[#allocation11 + $0x348] sm:$0xff]
        %v1237 = vld [vmem:[#allocation11 + $0x350] sm:$0xff]
        %v1238 = vld [vmem:[#allocation11 + $0x358] sm:$0xff]
        %v1239 = vld [vmem:[#allocation11 + $0x360] sm:$0xff]
        %v1240 = vld [vmem:[#allocation11 + $0x368] sm:$0xff]
        %v1241 = vld [vmem:[#allocation11 + $0x370] sm:$0xff]
        %v1242 = vld [vmem:[#allocation11 + $0x378] sm:$0xff]
        %v1243 = vld [vmem:[#allocation11 + $0x380] sm:$0xff]
        %v1244 = vld [vmem:[#allocation11 + $0x388] sm:$0xff]
        %v1245 = vld [vmem:[#allocation11 + $0x390] sm:$0xff]
        %v1246 = vld [vmem:[#allocation11 + $0x398] sm:$0xff]
        %v1247 = vld [vmem:[#allocation11 + $0x3a0] sm:$0xff]
        %v1248 = vld [vmem:[#allocation11 + $0x3a8] sm:$0xff]
        %v1249 = vld [vmem:[#allocation11 + $0x3b0] sm:$0xff]
        %v1250 = vld [vmem:[#allocation11 + $0x3b8] sm:$0xff]
        %v1251 = vld [vmem:[#allocation11 + $0x3c0] sm:$0xff]
        %v1252 = vld [vmem:[#allocation11 + $0x3c8] sm:$0xff]
        %v1253 = vld [vmem:[#allocation11 + $0x3d0] sm:$0xff]
        %v1254 = vld [vmem:[#allocation11 + $0x3d8] sm:$0xff]
        %v1255 = vld [vmem:[#allocation11 + $0x3e0] sm:$0xff]
        %v1256 = vld [vmem:[#allocation11 + $0x3e8] sm:$0xff]
        %v1257 = vld [vmem:[#allocation11 + $0x3f0] sm:$0xff]
        %v1258 = vld [vmem:[#allocation11 + $0x3f8] sm:$0xff]
        %v1259 = vld [vmem:[#allocation11 + $0x400] sm:$0xff]
        %v1260 = vld [vmem:[#allocation11 + $0x408] sm:$0xff]
        %v1261 = vld [vmem:[#allocation11 + $0x410] sm:$0xff]
        %v1262 = vld [vmem:[#allocation11 + $0x418] sm:$0xff]
        %v1263 = vld [vmem:[#allocation11 + $0x420] sm:$0xff]
        %v1264 = vld [vmem:[#allocation11 + $0x428] sm:$0xff]
        %v1265 = vld [vmem:[#allocation11 + $0x430] sm:$0xff]
        %v1266 = vld [vmem:[#allocation11 + $0x438] sm:$0xff]
        %v1267 = vld [vmem:[#allocation11 + $0x440] sm:$0xff]
        %v1268 = vld [vmem:[#allocation11 + $0x448] sm:$0xff]
        %v1269 = vld [vmem:[#allocation11 + $0x450] sm:$0xff]
        %v1270 = vld [vmem:[#allocation11 + $0x458] sm:$0xff]
        %v1271 = vld [vmem:[#allocation11 + $0x460] sm:$0xff]
        %v1272 = vld [vmem:[#allocation11 + $0x468] sm:$0xff]
        %v1273 = vld [vmem:[#allocation11 + $0x470] sm:$0xff]
        %v1274 = vld [vmem:[#allocation11 + $0x478] sm:$0xff]
        %v1275 = vld [vmem:[#allocation11 + $0x480] sm:$0xff]
        %v1276 = vld [vmem:[#allocation11 + $0x488] sm:$0xff]
        %v1277 = vld [vmem:[#allocation11 + $0x490] sm:$0xff]
        %v1278 = vld [vmem:[#allocation11 + $0x498] sm:$0xff]
        %v1279 = vld [vmem:[#allocation11 + $0x4a0] sm:$0xff]
        %v1280 = vld [vmem:[#allocation11 + $0x4a8] sm:$0xff]
        %v1281 = vld [vmem:[#allocation11 + $0x4b0] sm:$0xff]
        %v1282 = vld [vmem:[#allocation11 + $0x4b8] sm:$0xff]
        %v1283 = vld [vmem:[#allocation11 + $0x4c0] sm:$0xff]
        %v1284 = vld [vmem:[#allocation11 + $0x4c8] sm:$0xff]
        %v1285 = vld [vmem:[#allocation11 + $0x4d0] sm:$0xff]
        %v1286 = vld [vmem:[#allocation11 + $0x4d8] sm:$0xff]
        %v1287 = vld [vmem:[#allocation11 + $0x4e0] sm:$0xff]
        %v1288 = vld [vmem:[#allocation11 + $0x4e8] sm:$0xff]
        %v1289 = vld [vmem:[#allocation11 + $0x4f0] sm:$0xff]
        %v1290 = vld [vmem:[#allocation11 + $0x4f8] sm:$0xff]
        %v1291 = vld [vmem:[#allocation11 + $0x500] sm:$0xff]
        %v1292 = vld [vmem:[#allocation11 + $0x508] sm:$0xff]
        %v1293 = vld [vmem:[#allocation11 + $0x510] sm:$0xff]
        %v1294 = vld [vmem:[#allocation11 + $0x518] sm:$0xff]
        %v1295 = vld [vmem:[#allocation11 + $0x520] sm:$0xff]
        %v1296 = vld [vmem:[#allocation11 + $0x528] sm:$0xff]
        %v1297 = vld [vmem:[#allocation11 + $0x530] sm:$0xff]
        %v1298 = vld [vmem:[#allocation11 + $0x538] sm:$0xff]
        %v1299 = vld [vmem:[#allocation11 + $0x540] sm:$0xff]
        %v1300 = vld [vmem:[#allocation11 + $0x548] sm:$0xff]
        %v1301 = vld [vmem:[#allocation11 + $0x550] sm:$0xff]
        %v1302 = vld [vmem:[#allocation11 + $0x558] sm:$0xff]
        %v1303 = vld [vmem:[#allocation11 + $0x560] sm:$0xff]
        %v1304 = vld [vmem:[#allocation11 + $0x568] sm:$0xff]
        %v1305 = vld [vmem:[#allocation11 + $0x570] sm:$0xff]
        %v1306 = vld [vmem:[#allocation11 + $0x578] sm:$0xff]
        %v1307 = vld [vmem:[#allocation11 + $0x580] sm:$0xff]
        %v1308 = vld [vmem:[#allocation11 + $0x588] sm:$0xff]
        %v1309 = vld [vmem:[#allocation11 + $0x590] sm:$0xff]
        %v1310 = vld [vmem:[#allocation11 + $0x598] sm:$0xff]
        %v1311 = vld [vmem:[#allocation11 + $0x5a0] sm:$0xff]
        %v1312 = vld [vmem:[#allocation11 + $0x5a8] sm:$0xff]
        %v1313 = vld [vmem:[#allocation11 + $0x5b0] sm:$0xff]
        %v1314 = vld [vmem:[#allocation11 + $0x5b8] sm:$0xff]
        %v1315 = vld [vmem:[#allocation11 + $0x5c0] sm:$0xff]
        %v1316 = vld [vmem:[#allocation11 + $0x5c8] sm:$0xff]
        %v1317 = vld [vmem:[#allocation11 + $0x5d0] sm:$0xff]
        %v1318 = vld [vmem:[#allocation11 + $0x5d8] sm:$0xff]
        %v1319 = vld [vmem:[#allocation11 + $0x5e0] sm:$0xff]
        %v1320 = vld [vmem:[#allocation11 + $0x5e8] sm:$0xff]
        %v1321 = vld [vmem:[#allocation11 + $0x5f0] sm:$0xff]
        %v1322 = vld [vmem:[#allocation11 + $0x5f8] sm:$0xff]
        %v1323 = vld [vmem:[#allocation11 + $0x600] sm:$0xff]
        %v1324 = vld [vmem:[#allocation11 + $0x608] sm:$0xff]
        %v1325 = vld [vmem:[#allocation11 + $0x610] sm:$0xff]
        %v1326 = vld [vmem:[#allocation11 + $0x618] sm:$0xff]
        %v1327 = vld [vmem:[#allocation11 + $0x620] sm:$0xff]
        %v1328 = vld [vmem:[#allocation11 + $0x628] sm:$0xff]
        %v1329 = vld [vmem:[#allocation11 + $0x630] sm:$0xff]
        %v1330 = vld [vmem:[#allocation11 + $0x638] sm:$0xff]
        %v1331 = vld [vmem:[#allocation11 + $0x640] sm:$0xff]
        %v1332 = vld [vmem:[#allocation11 + $0x648] sm:$0xff]
        %v1333 = vld [vmem:[#allocation11 + $0x650] sm:$0xff]
        %v1334 = vld [vmem:[#allocation11 + $0x658] sm:$0xff]
        %v1335 = vld [vmem:[#allocation11 + $0x660] sm:$0xff]
        %v1336 = vld [vmem:[#allocation11 + $0x668] sm:$0xff]
        %v1337 = vld [vmem:[#allocation11 + $0x670] sm:$0xff]
        %v1338 = vld [vmem:[#allocation11 + $0x678] sm:$0xff]
        %v1339 = vld [vmem:[#allocation11 + $0x680] sm:$0xff]
        %v1340 = vld [vmem:[#allocation11 + $0x688] sm:$0xff]
        %v1341 = vld [vmem:[#allocation11 + $0x690] sm:$0xff]
        %v1342 = vld [vmem:[#allocation11 + $0x698] sm:$0xff]
        %v1343 = vld [vmem:[#allocation11 + $0x6a0] sm:$0xff]
        %v1344 = vld [vmem:[#allocation11 + $0x6a8] sm:$0xff]
        %v1345 = vld [vmem:[#allocation11 + $0x6b0] sm:$0xff]
        %v1346 = vld [vmem:[#allocation11 + $0x6b8] sm:$0xff]
        %v1347 = vld [vmem:[#allocation11 + $0x6c0] sm:$0xff]
        %v1348 = vld [vmem:[#allocation11 + $0x6c8] sm:$0xff]
        %v1349 = vld [vmem:[#allocation11 + $0x6d0] sm:$0xff]
        %v1350 = vld [vmem:[#allocation11 + $0x6d8] sm:$0xff]
        %v1351 = vld [vmem:[#allocation11 + $0x6e0] sm:$0xff]
        %v1352 = vld [vmem:[#allocation11 + $0x6e8] sm:$0xff]
        %v1353 = vld [vmem:[#allocation11 + $0x6f0] sm:$0xff]
        %v1354 = vld [vmem:[#allocation11 + $0x6f8] sm:$0xff]
        %v1355 = vld [vmem:[#allocation11 + $0x700] sm:$0xff]
        %v1356 = vld [vmem:[#allocation11 + $0x708] sm:$0xff]
        %v1357 = vld [vmem:[#allocation11 + $0x710] sm:$0xff]
        %v1358 = vld [vmem:[#allocation11 + $0x718] sm:$0xff]
        %v1359 = vld [vmem:[#allocation11 + $0x720] sm:$0xff]
        %v1360 = vld [vmem:[#allocation11 + $0x728] sm:$0xff]
        %v1361 = vld [vmem:[#allocation11 + $0x730] sm:$0xff]
        %v1362 = vld [vmem:[#allocation11 + $0x738] sm:$0xff]
        %v1363 = vld [vmem:[#allocation11 + $0x740] sm:$0xff]
        %v1364 = vld [vmem:[#allocation11 + $0x748] sm:$0xff]
        %v1365 = vld [vmem:[#allocation11 + $0x750] sm:$0xff]
        %v1366 = vld [vmem:[#allocation11 + $0x758] sm:$0xff]
        %v1367 = vld [vmem:[#allocation11 + $0x760] sm:$0xff]
        %v1368 = vld [vmem:[#allocation11 + $0x768] sm:$0xff]
        %v1369 = vld [vmem:[#allocation11 + $0x770] sm:$0xff]
        %v1370 = vld [vmem:[#allocation11 + $0x778] sm:$0xff]
        %v1371 = vld [vmem:[#allocation11 + $0x780] sm:$0xff]
        %v1372 = vld [vmem:[#allocation11 + $0x788] sm:$0xff]
        %v1373 = vld [vmem:[#allocation11 + $0x790] sm:$0xff]
        %v1374 = vld [vmem:[#allocation11 + $0x798] sm:$0xff]
        %v1375 = vld [vmem:[#allocation11 + $0x7a0] sm:$0xff]
        %v1376 = vld [vmem:[#allocation11 + $0x7a8] sm:$0xff]
        %v1377 = vld [vmem:[#allocation11 + $0x7b0] sm:$0xff]
        %v1378 = vld [vmem:[#allocation11 + $0x7b8] sm:$0xff]
        %v1379 = vld [vmem:[#allocation11 + $0x7c0] sm:$0xff]
        %v1380 = vld [vmem:[#allocation11 + $0x7c8] sm:$0xff]
        %v1381 = vld [vmem:[#allocation11 + $0x7d0] sm:$0xff]
        %v1382 = vld [vmem:[#allocation11 + $0x7d8] sm:$0xff]
        %v1383 = vld [vmem:[#allocation11 + $0x7e0] sm:$0xff]
        %v1384 = vld [vmem:[#allocation11 + $0x7e8] sm:$0xff]
        %v1385 = vld [vmem:[#allocation11 + $0x7f0] sm:$0xff]
        %v1386 = vld [vmem:[#allocation11 + $0x7f8] sm:$0xff]
        %1387 = vmatpush.msra.mxu0 %v1191
        %1388 = vmatpush.msra.mxu0 %v1187
        %1389 = vmatpush.msra.mxu0 %v1183
        %1390 = vmatpush.msra.mxu0 %v1179
        %1391 = vmatpush.msra.mxu0 %v1175
        %1392 = vmatpush.msra.mxu0 %v1171
        %1393 = vmatpush.msra.mxu0 %v1167
        %1394 = vmatpush.msra.mxu0 %v1163
        %1395 = vmatpush.msra.mxu0 %v1159
        %1396 = vmatpush.msra.mxu0 %v1155
        %1397 = vmatpush.msra.mxu0 %v1151
        %1398 = vmatpush.msra.mxu0 %v1147
        %1399 = vmatpush.msra.mxu0 %v1143
        %1400 = vmatpush.msra.mxu0 %v1139
        %1401 = vmatpush.msra.mxu0 %v1135
        %1402 = vmatpush.msra.mxu0 %v1131
        %1403 = vmatmul.f32.gmra.mxu0 %v1127
        %v1404 = vpop.f32.mrf.mxu0
        %v1405 = vadd.f32 0.0, %v1404
        %1406 = vdwg.mxu0
        %1407 = vmatpush.msra.mxu0 %v1255
        %1408 = vmatpush.msra.mxu0 %v1251
        %1409 = vmatpush.msra.mxu0 %v1247
        %1410 = vmatpush.msra.mxu0 %v1243
        %1411 = vmatpush.msra.mxu0 %v1239
        %1412 = vmatpush.msra.mxu0 %v1235
        %1413 = vmatpush.msra.mxu0 %v1231
        %1414 = vmatpush.msra.mxu0 %v1227
        %1415 = vmatpush.msra.mxu0 %v1223
        %1416 = vmatpush.msra.mxu0 %v1219
        %1417 = vmatpush.msra.mxu0 %v1215
        %1418 = vmatpush.msra.mxu0 %v1211
        %1419 = vmatpush.msra.mxu0 %v1207
        %1420 = vmatpush.msra.mxu0 %v1203
        %1421 = vmatpush.msra.mxu0 %v1199
        %1422 = vmatpush.msra.mxu0 %v1195
        %1423 = vmatmul.f32.gmra.mxu0 %v1128
        %v1424 = vpop.f32.mrf.mxu0
        %v1425 = vadd.f32 %v1405, %v1424
        %1426 = vdwg.mxu0
        %1427 = vmatpush.msra.mxu0 %v1319
        %1428 = vmatpush.msra.mxu0 %v1315
        %1429 = vmatpush.msra.mxu0 %v1311
        %1430 = vmatpush.msra.mxu0 %v1307
        %1431 = vmatpush.msra.mxu0 %v1303
        %1432 = vmatpush.msra.mxu0 %v1299
        %1433 = vmatpush.msra.mxu0 %v1295
        %1434 = vmatpush.msra.mxu0 %v1291
        %1435 = vmatpush.msra.mxu0 %v1287
        %1436 = vmatpush.msra.mxu0 %v1283
        %1437 = vmatpush.msra.mxu0 %v1279
        %1438 = vmatpush.msra.mxu0 %v1275
        %1439 = vmatpush.msra.mxu0 %v1271
        %1440 = vmatpush.msra.mxu0 %v1267
        %1441 = vmatpush.msra.mxu0 %v1263
        %1442 = vmatpush.msra.mxu0 %v1259
        %1443 = vmatmul.f32.gmra.mxu0 %v1129
        %v1444 = vpop.f32.mrf.mxu0
        %v1445 = vadd.f32 %v1425, %v1444
        %1446 = vdwg.mxu0
        %1447 = vmatpush.msra.mxu0 %v1383
        %1448 = vmatpush.msra.mxu0 %v1379
        %1449 = vmatpush.msra.mxu0 %v1375
        %1450 = vmatpush.msra.mxu0 %v1371
        %1451 = vmatpush.msra.mxu0 %v1367
        %1452 = vmatpush.msra.mxu0 %v1363
        %1453 = vmatpush.msra.mxu0 %v1359
        %1454 = vmatpush.msra.mxu0 %v1355
        %1455 = vmatpush.msra.mxu0 %v1351
        %1456 = vmatpush.msra.mxu0 %v1347
        %1457 = vmatpush.msra.mxu0 %v1343
        %1458 = vmatpush.msra.mxu0 %v1339
        %1459 = vmatpush.msra.mxu0 %v1335
        %1460 = vmatpush.msra.mxu0 %v1331
        %1461 = vmatpush.msra.mxu0 %v1327
        %1462 = vmatpush.msra.mxu0 %v1323
        %1463 = vmatmul.f32.gmra.mxu0 %v1130
        %v1464 = vpop.f32.mrf.mxu0
        %v1465 = vadd.f32 %v1445, %v1464
        %1466 = vdwg.mxu0
        %1467 = vmatpush.msra.mxu0 %v1192
        %1468 = vmatpush.msra.mxu0 %v1188
        %1469 = vmatpush.msra.mxu0 %v1184
        %1470 = vmatpush.msra.mxu0 %v1180
        %1471 = vmatpush.msra.mxu0 %v1176
        %1472 = vmatpush.msra.mxu0 %v1172
        %1473 = vmatpush.msra.mxu0 %v1168
        %1474 = vmatpush.msra.mxu0 %v1164
        %1475 = vmatpush.msra.mxu0 %v1160
        %1476 = vmatpush.msra.mxu0 %v1156
        %1477 = vmatpush.msra.mxu0 %v1152
        %1478 = vmatpush.msra.mxu0 %v1148
        %1479 = vmatpush.msra.mxu0 %v1144
        %1480 = vmatpush.msra.mxu0 %v1140
        %1481 = vmatpush.msra.mxu0 %v1136
        %1482 = vmatpush.msra.mxu0 %v1132
        %1483 = vmatmul.f32.gmra.mxu0 %v1127
        %v1484 = vpop.f32.mrf.mxu0
        %v1485 = vadd.f32 0.0, %v1484
        %1486 = vdwg.mxu0
        %1487 = vmatpush.msra.mxu0 %v1256
        %1488 = vmatpush.msra.mxu0 %v1252
        %1489 = vmatpush.msra.mxu0 %v1248
        %1490 = vmatpush.msra.mxu0 %v1244
        %1491 = vmatpush.msra.mxu0 %v1240
        %1492 = vmatpush.msra.mxu0 %v1236
        %1493 = vmatpush.msra.mxu0 %v1232
        %1494 = vmatpush.msra.mxu0 %v1228
        %1495 = vmatpush.msra.mxu0 %v1224
        %1496 = vmatpush.msra.mxu0 %v1220
        %1497 = vmatpush.msra.mxu0 %v1216
        %1498 = vmatpush.msra.mxu0 %v1212
        %1499 = vmatpush.msra.mxu0 %v1208
        %1500 = vmatpush.msra.mxu0 %v1204
        %1501 = vmatpush.msra.mxu0 %v1200
        %1502 = vmatpush.msra.mxu0 %v1196
        %1503 = vmatmul.f32.gmra.mxu0 %v1128
        %v1504 = vpop.f32.mrf.mxu0
        %v1505 = vadd.f32 %v1485, %v1504
        %1506 = vdwg.mxu0
        %1507 = vmatpush.msra.mxu0 %v1320
        %1508 = vmatpush.msra.mxu0 %v1316
        %1509 = vmatpush.msra.mxu0 %v1312
        %1510 = vmatpush.msra.mxu0 %v1308
        %1511 = vmatpush.msra.mxu0 %v1304
        %1512 = vmatpush.msra.mxu0 %v1300
        %1513 = vmatpush.msra.mxu0 %v1296
        %1514 = vmatpush.msra.mxu0 %v1292
        %1515 = vmatpush.msra.mxu0 %v1288
        %1516 = vmatpush.msra.mxu0 %v1284
        %1517 = vmatpush.msra.mxu0 %v1280
        %1518 = vmatpush.msra.mxu0 %v1276
        %1519 = vmatpush.msra.mxu0 %v1272
        %1520 = vmatpush.msra.mxu0 %v1268
        %1521 = vmatpush.msra.mxu0 %v1264
        %1522 = vmatpush.msra.mxu0 %v1260
        %1523 = vmatmul.f32.gmra.mxu0 %v1129
        %v1524 = vpop.f32.mrf.mxu0
        %v1525 = vadd.f32 %v1505, %v1524
        %1526 = vdwg.mxu0
        %1527 = vmatpush.msra.mxu0 %v1384
        %1528 = vmatpush.msra.mxu0 %v1380
        %1529 = vmatpush.msra.mxu0 %v1376
        %1530 = vmatpush.msra.mxu0 %v1372
        %1531 = vmatpush.msra.mxu0 %v1368
        %1532 = vmatpush.msra.mxu0 %v1364
        %1533 = vmatpush.msra.mxu0 %v1360
        %1534 = vmatpush.msra.mxu0 %v1356
        %1535 = vmatpush.msra.mxu0 %v1352
        %1536 = vmatpush.msra.mxu0 %v1348
        %1537 = vmatpush.msra.mxu0 %v1344
        %1538 = vmatpush.msra.mxu0 %v1340
        %1539 = vmatpush.msra.mxu0 %v1336
        %1540 = vmatpush.msra.mxu0 %v1332
        %1541 = vmatpush.msra.mxu0 %v1328
        %1542 = vmatpush.msra.mxu0 %v1324
        %1543 = vmatmul.f32.gmra.mxu0 %v1130
        %v1544 = vpop.f32.mrf.mxu0
        %v1545 = vadd.f32 %v1525, %v1544
        %1546 = vdwg.mxu0
        %1547 = vmatpush.msra.mxu0 %v1193
        %1548 = vmatpush.msra.mxu0 %v1189
        %1549 = vmatpush.msra.mxu0 %v1185
        %1550 = vmatpush.msra.mxu0 %v1181
        %1551 = vmatpush.msra.mxu0 %v1177
        %1552 = vmatpush.msra.mxu0 %v1173
        %1553 = vmatpush.msra.mxu0 %v1169
        %1554 = vmatpush.msra.mxu0 %v1165
        %1555 = vmatpush.msra.mxu0 %v1161
        %1556 = vmatpush.msra.mxu0 %v1157
        %1557 = vmatpush.msra.mxu0 %v1153
        %1558 = vmatpush.msra.mxu0 %v1149
        %1559 = vmatpush.msra.mxu0 %v1145
        %1560 = vmatpush.msra.mxu0 %v1141
        %1561 = vmatpush.msra.mxu0 %v1137
        %1562 = vmatpush.msra.mxu0 %v1133
        %1563 = vmatmul.f32.gmra.mxu0 %v1127
        %v1564 = vpop.f32.mrf.mxu0
        %v1565 = vadd.f32 0.0, %v1564
        %1566 = vdwg.mxu0
        %1567 = vmatpush.msra.mxu0 %v1257
        %1568 = vmatpush.msra.mxu0 %v1253
        %1569 = vmatpush.msra.mxu0 %v1249
        %1570 = vmatpush.msra.mxu0 %v1245
        %1571 = vmatpush.msra.mxu0 %v1241
        %1572 = vmatpush.msra.mxu0 %v1237
        %1573 = vmatpush.msra.mxu0 %v1233
        %1574 = vmatpush.msra.mxu0 %v1229
        %1575 = vmatpush.msra.mxu0 %v1225
        %1576 = vmatpush.msra.mxu0 %v1221
        %1577 = vmatpush.msra.mxu0 %v1217
        %1578 = vmatpush.msra.mxu0 %v1213
        %1579 = vmatpush.msra.mxu0 %v1209
        %1580 = vmatpush.msra.mxu0 %v1205
        %1581 = vmatpush.msra.mxu0 %v1201
        %1582 = vmatpush.msra.mxu0 %v1197
        %1583 = vmatmul.f32.gmra.mxu0 %v1128
        %v1584 = vpop.f32.mrf.mxu0
        %v1585 = vadd.f32 %v1565, %v1584
        %1586 = vdwg.mxu0
        %1587 = vmatpush.msra.mxu0 %v1321
        %1588 = vmatpush.msra.mxu0 %v1317
        %1589 = vmatpush.msra.mxu0 %v1313
        %1590 = vmatpush.msra.mxu0 %v1309
        %1591 = vmatpush.msra.mxu0 %v1305
        %1592 = vmatpush.msra.mxu0 %v1301
        %1593 = vmatpush.msra.mxu0 %v1297
        %1594 = vmatpush.msra.mxu0 %v1293
        %1595 = vmatpush.msra.mxu0 %v1289
        %1596 = vmatpush.msra.mxu0 %v1285
        %1597 = vmatpush.msra.mxu0 %v1281
        %1598 = vmatpush.msra.mxu0 %v1277
        %1599 = vmatpush.msra.mxu0 %v1273
        %1600 = vmatpush.msra.mxu0 %v1269
        %1601 = vmatpush.msra.mxu0 %v1265
        %1602 = vmatpush.msra.mxu0 %v1261
        %1603 = vmatmul.f32.gmra.mxu0 %v1129
        %v1604 = vpop.f32.mrf.mxu0
        %v1605 = vadd.f32 %v1585, %v1604
        %1606 = vdwg.mxu0
        %1607 = vmatpush.msra.mxu0 %v1385
        %1608 = vmatpush.msra.mxu0 %v1381
        %1609 = vmatpush.msra.mxu0 %v1377
        %1610 = vmatpush.msra.mxu0 %v1373
        %1611 = vmatpush.msra.mxu0 %v1369
        %1612 = vmatpush.msra.mxu0 %v1365
        %1613 = vmatpush.msra.mxu0 %v1361
        %1614 = vmatpush.msra.mxu0 %v1357
        %1615 = vmatpush.msra.mxu0 %v1353
        %1616 = vmatpush.msra.mxu0 %v1349
        %1617 = vmatpush.msra.mxu0 %v1345
        %1618 = vmatpush.msra.mxu0 %v1341
        %1619 = vmatpush.msra.mxu0 %v1337
        %1620 = vmatpush.msra.mxu0 %v1333
        %1621 = vmatpush.msra.mxu0 %v1329
        %1622 = vmatpush.msra.mxu0 %v1325
        %1623 = vmatmul.f32.gmra.mxu0 %v1130
        %v1624 = vpop.f32.mrf.mxu0
        %v1625 = vadd.f32 %v1605, %v1624
        %1626 = vdwg.mxu0
        %1627 = vmatpush.msra.mxu0 %v1194
        %1628 = vmatpush.msra.mxu0 %v1190
        %1629 = vmatpush.msra.mxu0 %v1186
        %1630 = vmatpush.msra.mxu0 %v1182
        %1631 = vmatpush.msra.mxu0 %v1178
        %1632 = vmatpush.msra.mxu0 %v1174
        %1633 = vmatpush.msra.mxu0 %v1170
        %1634 = vmatpush.msra.mxu0 %v1166
        %1635 = vmatpush.msra.mxu0 %v1162
        %1636 = vmatpush.msra.mxu0 %v1158
        %1637 = vmatpush.msra.mxu0 %v1154
        %1638 = vmatpush.msra.mxu0 %v1150
        %1639 = vmatpush.msra.mxu0 %v1146
        %1640 = vmatpush.msra.mxu0 %v1142
        %1641 = vmatpush.msra.mxu0 %v1138
        %1642 = vmatpush.msra.mxu0 %v1134
        %1643 = vmatmul.f32.gmra.mxu0 %v1127
        %v1644 = vpop.f32.mrf.mxu0
        %v1645 = vadd.f32 0.0, %v1644
        %1646 = vdwg.mxu0
        %1647 = vmatpush.msra.mxu0 %v1258
        %1648 = vmatpush.msra.mxu0 %v1254
        %1649 = vmatpush.msra.mxu0 %v1250
        %1650 = vmatpush.msra.mxu0 %v1246
        %1651 = vmatpush.msra.mxu0 %v1242
        %1652 = vmatpush.msra.mxu0 %v1238
        %1653 = vmatpush.msra.mxu0 %v1234
        %1654 = vmatpush.msra.mxu0 %v1230
        %1655 = vmatpush.msra.mxu0 %v1226
        %1656 = vmatpush.msra.mxu0 %v1222
        %1657 = vmatpush.msra.mxu0 %v1218
        %1658 = vmatpush.msra.mxu0 %v1214
        %1659 = vmatpush.msra.mxu0 %v1210
        %1660 = vmatpush.msra.mxu0 %v1206
        %1661 = vmatpush.msra.mxu0 %v1202
        %1662 = vmatpush.msra.mxu0 %v1198
        %1663 = vmatmul.f32.gmra.mxu0 %v1128
        %v1664 = vpop.f32.mrf.mxu0
        %v1665 = vadd.f32 %v1645, %v1664
        %1666 = vdwg.mxu0
        %1667 = vmatpush.msra.mxu0 %v1322
        %1668 = vmatpush.msra.mxu0 %v1318
        %1669 = vmatpush.msra.mxu0 %v1314
        %1670 = vmatpush.msra.mxu0 %v1310
        %1671 = vmatpush.msra.mxu0 %v1306
        %1672 = vmatpush.msra.mxu0 %v1302
        %1673 = vmatpush.msra.mxu0 %v1298
        %1674 = vmatpush.msra.mxu0 %v1294
        %1675 = vmatpush.msra.mxu0 %v1290
        %1676 = vmatpush.msra.mxu0 %v1286
        %1677 = vmatpush.msra.mxu0 %v1282
        %1678 = vmatpush.msra.mxu0 %v1278
        %1679 = vmatpush.msra.mxu0 %v1274
        %1680 = vmatpush.msra.mxu0 %v1270
        %1681 = vmatpush.msra.mxu0 %v1266
        %1682 = vmatpush.msra.mxu0 %v1262
        %1683 = vmatmul.f32.gmra.mxu0 %v1129
        %v1684 = vpop.f32.mrf.mxu0
        %v1685 = vadd.f32 %v1665, %v1684
        %1686 = vdwg.mxu0
        %1687 = vmatpush.msra.mxu0 %v1386
        %1688 = vmatpush.msra.mxu0 %v1382
        %1689 = vmatpush.msra.mxu0 %v1378
        %1690 = vmatpush.msra.mxu0 %v1374
        %1691 = vmatpush.msra.mxu0 %v1370
        %1692 = vmatpush.msra.mxu0 %v1366
        %1693 = vmatpush.msra.mxu0 %v1362
        %1694 = vmatpush.msra.mxu0 %v1358
        %1695 = vmatpush.msra.mxu0 %v1354
        %1696 = vmatpush.msra.mxu0 %v1350
        %1697 = vmatpush.msra.mxu0 %v1346
        %1698 = vmatpush.msra.mxu0 %v1342
        %1699 = vmatpush.msra.mxu0 %v1338
        %1700 = vmatpush.msra.mxu0 %v1334
        %1701 = vmatpush.msra.mxu0 %v1330
        %1702 = vmatpush.msra.mxu0 %v1326
        %1703 = vmatmul.f32.gmra.mxu0 %v1130
        %v1704 = vpop.f32.mrf.mxu0
        %v1705 = vadd.f32 %v1685, %v1704
        %1706 = vdwg.mxu0
        %v1707 = vld [vmem:[%s468] sm:$0xff]
        %v1708 = vld [vmem:[%s468 + $0x8] sm:$0xff]
        %v1709 = vld [vmem:[%s468 + $0x10] sm:$0xff]
        %v1710 = vld [vmem:[%s468 + $0x18] sm:$0xff]
        %v1711 = vld [vmem:[#allocation13] sm:$0xff]
        %v1712 = vld [vmem:[#allocation13 + $0x8] sm:$0xff]
        %v1713 = vld [vmem:[#allocation13 + $0x10] sm:$0xff]
        %v1714 = vld [vmem:[#allocation13 + $0x18] sm:$0xff]
        %v1715 = vld [vmem:[#allocation13 + $0x20] sm:$0xff]
        %v1716 = vld [vmem:[#allocation13 + $0x28] sm:$0xff]
        %v1717 = vld [vmem:[#allocation13 + $0x30] sm:$0xff]
        %v1718 = vld [vmem:[#allocation13 + $0x38] sm:$0xff]
        %v1719 = vld [vmem:[#allocation13 + $0x40] sm:$0xff]
        %v1720 = vld [vmem:[#allocation13 + $0x48] sm:$0xff]
        %v1721 = vld [vmem:[#allocation13 + $0x50] sm:$0xff]
        %v1722 = vld [vmem:[#allocation13 + $0x58] sm:$0xff]
        %v1723 = vld [vmem:[#allocation13 + $0x60] sm:$0xff]
        %v1724 = vld [vmem:[#allocation13 + $0x68] sm:$0xff]
        %v1725 = vld [vmem:[#allocation13 + $0x70] sm:$0xff]
        %v1726 = vld [vmem:[#allocation13 + $0x78] sm:$0xff]
        %v1727 = vld [vmem:[#allocation13 + $0x80] sm:$0xff]
        %v1728 = vld [vmem:[#allocation13 + $0x88] sm:$0xff]
        %v1729 = vld [vmem:[#allocation13 + $0x90] sm:$0xff]
        %v1730 = vld [vmem:[#allocation13 + $0x98] sm:$0xff]
        %v1731 = vld [vmem:[#allocation13 + $0xa0] sm:$0xff]
        %v1732 = vld [vmem:[#allocation13 + $0xa8] sm:$0xff]
        %v1733 = vld [vmem:[#allocation13 + $0xb0] sm:$0xff]
        %v1734 = vld [vmem:[#allocation13 + $0xb8] sm:$0xff]
        %v1735 = vld [vmem:[#allocation13 + $0xc0] sm:$0xff]
        %v1736 = vld [vmem:[#allocation13 + $0xc8] sm:$0xff]
        %v1737 = vld [vmem:[#allocation13 + $0xd0] sm:$0xff]
        %v1738 = vld [vmem:[#allocation13 + $0xd8] sm:$0xff]
        %v1739 = vld [vmem:[#allocation13 + $0xe0] sm:$0xff]
        %v1740 = vld [vmem:[#allocation13 + $0xe8] sm:$0xff]
        %v1741 = vld [vmem:[#allocation13 + $0xf0] sm:$0xff]
        %v1742 = vld [vmem:[#allocation13 + $0xf8] sm:$0xff]
        %v1743 = vld [vmem:[#allocation13 + $0x100] sm:$0xff]
        %v1744 = vld [vmem:[#allocation13 + $0x108] sm:$0xff]
        %v1745 = vld [vmem:[#allocation13 + $0x110] sm:$0xff]
        %v1746 = vld [vmem:[#allocation13 + $0x118] sm:$0xff]
        %v1747 = vld [vmem:[#allocation13 + $0x120] sm:$0xff]
        %v1748 = vld [vmem:[#allocation13 + $0x128] sm:$0xff]
        %v1749 = vld [vmem:[#allocation13 + $0x130] sm:$0xff]
        %v1750 = vld [vmem:[#allocation13 + $0x138] sm:$0xff]
        %v1751 = vld [vmem:[#allocation13 + $0x140] sm:$0xff]
        %v1752 = vld [vmem:[#allocation13 + $0x148] sm:$0xff]
        %v1753 = vld [vmem:[#allocation13 + $0x150] sm:$0xff]
        %v1754 = vld [vmem:[#allocation13 + $0x158] sm:$0xff]
        %v1755 = vld [vmem:[#allocation13 + $0x160] sm:$0xff]
        %v1756 = vld [vmem:[#allocation13 + $0x168] sm:$0xff]
        %v1757 = vld [vmem:[#allocation13 + $0x170] sm:$0xff]
        %v1758 = vld [vmem:[#allocation13 + $0x178] sm:$0xff]
        %v1759 = vld [vmem:[#allocation13 + $0x180] sm:$0xff]
        %v1760 = vld [vmem:[#allocation13 + $0x188] sm:$0xff]
        %v1761 = vld [vmem:[#allocation13 + $0x190] sm:$0xff]
        %v1762 = vld [vmem:[#allocation13 + $0x198] sm:$0xff]
        %v1763 = vld [vmem:[#allocation13 + $0x1a0] sm:$0xff]
        %v1764 = vld [vmem:[#allocation13 + $0x1a8] sm:$0xff]
        %v1765 = vld [vmem:[#allocation13 + $0x1b0] sm:$0xff]
        %v1766 = vld [vmem:[#allocation13 + $0x1b8] sm:$0xff]
        %v1767 = vld [vmem:[#allocation13 + $0x1c0] sm:$0xff]
        %v1768 = vld [vmem:[#allocation13 + $0x1c8] sm:$0xff]
        %v1769 = vld [vmem:[#allocation13 + $0x1d0] sm:$0xff]
        %v1770 = vld [vmem:[#allocation13 + $0x1d8] sm:$0xff]
        %v1771 = vld [vmem:[#allocation13 + $0x1e0] sm:$0xff]
        %v1772 = vld [vmem:[#allocation13 + $0x1e8] sm:$0xff]
        %v1773 = vld [vmem:[#allocation13 + $0x1f0] sm:$0xff]
        %v1774 = vld [vmem:[#allocation13 + $0x1f8] sm:$0xff]
        %v1775 = vld [vmem:[#allocation13 + $0x200] sm:$0xff]
        %v1776 = vld [vmem:[#allocation13 + $0x208] sm:$0xff]
        %v1777 = vld [vmem:[#allocation13 + $0x210] sm:$0xff]
        %v1778 = vld [vmem:[#allocation13 + $0x218] sm:$0xff]
        %v1779 = vld [vmem:[#allocation13 + $0x220] sm:$0xff]
        %v1780 = vld [vmem:[#allocation13 + $0x228] sm:$0xff]
        %v1781 = vld [vmem:[#allocation13 + $0x230] sm:$0xff]
        %v1782 = vld [vmem:[#allocation13 + $0x238] sm:$0xff]
        %v1783 = vld [vmem:[#allocation13 + $0x240] sm:$0xff]
        %v1784 = vld [vmem:[#allocation13 + $0x248] sm:$0xff]
        %v1785 = vld [vmem:[#allocation13 + $0x250] sm:$0xff]
        %v1786 = vld [vmem:[#allocation13 + $0x258] sm:$0xff]
        %v1787 = vld [vmem:[#allocation13 + $0x260] sm:$0xff]
        %v1788 = vld [vmem:[#allocation13 + $0x268] sm:$0xff]
        %v1789 = vld [vmem:[#allocation13 + $0x270] sm:$0xff]
        %v1790 = vld [vmem:[#allocation13 + $0x278] sm:$0xff]
        %v1791 = vld [vmem:[#allocation13 + $0x280] sm:$0xff]
        %v1792 = vld [vmem:[#allocation13 + $0x288] sm:$0xff]
        %v1793 = vld [vmem:[#allocation13 + $0x290] sm:$0xff]
        %v1794 = vld [vmem:[#allocation13 + $0x298] sm:$0xff]
        %v1795 = vld [vmem:[#allocation13 + $0x2a0] sm:$0xff]
        %v1796 = vld [vmem:[#allocation13 + $0x2a8] sm:$0xff]
        %v1797 = vld [vmem:[#allocation13 + $0x2b0] sm:$0xff]
        %v1798 = vld [vmem:[#allocation13 + $0x2b8] sm:$0xff]
        %v1799 = vld [vmem:[#allocation13 + $0x2c0] sm:$0xff]
        %v1800 = vld [vmem:[#allocation13 + $0x2c8] sm:$0xff]
        %v1801 = vld [vmem:[#allocation13 + $0x2d0] sm:$0xff]
        %v1802 = vld [vmem:[#allocation13 + $0x2d8] sm:$0xff]
        %v1803 = vld [vmem:[#allocation13 + $0x2e0] sm:$0xff]
        %v1804 = vld [vmem:[#allocation13 + $0x2e8] sm:$0xff]
        %v1805 = vld [vmem:[#allocation13 + $0x2f0] sm:$0xff]
        %v1806 = vld [vmem:[#allocation13 + $0x2f8] sm:$0xff]
        %v1807 = vld [vmem:[#allocation13 + $0x300] sm:$0xff]
        %v1808 = vld [vmem:[#allocation13 + $0x308] sm:$0xff]
        %v1809 = vld [vmem:[#allocation13 + $0x310] sm:$0xff]
        %v1810 = vld [vmem:[#allocation13 + $0x318] sm:$0xff]
        %v1811 = vld [vmem:[#allocation13 + $0x320] sm:$0xff]
        %v1812 = vld [vmem:[#allocation13 + $0x328] sm:$0xff]
        %v1813 = vld [vmem:[#allocation13 + $0x330] sm:$0xff]
        %v1814 = vld [vmem:[#allocation13 + $0x338] sm:$0xff]
        %v1815 = vld [vmem:[#allocation13 + $0x340] sm:$0xff]
        %v1816 = vld [vmem:[#allocation13 + $0x348] sm:$0xff]
        %v1817 = vld [vmem:[#allocation13 + $0x350] sm:$0xff]
        %v1818 = vld [vmem:[#allocation13 + $0x358] sm:$0xff]
        %v1819 = vld [vmem:[#allocation13 + $0x360] sm:$0xff]
        %v1820 = vld [vmem:[#allocation13 + $0x368] sm:$0xff]
        %v1821 = vld [vmem:[#allocation13 + $0x370] sm:$0xff]
        %v1822 = vld [vmem:[#allocation13 + $0x378] sm:$0xff]
        %v1823 = vld [vmem:[#allocation13 + $0x380] sm:$0xff]
        %v1824 = vld [vmem:[#allocation13 + $0x388] sm:$0xff]
        %v1825 = vld [vmem:[#allocation13 + $0x390] sm:$0xff]
        %v1826 = vld [vmem:[#allocation13 + $0x398] sm:$0xff]
        %v1827 = vld [vmem:[#allocation13 + $0x3a0] sm:$0xff]
        %v1828 = vld [vmem:[#allocation13 + $0x3a8] sm:$0xff]
        %v1829 = vld [vmem:[#allocation13 + $0x3b0] sm:$0xff]
        %v1830 = vld [vmem:[#allocation13 + $0x3b8] sm:$0xff]
        %v1831 = vld [vmem:[#allocation13 + $0x3c0] sm:$0xff]
        %v1832 = vld [vmem:[#allocation13 + $0x3c8] sm:$0xff]
        %v1833 = vld [vmem:[#allocation13 + $0x3d0] sm:$0xff]
        %v1834 = vld [vmem:[#allocation13 + $0x3d8] sm:$0xff]
        %v1835 = vld [vmem:[#allocation13 + $0x3e0] sm:$0xff]
        %v1836 = vld [vmem:[#allocation13 + $0x3e8] sm:$0xff]
        %v1837 = vld [vmem:[#allocation13 + $0x3f0] sm:$0xff]
        %v1838 = vld [vmem:[#allocation13 + $0x3f8] sm:$0xff]
        %v1839 = vld [vmem:[#allocation13 + $0x400] sm:$0xff]
        %v1840 = vld [vmem:[#allocation13 + $0x408] sm:$0xff]
        %v1841 = vld [vmem:[#allocation13 + $0x410] sm:$0xff]
        %v1842 = vld [vmem:[#allocation13 + $0x418] sm:$0xff]
        %v1843 = vld [vmem:[#allocation13 + $0x420] sm:$0xff]
        %v1844 = vld [vmem:[#allocation13 + $0x428] sm:$0xff]
        %v1845 = vld [vmem:[#allocation13 + $0x430] sm:$0xff]
        %v1846 = vld [vmem:[#allocation13 + $0x438] sm:$0xff]
        %v1847 = vld [vmem:[#allocation13 + $0x440] sm:$0xff]
        %v1848 = vld [vmem:[#allocation13 + $0x448] sm:$0xff]
        %v1849 = vld [vmem:[#allocation13 + $0x450] sm:$0xff]
        %v1850 = vld [vmem:[#allocation13 + $0x458] sm:$0xff]
        %v1851 = vld [vmem:[#allocation13 + $0x460] sm:$0xff]
        %v1852 = vld [vmem:[#allocation13 + $0x468] sm:$0xff]
        %v1853 = vld [vmem:[#allocation13 + $0x470] sm:$0xff]
        %v1854 = vld [vmem:[#allocation13 + $0x478] sm:$0xff]
        %v1855 = vld [vmem:[#allocation13 + $0x480] sm:$0xff]
        %v1856 = vld [vmem:[#allocation13 + $0x488] sm:$0xff]
        %v1857 = vld [vmem:[#allocation13 + $0x490] sm:$0xff]
        %v1858 = vld [vmem:[#allocation13 + $0x498] sm:$0xff]
        %v1859 = vld [vmem:[#allocation13 + $0x4a0] sm:$0xff]
        %v1860 = vld [vmem:[#allocation13 + $0x4a8] sm:$0xff]
        %v1861 = vld [vmem:[#allocation13 + $0x4b0] sm:$0xff]
        %v1862 = vld [vmem:[#allocation13 + $0x4b8] sm:$0xff]
        %v1863 = vld [vmem:[#allocation13 + $0x4c0] sm:$0xff]
        %v1864 = vld [vmem:[#allocation13 + $0x4c8] sm:$0xff]
        %v1865 = vld [vmem:[#allocation13 + $0x4d0] sm:$0xff]
        %v1866 = vld [vmem:[#allocation13 + $0x4d8] sm:$0xff]
        %v1867 = vld [vmem:[#allocation13 + $0x4e0] sm:$0xff]
        %v1868 = vld [vmem:[#allocation13 + $0x4e8] sm:$0xff]
        %v1869 = vld [vmem:[#allocation13 + $0x4f0] sm:$0xff]
        %v1870 = vld [vmem:[#allocation13 + $0x4f8] sm:$0xff]
        %v1871 = vld [vmem:[#allocation13 + $0x500] sm:$0xff]
        %v1872 = vld [vmem:[#allocation13 + $0x508] sm:$0xff]
        %v1873 = vld [vmem:[#allocation13 + $0x510] sm:$0xff]
        %v1874 = vld [vmem:[#allocation13 + $0x518] sm:$0xff]
        %v1875 = vld [vmem:[#allocation13 + $0x520] sm:$0xff]
        %v1876 = vld [vmem:[#allocation13 + $0x528] sm:$0xff]
        %v1877 = vld [vmem:[#allocation13 + $0x530] sm:$0xff]
        %v1878 = vld [vmem:[#allocation13 + $0x538] sm:$0xff]
        %v1879 = vld [vmem:[#allocation13 + $0x540] sm:$0xff]
        %v1880 = vld [vmem:[#allocation13 + $0x548] sm:$0xff]
        %v1881 = vld [vmem:[#allocation13 + $0x550] sm:$0xff]
        %v1882 = vld [vmem:[#allocation13 + $0x558] sm:$0xff]
        %v1883 = vld [vmem:[#allocation13 + $0x560] sm:$0xff]
        %v1884 = vld [vmem:[#allocation13 + $0x568] sm:$0xff]
        %v1885 = vld [vmem:[#allocation13 + $0x570] sm:$0xff]
        %v1886 = vld [vmem:[#allocation13 + $0x578] sm:$0xff]
        %v1887 = vld [vmem:[#allocation13 + $0x580] sm:$0xff]
        %v1888 = vld [vmem:[#allocation13 + $0x588] sm:$0xff]
        %v1889 = vld [vmem:[#allocation13 + $0x590] sm:$0xff]
        %v1890 = vld [vmem:[#allocation13 + $0x598] sm:$0xff]
        %v1891 = vld [vmem:[#allocation13 + $0x5a0] sm:$0xff]
        %v1892 = vld [vmem:[#allocation13 + $0x5a8] sm:$0xff]
        %v1893 = vld [vmem:[#allocation13 + $0x5b0] sm:$0xff]
        %v1894 = vld [vmem:[#allocation13 + $0x5b8] sm:$0xff]
        %v1895 = vld [vmem:[#allocation13 + $0x5c0] sm:$0xff]
        %v1896 = vld [vmem:[#allocation13 + $0x5c8] sm:$0xff]
        %v1897 = vld [vmem:[#allocation13 + $0x5d0] sm:$0xff]
        %v1898 = vld [vmem:[#allocation13 + $0x5d8] sm:$0xff]
        %v1899 = vld [vmem:[#allocation13 + $0x5e0] sm:$0xff]
        %v1900 = vld [vmem:[#allocation13 + $0x5e8] sm:$0xff]
        %v1901 = vld [vmem:[#allocation13 + $0x5f0] sm:$0xff]
        %v1902 = vld [vmem:[#allocation13 + $0x5f8] sm:$0xff]
        %v1903 = vld [vmem:[#allocation13 + $0x600] sm:$0xff]
        %v1904 = vld [vmem:[#allocation13 + $0x608] sm:$0xff]
        %v1905 = vld [vmem:[#allocation13 + $0x610] sm:$0xff]
        %v1906 = vld [vmem:[#allocation13 + $0x618] sm:$0xff]
        %v1907 = vld [vmem:[#allocation13 + $0x620] sm:$0xff]
        %v1908 = vld [vmem:[#allocation13 + $0x628] sm:$0xff]
        %v1909 = vld [vmem:[#allocation13 + $0x630] sm:$0xff]
        %v1910 = vld [vmem:[#allocation13 + $0x638] sm:$0xff]
        %v1911 = vld [vmem:[#allocation13 + $0x640] sm:$0xff]
        %v1912 = vld [vmem:[#allocation13 + $0x648] sm:$0xff]
        %v1913 = vld [vmem:[#allocation13 + $0x650] sm:$0xff]
        %v1914 = vld [vmem:[#allocation13 + $0x658] sm:$0xff]
        %v1915 = vld [vmem:[#allocation13 + $0x660] sm:$0xff]
        %v1916 = vld [vmem:[#allocation13 + $0x668] sm:$0xff]
        %v1917 = vld [vmem:[#allocation13 + $0x670] sm:$0xff]
        %v1918 = vld [vmem:[#allocation13 + $0x678] sm:$0xff]
        %v1919 = vld [vmem:[#allocation13 + $0x680] sm:$0xff]
        %v1920 = vld [vmem:[#allocation13 + $0x688] sm:$0xff]
        %v1921 = vld [vmem:[#allocation13 + $0x690] sm:$0xff]
        %v1922 = vld [vmem:[#allocation13 + $0x698] sm:$0xff]
        %v1923 = vld [vmem:[#allocation13 + $0x6a0] sm:$0xff]
        %v1924 = vld [vmem:[#allocation13 + $0x6a8] sm:$0xff]
        %v1925 = vld [vmem:[#allocation13 + $0x6b0] sm:$0xff]
        %v1926 = vld [vmem:[#allocation13 + $0x6b8] sm:$0xff]
        %v1927 = vld [vmem:[#allocation13 + $0x6c0] sm:$0xff]
        %v1928 = vld [vmem:[#allocation13 + $0x6c8] sm:$0xff]
        %v1929 = vld [vmem:[#allocation13 + $0x6d0] sm:$0xff]
        %v1930 = vld [vmem:[#allocation13 + $0x6d8] sm:$0xff]
        %v1931 = vld [vmem:[#allocation13 + $0x6e0] sm:$0xff]
        %v1932 = vld [vmem:[#allocation13 + $0x6e8] sm:$0xff]
        %v1933 = vld [vmem:[#allocation13 + $0x6f0] sm:$0xff]
        %v1934 = vld [vmem:[#allocation13 + $0x6f8] sm:$0xff]
        %v1935 = vld [vmem:[#allocation13 + $0x700] sm:$0xff]
        %v1936 = vld [vmem:[#allocation13 + $0x708] sm:$0xff]
        %v1937 = vld [vmem:[#allocation13 + $0x710] sm:$0xff]
        %v1938 = vld [vmem:[#allocation13 + $0x718] sm:$0xff]
        %v1939 = vld [vmem:[#allocation13 + $0x720] sm:$0xff]
        %v1940 = vld [vmem:[#allocation13 + $0x728] sm:$0xff]
        %v1941 = vld [vmem:[#allocation13 + $0x730] sm:$0xff]
        %v1942 = vld [vmem:[#allocation13 + $0x738] sm:$0xff]
        %v1943 = vld [vmem:[#allocation13 + $0x740] sm:$0xff]
        %v1944 = vld [vmem:[#allocation13 + $0x748] sm:$0xff]
        %v1945 = vld [vmem:[#allocation13 + $0x750] sm:$0xff]
        %v1946 = vld [vmem:[#allocation13 + $0x758] sm:$0xff]
        %v1947 = vld [vmem:[#allocation13 + $0x760] sm:$0xff]
        %v1948 = vld [vmem:[#allocation13 + $0x768] sm:$0xff]
        %v1949 = vld [vmem:[#allocation13 + $0x770] sm:$0xff]
        %v1950 = vld [vmem:[#allocation13 + $0x778] sm:$0xff]
        %v1951 = vld [vmem:[#allocation13 + $0x780] sm:$0xff]
        %v1952 = vld [vmem:[#allocation13 + $0x788] sm:$0xff]
        %v1953 = vld [vmem:[#allocation13 + $0x790] sm:$0xff]
        %v1954 = vld [vmem:[#allocation13 + $0x798] sm:$0xff]
        %v1955 = vld [vmem:[#allocation13 + $0x7a0] sm:$0xff]
        %v1956 = vld [vmem:[#allocation13 + $0x7a8] sm:$0xff]
        %v1957 = vld [vmem:[#allocation13 + $0x7b0] sm:$0xff]
        %v1958 = vld [vmem:[#allocation13 + $0x7b8] sm:$0xff]
        %v1959 = vld [vmem:[#allocation13 + $0x7c0] sm:$0xff]
        %v1960 = vld [vmem:[#allocation13 + $0x7c8] sm:$0xff]
        %v1961 = vld [vmem:[#allocation13 + $0x7d0] sm:$0xff]
        %v1962 = vld [vmem:[#allocation13 + $0x7d8] sm:$0xff]
        %v1963 = vld [vmem:[#allocation13 + $0x7e0] sm:$0xff]
        %v1964 = vld [vmem:[#allocation13 + $0x7e8] sm:$0xff]
        %v1965 = vld [vmem:[#allocation13 + $0x7f0] sm:$0xff]
        %v1966 = vld [vmem:[#allocation13 + $0x7f8] sm:$0xff]
        %1967 = vmatpush.msra.mxu0 %v1771
        %1968 = vmatpush.msra.mxu0 %v1767
        %1969 = vmatpush.msra.mxu0 %v1763
        %1970 = vmatpush.msra.mxu0 %v1759
        %1971 = vmatpush.msra.mxu0 %v1755
        %1972 = vmatpush.msra.mxu0 %v1751
        %1973 = vmatpush.msra.mxu0 %v1747
        %1974 = vmatpush.msra.mxu0 %v1743
        %1975 = vmatpush.msra.mxu0 %v1739
        %1976 = vmatpush.msra.mxu0 %v1735
        %1977 = vmatpush.msra.mxu0 %v1731
        %1978 = vmatpush.msra.mxu0 %v1727
        %1979 = vmatpush.msra.mxu0 %v1723
        %1980 = vmatpush.msra.mxu0 %v1719
        %1981 = vmatpush.msra.mxu0 %v1715
        %1982 = vmatpush.msra.mxu0 %v1711
        %1983 = vmatmul.f32.gmra.mxu0 %v1707
        %v1984 = vpop.f32.mrf.mxu0
        %v1985 = vadd.f32 0.0, %v1984
        %1986 = vdwg.mxu0
        %1987 = vmatpush.msra.mxu0 %v1835
        %1988 = vmatpush.msra.mxu0 %v1831
        %1989 = vmatpush.msra.mxu0 %v1827
        %1990 = vmatpush.msra.mxu0 %v1823
        %1991 = vmatpush.msra.mxu0 %v1819
        %1992 = vmatpush.msra.mxu0 %v1815
        %1993 = vmatpush.msra.mxu0 %v1811
        %1994 = vmatpush.msra.mxu0 %v1807
        %1995 = vmatpush.msra.mxu0 %v1803
        %1996 = vmatpush.msra.mxu0 %v1799
        %1997 = vmatpush.msra.mxu0 %v1795
        %1998 = vmatpush.msra.mxu0 %v1791
        %1999 = vmatpush.msra.mxu0 %v1787
        %2000 = vmatpush.msra.mxu0 %v1783
        %2001 = vmatpush.msra.mxu0 %v1779
        %2002 = vmatpush.msra.mxu0 %v1775
        %2003 = vmatmul.f32.gmra.mxu0 %v1708
        %v2004 = vpop.f32.mrf.mxu0
        %v2005 = vadd.f32 %v1985, %v2004
        %2006 = vdwg.mxu0
        %2007 = vmatpush.msra.mxu0 %v1899
        %2008 = vmatpush.msra.mxu0 %v1895
        %2009 = vmatpush.msra.mxu0 %v1891
        %2010 = vmatpush.msra.mxu0 %v1887
        %2011 = vmatpush.msra.mxu0 %v1883
        %2012 = vmatpush.msra.mxu0 %v1879
        %2013 = vmatpush.msra.mxu0 %v1875
        %2014 = vmatpush.msra.mxu0 %v1871
        %2015 = vmatpush.msra.mxu0 %v1867
        %2016 = vmatpush.msra.mxu0 %v1863
        %2017 = vmatpush.msra.mxu0 %v1859
        %2018 = vmatpush.msra.mxu0 %v1855
        %2019 = vmatpush.msra.mxu0 %v1851
        %2020 = vmatpush.msra.mxu0 %v1847
        %2021 = vmatpush.msra.mxu0 %v1843
        %2022 = vmatpush.msra.mxu0 %v1839
        %2023 = vmatmul.f32.gmra.mxu0 %v1709
        %v2024 = vpop.f32.mrf.mxu0
        %v2025 = vadd.f32 %v2005, %v2024
        %2026 = vdwg.mxu0
        %2027 = vmatpush.msra.mxu0 %v1963
        %2028 = vmatpush.msra.mxu0 %v1959
        %2029 = vmatpush.msra.mxu0 %v1955
        %2030 = vmatpush.msra.mxu0 %v1951
        %2031 = vmatpush.msra.mxu0 %v1947
        %2032 = vmatpush.msra.mxu0 %v1943
        %2033 = vmatpush.msra.mxu0 %v1939
        %2034 = vmatpush.msra.mxu0 %v1935
        %2035 = vmatpush.msra.mxu0 %v1931
        %2036 = vmatpush.msra.mxu0 %v1927
        %2037 = vmatpush.msra.mxu0 %v1923
        %2038 = vmatpush.msra.mxu0 %v1919
        %2039 = vmatpush.msra.mxu0 %v1915
        %2040 = vmatpush.msra.mxu0 %v1911
        %2041 = vmatpush.msra.mxu0 %v1907
        %2042 = vmatpush.msra.mxu0 %v1903
        %2043 = vmatmul.f32.gmra.mxu0 %v1710
        %v2044 = vpop.f32.mrf.mxu0
        %v2045 = vadd.f32 %v2025, %v2044
        %2046 = vdwg.mxu0
        %2047 = vmatpush.msra.mxu0 %v1772
        %2048 = vmatpush.msra.mxu0 %v1768
        %2049 = vmatpush.msra.mxu0 %v1764
        %2050 = vmatpush.msra.mxu0 %v1760
        %2051 = vmatpush.msra.mxu0 %v1756
        %2052 = vmatpush.msra.mxu0 %v1752
        %2053 = vmatpush.msra.mxu0 %v1748
        %2054 = vmatpush.msra.mxu0 %v1744
        %2055 = vmatpush.msra.mxu0 %v1740
        %2056 = vmatpush.msra.mxu0 %v1736
        %2057 = vmatpush.msra.mxu0 %v1732
        %2058 = vmatpush.msra.mxu0 %v1728
        %2059 = vmatpush.msra.mxu0 %v1724
        %2060 = vmatpush.msra.mxu0 %v1720
        %2061 = vmatpush.msra.mxu0 %v1716
        %2062 = vmatpush.msra.mxu0 %v1712
        %2063 = vmatmul.f32.gmra.mxu0 %v1707
        %v2064 = vpop.f32.mrf.mxu0
        %v2065 = vadd.f32 0.0, %v2064
        %2066 = vdwg.mxu0
        %2067 = vmatpush.msra.mxu0 %v1836
        %2068 = vmatpush.msra.mxu0 %v1832
        %2069 = vmatpush.msra.mxu0 %v1828
        %2070 = vmatpush.msra.mxu0 %v1824
        %2071 = vmatpush.msra.mxu0 %v1820
        %2072 = vmatpush.msra.mxu0 %v1816
        %2073 = vmatpush.msra.mxu0 %v1812
        %2074 = vmatpush.msra.mxu0 %v1808
        %2075 = vmatpush.msra.mxu0 %v1804
        %2076 = vmatpush.msra.mxu0 %v1800
        %2077 = vmatpush.msra.mxu0 %v1796
        %2078 = vmatpush.msra.mxu0 %v1792
        %2079 = vmatpush.msra.mxu0 %v1788
        %2080 = vmatpush.msra.mxu0 %v1784
        %2081 = vmatpush.msra.mxu0 %v1780
        %2082 = vmatpush.msra.mxu0 %v1776
        %2083 = vmatmul.f32.gmra.mxu0 %v1708
        %v2084 = vpop.f32.mrf.mxu0
        %v2085 = vadd.f32 %v2065, %v2084
        %2086 = vdwg.mxu0
        %2087 = vmatpush.msra.mxu0 %v1900
        %2088 = vmatpush.msra.mxu0 %v1896
        %2089 = vmatpush.msra.mxu0 %v1892
        %2090 = vmatpush.msra.mxu0 %v1888
        %2091 = vmatpush.msra.mxu0 %v1884
        %2092 = vmatpush.msra.mxu0 %v1880
        %2093 = vmatpush.msra.mxu0 %v1876
        %2094 = vmatpush.msra.mxu0 %v1872
        %2095 = vmatpush.msra.mxu0 %v1868
        %2096 = vmatpush.msra.mxu0 %v1864
        %2097 = vmatpush.msra.mxu0 %v1860
        %2098 = vmatpush.msra.mxu0 %v1856
        %2099 = vmatpush.msra.mxu0 %v1852
        %2100 = vmatpush.msra.mxu0 %v1848
        %2101 = vmatpush.msra.mxu0 %v1844
        %2102 = vmatpush.msra.mxu0 %v1840
        %2103 = vmatmul.f32.gmra.mxu0 %v1709
        %v2104 = vpop.f32.mrf.mxu0
        %v2105 = vadd.f32 %v2085, %v2104
        %2106 = vdwg.mxu0
        %2107 = vmatpush.msra.mxu0 %v1964
        %2108 = vmatpush.msra.mxu0 %v1960
        %2109 = vmatpush.msra.mxu0 %v1956
        %2110 = vmatpush.msra.mxu0 %v1952
        %2111 = vmatpush.msra.mxu0 %v1948
        %2112 = vmatpush.msra.mxu0 %v1944
        %2113 = vmatpush.msra.mxu0 %v1940
        %2114 = vmatpush.msra.mxu0 %v1936
        %2115 = vmatpush.msra.mxu0 %v1932
        %2116 = vmatpush.msra.mxu0 %v1928
        %2117 = vmatpush.msra.mxu0 %v1924
        %2118 = vmatpush.msra.mxu0 %v1920
        %2119 = vmatpush.msra.mxu0 %v1916
        %2120 = vmatpush.msra.mxu0 %v1912
        %2121 = vmatpush.msra.mxu0 %v1908
        %2122 = vmatpush.msra.mxu0 %v1904
        %2123 = vmatmul.f32.gmra.mxu0 %v1710
        %v2124 = vpop.f32.mrf.mxu0
        %v2125 = vadd.f32 %v2105, %v2124
        %2126 = vdwg.mxu0
        %2127 = vmatpush.msra.mxu0 %v1773
        %2128 = vmatpush.msra.mxu0 %v1769
        %2129 = vmatpush.msra.mxu0 %v1765
        %2130 = vmatpush.msra.mxu0 %v1761
        %2131 = vmatpush.msra.mxu0 %v1757
        %2132 = vmatpush.msra.mxu0 %v1753
        %2133 = vmatpush.msra.mxu0 %v1749
        %2134 = vmatpush.msra.mxu0 %v1745
        %2135 = vmatpush.msra.mxu0 %v1741
        %2136 = vmatpush.msra.mxu0 %v1737
        %2137 = vmatpush.msra.mxu0 %v1733
        %2138 = vmatpush.msra.mxu0 %v1729
        %2139 = vmatpush.msra.mxu0 %v1725
        %2140 = vmatpush.msra.mxu0 %v1721
        %2141 = vmatpush.msra.mxu0 %v1717
        %2142 = vmatpush.msra.mxu0 %v1713
        %2143 = vmatmul.f32.gmra.mxu0 %v1707
        %v2144 = vpop.f32.mrf.mxu0
        %v2145 = vadd.f32 0.0, %v2144
        %2146 = vdwg.mxu0
        %2147 = vmatpush.msra.mxu0 %v1837
        %2148 = vmatpush.msra.mxu0 %v1833
        %2149 = vmatpush.msra.mxu0 %v1829
        %2150 = vmatpush.msra.mxu0 %v1825
        %2151 = vmatpush.msra.mxu0 %v1821
        %2152 = vmatpush.msra.mxu0 %v1817
        %2153 = vmatpush.msra.mxu0 %v1813
        %2154 = vmatpush.msra.mxu0 %v1809
        %2155 = vmatpush.msra.mxu0 %v1805
        %2156 = vmatpush.msra.mxu0 %v1801
        %2157 = vmatpush.msra.mxu0 %v1797
        %2158 = vmatpush.msra.mxu0 %v1793
        %2159 = vmatpush.msra.mxu0 %v1789
        %2160 = vmatpush.msra.mxu0 %v1785
        %2161 = vmatpush.msra.mxu0 %v1781
        %2162 = vmatpush.msra.mxu0 %v1777
        %2163 = vmatmul.f32.gmra.mxu0 %v1708
        %v2164 = vpop.f32.mrf.mxu0
        %v2165 = vadd.f32 %v2145, %v2164
        %2166 = vdwg.mxu0
        %2167 = vmatpush.msra.mxu0 %v1901
        %2168 = vmatpush.msra.mxu0 %v1897
        %2169 = vmatpush.msra.mxu0 %v1893
        %2170 = vmatpush.msra.mxu0 %v1889
        %2171 = vmatpush.msra.mxu0 %v1885
        %2172 = vmatpush.msra.mxu0 %v1881
        %2173 = vmatpush.msra.mxu0 %v1877
        %2174 = vmatpush.msra.mxu0 %v1873
        %2175 = vmatpush.msra.mxu0 %v1869
        %2176 = vmatpush.msra.mxu0 %v1865
        %2177 = vmatpush.msra.mxu0 %v1861
        %2178 = vmatpush.msra.mxu0 %v1857
        %2179 = vmatpush.msra.mxu0 %v1853
        %2180 = vmatpush.msra.mxu0 %v1849
        %2181 = vmatpush.msra.mxu0 %v1845
        %2182 = vmatpush.msra.mxu0 %v1841
        %2183 = vmatmul.f32.gmra.mxu0 %v1709
        %v2184 = vpop.f32.mrf.mxu0
        %v2185 = vadd.f32 %v2165, %v2184
        %2186 = vdwg.mxu0
        %2187 = vmatpush.msra.mxu0 %v1965
        %2188 = vmatpush.msra.mxu0 %v1961
        %2189 = vmatpush.msra.mxu0 %v1957
        %2190 = vmatpush.msra.mxu0 %v1953
        %2191 = vmatpush.msra.mxu0 %v1949
        %2192 = vmatpush.msra.mxu0 %v1945
        %2193 = vmatpush.msra.mxu0 %v1941
        %2194 = vmatpush.msra.mxu0 %v1937
        %2195 = vmatpush.msra.mxu0 %v1933
        %2196 = vmatpush.msra.mxu0 %v1929
        %2197 = vmatpush.msra.mxu0 %v1925
        %2198 = vmatpush.msra.mxu0 %v1921
        %2199 = vmatpush.msra.mxu0 %v1917
        %2200 = vmatpush.msra.mxu0 %v1913
        %2201 = vmatpush.msra.mxu0 %v1909
        %2202 = vmatpush.msra.mxu0 %v1905
        %2203 = vmatmul.f32.gmra.mxu0 %v1710
        %v2204 = vpop.f32.mrf.mxu0
        %v2205 = vadd.f32 %v2185, %v2204
        %2206 = vdwg.mxu0
        %2207 = vmatpush.msra.mxu0 %v1774
        %2208 = vmatpush.msra.mxu0 %v1770
        %2209 = vmatpush.msra.mxu0 %v1766
        %2210 = vmatpush.msra.mxu0 %v1762
        %2211 = vmatpush.msra.mxu0 %v1758
        %2212 = vmatpush.msra.mxu0 %v1754
        %2213 = vmatpush.msra.mxu0 %v1750
        %2214 = vmatpush.msra.mxu0 %v1746
        %2215 = vmatpush.msra.mxu0 %v1742
        %2216 = vmatpush.msra.mxu0 %v1738
        %2217 = vmatpush.msra.mxu0 %v1734
        %2218 = vmatpush.msra.mxu0 %v1730
        %2219 = vmatpush.msra.mxu0 %v1726
        %2220 = vmatpush.msra.mxu0 %v1722
        %2221 = vmatpush.msra.mxu0 %v1718
        %2222 = vmatpush.msra.mxu0 %v1714
        %2223 = vmatmul.f32.gmra.mxu0 %v1707
        %v2224 = vpop.f32.mrf.mxu0
        %v2225 = vadd.f32 0.0, %v2224
        %2226 = vdwg.mxu0
        %2227 = vmatpush.msra.mxu0 %v1838
        %2228 = vmatpush.msra.mxu0 %v1834
        %2229 = vmatpush.msra.mxu0 %v1830
        %2230 = vmatpush.msra.mxu0 %v1826
        %2231 = vmatpush.msra.mxu0 %v1822
        %2232 = vmatpush.msra.mxu0 %v1818
        %2233 = vmatpush.msra.mxu0 %v1814
        %2234 = vmatpush.msra.mxu0 %v1810
        %2235 = vmatpush.msra.mxu0 %v1806
        %2236 = vmatpush.msra.mxu0 %v1802
        %2237 = vmatpush.msra.mxu0 %v1798
        %2238 = vmatpush.msra.mxu0 %v1794
        %2239 = vmatpush.msra.mxu0 %v1790
        %2240 = vmatpush.msra.mxu0 %v1786
        %2241 = vmatpush.msra.mxu0 %v1782
        %2242 = vmatpush.msra.mxu0 %v1778
        %2243 = vmatmul.f32.gmra.mxu0 %v1708
        %v2244 = vpop.f32.mrf.mxu0
        %v2245 = vadd.f32 %v2225, %v2244
        %2246 = vdwg.mxu0
        %2247 = vmatpush.msra.mxu0 %v1902
        %2248 = vmatpush.msra.mxu0 %v1898
        %2249 = vmatpush.msra.mxu0 %v1894
        %2250 = vmatpush.msra.mxu0 %v1890
        %2251 = vmatpush.msra.mxu0 %v1886
        %2252 = vmatpush.msra.mxu0 %v1882
        %2253 = vmatpush.msra.mxu0 %v1878
        %2254 = vmatpush.msra.mxu0 %v1874
        %2255 = vmatpush.msra.mxu0 %v1870
        %2256 = vmatpush.msra.mxu0 %v1866
        %2257 = vmatpush.msra.mxu0 %v1862
        %2258 = vmatpush.msra.mxu0 %v1858
        %2259 = vmatpush.msra.mxu0 %v1854
        %2260 = vmatpush.msra.mxu0 %v1850
        %2261 = vmatpush.msra.mxu0 %v1846
        %2262 = vmatpush.msra.mxu0 %v1842
        %2263 = vmatmul.f32.gmra.mxu0 %v1709
        %v2264 = vpop.f32.mrf.mxu0
        %v2265 = vadd.f32 %v2245, %v2264
        %2266 = vdwg.mxu0
        %2267 = vmatpush.msra.mxu0 %v1966
        %2268 = vmatpush.msra.mxu0 %v1962
        %2269 = vmatpush.msra.mxu0 %v1958
        %2270 = vmatpush.msra.mxu0 %v1954
        %2271 = vmatpush.msra.mxu0 %v1950
        %2272 = vmatpush.msra.mxu0 %v1946
        %2273 = vmatpush.msra.mxu0 %v1942
        %2274 = vmatpush.msra.mxu0 %v1938
        %2275 = vmatpush.msra.mxu0 %v1934
        %2276 = vmatpush.msra.mxu0 %v1930
        %2277 = vmatpush.msra.mxu0 %v1926
        %2278 = vmatpush.msra.mxu0 %v1922
        %2279 = vmatpush.msra.mxu0 %v1918
        %2280 = vmatpush.msra.mxu0 %v1914
        %2281 = vmatpush.msra.mxu0 %v1910
        %2282 = vmatpush.msra.mxu0 %v1906
        %2283 = vmatmul.f32.gmra.mxu0 %v1710
        %v2284 = vpop.f32.mrf.mxu0
        %v2285 = vadd.f32 %v2265, %v2284
        %2286 = vdwg.mxu0
        %vm2287 = vcmask 523264
        %v2289 = vsel %vm2287, %v885, 0
        %v2292 = vsel %vm2287, %v1465, 0
        %2294 = vmatpush.xpose.msra.mxu0 0.0
        %2295 = vmatpush.xpose.msra.mxu0 0.0
        %2296 = vmatpush.xpose.msra.mxu0 0.0
        %2297 = vmatpush.xpose.msra.mxu0 0.0
        %2298 = vmatpush.xpose.msra.mxu0 0.0
        %2299 = vmatpush.xpose.msra.mxu0 0.0
        %2300 = vmatpush.xpose.msra.mxu0 0.0
        %2301 = vmatpush.xpose.msra.mxu0 0.0
        %2302 = vmatpush.xpose.msra.mxu0 0.0
        %2303 = vmatpush.xpose.msra.mxu0 0.0
        %2304 = vmatpush.xpose.msra.mxu0 0.0
        %2305 = vmatpush.xpose.msra.mxu0 0.0
        %2306 = vmatpush.xpose.msra.mxu0 0.0
        %2307 = vmatpush.xpose.msra.mxu0 0.0
        %2308 = vmatpush.xpose.msra.mxu0 0.0
        %2309 = vmatpush.xpose.msra.mxu0 %v2292
        %2310 = vmatmul.f32.gmra.mxu0 %v2289
        %v2311 = vpop.f32.mrf.mxu0
        %v2312 = vadd.f32 0.0, %v2311
        %2313 = vdwg.mxu0
        %v2314 = vmul.f32 %v2312, 0.125
        %vm2315 = vnez %v550
        %v2316 = vsel %vm2315, 16843009, 0
        %v2317 = vunpack.c.0.s8 %v2316
        %vm2318 = vcmp.ne.s32.totalorder %v2317, 0
        %v2319 = vsel %vm2318, -1e+09, %v2314
        %vm2320 = vcmask 64512
        %v2321 = vsel %vm2320, %v2319, -inf
        %2322 = vmax.xlane.f32.xlu0 %v2321
        %v2323 = vpop.xlane.xlu0 %2322
        %v2324 = vsub.f32 %v2319, %v2323
        %v2325 = vmul.f32 %v2324, 1.442695
        %v2326 = vpow.pop %v2325
        %v2327 = vsel %vm2320, %v2326, 0.0
        %2328 = vadd.xlane.f32.xlu0 %v2327
        %v2329 = vpop.xlane.xlu0 %2328
        %v2330 = vrcp.pop %v2329
        %v2331 = vmul.f32 %v2329, %v2330
        %v2332 = vsub.f32 1.0, %v2331
        %v2333 = vmul.f32 %v2330, %v2332
        %v2334 = vadd.f32 %v2330, %v2333
        %vm2335 = vweird.f32 %v2329
        %vm2336 = vweird.f32 %v2330
        %vm2337 = vmor %vm2335, %vm2336
        %v2338 = vsel %vm2337, %v2330, %v2334
        %v2339 = vand.u32 2147483647, %v2329
        %vm2340 = vcmp.eq.f32.partialorder %v2339, 8.507059e+37
        %v2341 = vand.u32 %v2329, 2147483648
        %v2342 = vor.u32 1.1754944e-38, %v2341
        %v2343 = vsel %vm2340, %v2342, %v2338
        %v2344 = vmul.f32 %v2326, %v2343
        %2345 = vst.msk [vmem:[%s543] sm:$0xff] %vm2320, %v2344
        %v2347 = vsel %vm2320, %v2344, 0
        %2349 = vmatpush.msra.mxu0 0.0
        %2350 = vmatpush.msra.mxu0 0.0
        %2351 = vmatpush.msra.mxu0 0.0
        %2352 = vmatpush.msra.mxu0 0.0
        %2353 = vmatpush.msra.mxu0 0.0
        %2354 = vmatpush.msra.mxu0 0.0
        %2355 = vmatpush.msra.mxu0 0.0
        %2356 = vmatpush.msra.mxu0 0.0
        %2357 = vmatpush.msra.mxu0 0.0
        %2358 = vmatpush.msra.mxu0 0.0
        %2359 = vmatpush.msra.mxu0 0.0
        %2360 = vmatpush.msra.mxu0 0.0
        %2361 = vmatpush.msra.mxu0 0.0
        %2362 = vmatpush.msra.mxu0 0.0
        %2363 = vmatpush.msra.mxu0 0.0
        %2364 = vmatpush.msra.mxu0 %v2045
        %2365 = vmatmul.f32.gmra.mxu0 %v2347
        %v2366 = vpop.f32.mrf.mxu0
        %v2367 = vadd.f32 0.0, %v2366
        %2368 = vdwg.mxu0
        %v2369 = vld [vmem:[#allocation14] sm:$0xff]
        %v2370 = vld [vmem:[#allocation14 + $0x8] sm:$0xff]
        %v2371 = vld [vmem:[#allocation14 + $0x10] sm:$0xff]
        %v2372 = vld [vmem:[#allocation14 + $0x18] sm:$0xff]
        %v2373 = vld [vmem:[#allocation14 + $0x20] sm:$0xff]
        %v2374 = vld [vmem:[#allocation14 + $0x28] sm:$0xff]
        %v2375 = vld [vmem:[#allocation14 + $0x30] sm:$0xff]
        %v2376 = vld [vmem:[#allocation14 + $0x38] sm:$0xff]
        %v2377 = vld [vmem:[#allocation14 + $0x40] sm:$0xff]
        %v2378 = vld [vmem:[#allocation14 + $0x48] sm:$0xff]
        %v2379 = vld [vmem:[#allocation14 + $0x50] sm:$0xff]
        %v2380 = vld [vmem:[#allocation14 + $0x58] sm:$0xff]
        %v2381 = vld [vmem:[#allocation14 + $0x60] sm:$0xff]
        %v2382 = vld [vmem:[#allocation14 + $0x68] sm:$0xff]
        %v2383 = vld [vmem:[#allocation14 + $0x70] sm:$0xff]
        %v2384 = vld [vmem:[#allocation14 + $0x78] sm:$0xff]
        %v2385 = vld [vmem:[#allocation14 + $0x80] sm:$0xff]
        %v2386 = vld [vmem:[#allocation14 + $0x88] sm:$0xff]
        %v2387 = vld [vmem:[#allocation14 + $0x90] sm:$0xff]
        %v2388 = vld [vmem:[#allocation14 + $0x98] sm:$0xff]
        %v2389 = vld [vmem:[#allocation14 + $0xa0] sm:$0xff]
        %v2390 = vld [vmem:[#allocation14 + $0xa8] sm:$0xff]
        %v2391 = vld [vmem:[#allocation14 + $0xb0] sm:$0xff]
        %v2392 = vld [vmem:[#allocation14 + $0xb8] sm:$0xff]
        %v2393 = vld [vmem:[#allocation14 + $0xc0] sm:$0xff]
        %v2394 = vld [vmem:[#allocation14 + $0xc8] sm:$0xff]
        %v2395 = vld [vmem:[#allocation14 + $0xd0] sm:$0xff]
        %v2396 = vld [vmem:[#allocation14 + $0xd8] sm:$0xff]
        %v2397 = vld [vmem:[#allocation14 + $0xe0] sm:$0xff]
        %v2398 = vld [vmem:[#allocation14 + $0xe8] sm:$0xff]
        %v2399 = vld [vmem:[#allocation14 + $0xf0] sm:$0xff]
        %v2400 = vld [vmem:[#allocation14 + $0xf8] sm:$0xff]
        %v2402 = vsel %vm2287, %v2367, 0
        %2404 = vmatpush.msra.mxu0 0.0
        %2405 = vmatpush.msra.mxu0 0.0
        %2406 = vmatpush.msra.mxu0 0.0
        %2407 = vmatpush.msra.mxu0 0.0
        %2408 = vmatpush.msra.mxu0 0.0
        %2409 = vmatpush.msra.mxu0 0.0
        %2410 = vmatpush.msra.mxu0 0.0
        %2411 = vmatpush.msra.mxu0 0.0
        %2412 = vmatpush.msra.mxu0 %v2397
        %2413 = vmatpush.msra.mxu0 %v2393
        %2414 = vmatpush.msra.mxu0 %v2389
        %2415 = vmatpush.msra.mxu0 %v2385
        %2416 = vmatpush.msra.mxu0 %v2381
        %2417 = vmatpush.msra.mxu0 %v2377
        %2418 = vmatpush.msra.mxu0 %v2373
        %2419 = vmatpush.msra.mxu0 %v2369
        %2420 = vmatmul.f32.gmra.mxu0 %v2402
        %v2421 = vpop.f32.mrf.mxu0
        %v2422 = vadd.f32 0.0, %v2421
        %2423 = vdwg.mxu0
        %2424 = vmatpush.msra.mxu0 0.0
        %2425 = vmatpush.msra.mxu0 0.0
        %2426 = vmatpush.msra.mxu0 0.0
        %2427 = vmatpush.msra.mxu0 0.0
        %2428 = vmatpush.msra.mxu0 0.0
        %2429 = vmatpush.msra.mxu0 0.0
        %2430 = vmatpush.msra.mxu0 0.0
        %2431 = vmatpush.msra.mxu0 0.0
        %2432 = vmatpush.msra.mxu0 %v2398
        %2433 = vmatpush.msra.mxu0 %v2394
        %2434 = vmatpush.msra.mxu0 %v2390
        %2435 = vmatpush.msra.mxu0 %v2386
        %2436 = vmatpush.msra.mxu0 %v2382
        %2437 = vmatpush.msra.mxu0 %v2378
        %2438 = vmatpush.msra.mxu0 %v2374
        %2439 = vmatpush.msra.mxu0 %v2370
        %2440 = vmatmul.f32.gmra.mxu0 %v2402
        %v2441 = vpop.f32.mrf.mxu0
        %v2442 = vadd.f32 0.0, %v2441
        %2443 = vdwg.mxu0
        %2444 = vmatpush.msra.mxu0 0.0
        %2445 = vmatpush.msra.mxu0 0.0
        %2446 = vmatpush.msra.mxu0 0.0
        %2447 = vmatpush.msra.mxu0 0.0
        %2448 = vmatpush.msra.mxu0 0.0
        %2449 = vmatpush.msra.mxu0 0.0
        %2450 = vmatpush.msra.mxu0 0.0
        %2451 = vmatpush.msra.mxu0 0.0
        %2452 = vmatpush.msra.mxu0 %v2399
        %2453 = vmatpush.msra.mxu0 %v2395
        %2454 = vmatpush.msra.mxu0 %v2391
        %2455 = vmatpush.msra.mxu0 %v2387
        %2456 = vmatpush.msra.mxu0 %v2383
        %2457 = vmatpush.msra.mxu0 %v2379
        %2458 = vmatpush.msra.mxu0 %v2375
        %2459 = vmatpush.msra.mxu0 %v2371
        %2460 = vmatmul.f32.gmra.mxu0 %v2402
        %v2461 = vpop.f32.mrf.mxu0
        %v2462 = vadd.f32 0.0, %v2461
        %2463 = vdwg.mxu0
        %2464 = vmatpush.msra.mxu0 0.0
        %2465 = vmatpush.msra.mxu0 0.0
        %2466 = vmatpush.msra.mxu0 0.0
        %2467 = vmatpush.msra.mxu0 0.0
        %2468 = vmatpush.msra.mxu0 0.0
        %2469 = vmatpush.msra.mxu0 0.0
        %2470 = vmatpush.msra.mxu0 0.0
        %2471 = vmatpush.msra.mxu0 0.0
        %2472 = vmatpush.msra.mxu0 %v2400
        %2473 = vmatpush.msra.mxu0 %v2396
        %2474 = vmatpush.msra.mxu0 %v2392
        %2475 = vmatpush.msra.mxu0 %v2388
        %2476 = vmatpush.msra.mxu0 %v2384
        %2477 = vmatpush.msra.mxu0 %v2380
        %2478 = vmatpush.msra.mxu0 %v2376
        %2479 = vmatpush.msra.mxu0 %v2372
        %2480 = vmatmul.f32.gmra.mxu0 %v2402
        %v2481 = vpop.f32.mrf.mxu0
        %v2482 = vadd.f32 0.0, %v2481
        %2483 = vdwg.mxu0
        %v2484 = vadd.f32 %v546, %v2422
        %v2485 = vadd.f32 %v547, %v2442
        %v2486 = vadd.f32 %v548, %v2462
        %v2487 = vadd.f32 %v549, %v2482
        %2488 = vrot.lane.b32.xlu0 %v885, 64
        %v2489 = vpop.permute.xlu0 %2488
        %2490 = vrot.lane.b32.xlu0 %v1465, 64
        %v2491 = vpop.permute.xlu0 %2490
        %v2492 = vsel %vm2287, %v2489, 0
        %v2494 = vsel %vm2287, %v2491, 0
        %2496 = vmatpush.xpose.msra.mxu0 0.0
        %2497 = vmatpush.xpose.msra.mxu0 0.0
        %2498 = vmatpush.xpose.msra.mxu0 0.0
        %2499 = vmatpush.xpose.msra.mxu0 0.0
        %2500 = vmatpush.xpose.msra.mxu0 0.0
        %2501 = vmatpush.xpose.msra.mxu0 0.0
        %2502 = vmatpush.xpose.msra.mxu0 0.0
        %2503 = vmatpush.xpose.msra.mxu0 0.0
        %2504 = vmatpush.xpose.msra.mxu0 0.0
        %2505 = vmatpush.xpose.msra.mxu0 0.0
        %2506 = vmatpush.xpose.msra.mxu0 0.0
        %2507 = vmatpush.xpose.msra.mxu0 0.0
        %2508 = vmatpush.xpose.msra.mxu0 0.0
        %2509 = vmatpush.xpose.msra.mxu0 0.0
        %2510 = vmatpush.xpose.msra.mxu0 0.0
        %2511 = vmatpush.xpose.msra.mxu0 %v2494
        %2512 = vmatmul.f32.gmra.mxu0 %v2492
        %v2513 = vpop.f32.mrf.mxu0
        %v2514 = vadd.f32 0.0, %v2513
        %2515 = vdwg.mxu0
        %v2516 = vmul.f32 %v2514, 0.125
        %v2517 = vsel %vm2318, -1e+09, %v2516
        %v2518 = vsel %vm2320, %v2517, -inf
        %2519 = vmax.xlane.f32.xlu0 %v2518
        %v2520 = vpop.xlane.xlu0 %2519
        %v2521 = vsub.f32 %v2517, %v2520
        %v2522 = vmul.f32 %v2521, 1.442695
        %v2523 = vpow.pop %v2522
        %v2524 = vsel %vm2320, %v2523, 0.0
        %2525 = vadd.xlane.f32.xlu0 %v2524
        %v2526 = vpop.xlane.xlu0 %2525
        %v2527 = vrcp.pop %v2526
        %v2528 = vmul.f32 %v2526, %v2527
        %v2529 = vsub.f32 1.0, %v2528
        %v2530 = vmul.f32 %v2527, %v2529
        %v2531 = vadd.f32 %v2527, %v2530
        %vm2532 = vweird.f32 %v2526
        %vm2533 = vweird.f32 %v2527
        %vm2534 = vmor %vm2532, %vm2533
        %v2535 = vsel %vm2534, %v2527, %v2531
        %v2536 = vand.u32 2147483647, %v2526
        %vm2537 = vcmp.eq.f32.partialorder %v2536, 8.507059e+37
        %v2538 = vand.u32 %v2526, 2147483648
        %v2539 = vor.u32 1.1754944e-38, %v2538
        %v2540 = vsel %vm2537, %v2539, %v2535
        %v2541 = vmul.f32 %v2523, %v2540
        %s2542 = scalar_lea.vmem %s543, 8 [#allocation17]
        %2543 = vst.msk [vmem:[%s2542] sm:$0xff] %vm2320, %v2541
        %2545 = vrot.lane.b32.xlu0 %v2045, 64
        %v2546 = vpop.permute.xlu0 %2545
        %v2549 = vsel %vm2320, %v2541, 0
        %2551 = vmatpush.msra.mxu0 0.0
        %2552 = vmatpush.msra.mxu0 0.0
        %2553 = vmatpush.msra.mxu0 0.0
        %2554 = vmatpush.msra.mxu0 0.0
        %2555 = vmatpush.msra.mxu0 0.0
        %2556 = vmatpush.msra.mxu0 0.0
        %2557 = vmatpush.msra.mxu0 0.0
        %2558 = vmatpush.msra.mxu0 0.0
        %2559 = vmatpush.msra.mxu0 0.0
        %2560 = vmatpush.msra.mxu0 0.0
        %2561 = vmatpush.msra.mxu0 0.0
        %2562 = vmatpush.msra.mxu0 0.0
        %2563 = vmatpush.msra.mxu0 0.0
        %2564 = vmatpush.msra.mxu0 0.0
        %2565 = vmatpush.msra.mxu0 0.0
        %2566 = vmatpush.msra.mxu0 %v2546
        %2567 = vmatmul.f32.gmra.mxu0 %v2549
        %v2568 = vpop.f32.mrf.mxu0
        %v2569 = vadd.f32 0.0, %v2568
        %2570 = vdwg.mxu0
        %v2571 = vld [vmem:[#allocation14 + $0x100] sm:$0xff]
        %v2572 = vld [vmem:[#allocation14 + $0x108] sm:$0xff]
        %v2573 = vld [vmem:[#allocation14 + $0x110] sm:$0xff]
        %v2574 = vld [vmem:[#allocation14 + $0x118] sm:$0xff]
        %v2575 = vld [vmem:[#allocation14 + $0x120] sm:$0xff]
        %v2576 = vld [vmem:[#allocation14 + $0x128] sm:$0xff]
        %v2577 = vld [vmem:[#allocation14 + $0x130] sm:$0xff]
        %v2578 = vld [vmem:[#allocation14 + $0x138] sm:$0xff]
        %v2579 = vld [vmem:[#allocation14 + $0x140] sm:$0xff]
        %v2580 = vld [vmem:[#allocation14 + $0x148] sm:$0xff]
        %v2581 = vld [vmem:[#allocation14 + $0x150] sm:$0xff]
        %v2582 = vld [vmem:[#allocation14 + $0x158] sm:$0xff]
        %v2583 = vld [vmem:[#allocation14 + $0x160] sm:$0xff]
        %v2584 = vld [vmem:[#allocation14 + $0x168] sm:$0xff]
        %v2585 = vld [vmem:[#allocation14 + $0x170] sm:$0xff]
        %v2586 = vld [vmem:[#allocation14 + $0x178] sm:$0xff]
        %v2587 = vld [vmem:[#allocation14 + $0x180] sm:$0xff]
        %v2588 = vld [vmem:[#allocation14 + $0x188] sm:$0xff]
        %v2589 = vld [vmem:[#allocation14 + $0x190] sm:$0xff]
        %v2590 = vld [vmem:[#allocation14 + $0x198] sm:$0xff]
        %v2591 = vld [vmem:[#allocation14 + $0x1a0] sm:$0xff]
        %v2592 = vld [vmem:[#allocation14 + $0x1a8] sm:$0xff]
        %v2593 = vld [vmem:[#allocation14 + $0x1b0] sm:$0xff]
        %v2594 = vld [vmem:[#allocation14 + $0x1b8] sm:$0xff]
        %v2595 = vld [vmem:[#allocation14 + $0x1c0] sm:$0xff]
        %v2596 = vld [vmem:[#allocation14 + $0x1c8] sm:$0xff]
        %v2597 = vld [vmem:[#allocation14 + $0x1d0] sm:$0xff]
        %v2598 = vld [vmem:[#allocation14 + $0x1d8] sm:$0xff]
        %v2599 = vld [vmem:[#allocation14 + $0x1e0] sm:$0xff]
        %v2600 = vld [vmem:[#allocation14 + $0x1e8] sm:$0xff]
        %v2601 = vld [vmem:[#allocation14 + $0x1f0] sm:$0xff]
        %v2602 = vld [vmem:[#allocation14 + $0x1f8] sm:$0xff]
        %v2604 = vsel %vm2287, %v2569, 0
        %2606 = vmatpush.msra.mxu0 0.0
        %2607 = vmatpush.msra.mxu0 0.0
        %2608 = vmatpush.msra.mxu0 0.0
        %2609 = vmatpush.msra.mxu0 0.0
        %2610 = vmatpush.msra.mxu0 0.0
        %2611 = vmatpush.msra.mxu0 0.0
        %2612 = vmatpush.msra.mxu0 0.0
        %2613 = vmatpush.msra.mxu0 0.0
        %2614 = vmatpush.msra.mxu0 %v2599
        %2615 = vmatpush.msra.mxu0 %v2595
        %2616 = vmatpush.msra.mxu0 %v2591
        %2617 = vmatpush.msra.mxu0 %v2587
        %2618 = vmatpush.msra.mxu0 %v2583
        %2619 = vmatpush.msra.mxu0 %v2579
        %2620 = vmatpush.msra.mxu0 %v2575
        %2621 = vmatpush.msra.mxu0 %v2571
        %2622 = vmatmul.f32.gmra.mxu0 %v2604
        %v2623 = vpop.f32.mrf.mxu0
        %v2624 = vadd.f32 0.0, %v2623
        %2625 = vdwg.mxu0
        %2626 = vmatpush.msra.mxu0 0.0
        %2627 = vmatpush.msra.mxu0 0.0
        %2628 = vmatpush.msra.mxu0 0.0
        %2629 = vmatpush.msra.mxu0 0.0
        %2630 = vmatpush.msra.mxu0 0.0
        %2631 = vmatpush.msra.mxu0 0.0
        %2632 = vmatpush.msra.mxu0 0.0
        %2633 = vmatpush.msra.mxu0 0.0
        %2634 = vmatpush.msra.mxu0 %v2600
        %2635 = vmatpush.msra.mxu0 %v2596
        %2636 = vmatpush.msra.mxu0 %v2592
        %2637 = vmatpush.msra.mxu0 %v2588
        %2638 = vmatpush.msra.mxu0 %v2584
        %2639 = vmatpush.msra.mxu0 %v2580
        %2640 = vmatpush.msra.mxu0 %v2576
        %2641 = vmatpush.msra.mxu0 %v2572
        %2642 = vmatmul.f32.gmra.mxu0 %v2604
        %v2643 = vpop.f32.mrf.mxu0
        %v2644 = vadd.f32 0.0, %v2643
        %2645 = vdwg.mxu0
        %2646 = vmatpush.msra.mxu0 0.0
        %2647 = vmatpush.msra.mxu0 0.0
        %2648 = vmatpush.msra.mxu0 0.0
        %2649 = vmatpush.msra.mxu0 0.0
        %2650 = vmatpush.msra.mxu0 0.0
        %2651 = vmatpush.msra.mxu0 0.0
        %2652 = vmatpush.msra.mxu0 0.0
        %2653 = vmatpush.msra.mxu0 0.0
        %2654 = vmatpush.msra.mxu0 %v2601
        %2655 = vmatpush.msra.mxu0 %v2597
        %2656 = vmatpush.msra.mxu0 %v2593
        %2657 = vmatpush.msra.mxu0 %v2589
        %2658 = vmatpush.msra.mxu0 %v2585
        %2659 = vmatpush.msra.mxu0 %v2581
        %2660 = vmatpush.msra.mxu0 %v2577
        %2661 = vmatpush.msra.mxu0 %v2573
        %2662 = vmatmul.f32.gmra.mxu0 %v2604
        %v2663 = vpop.f32.mrf.mxu0
        %v2664 = vadd.f32 0.0, %v2663
        %2665 = vdwg.mxu0
        %2666 = vmatpush.msra.mxu0 0.0
        %2667 = vmatpush.msra.mxu0 0.0
        %2668 = vmatpush.msra.mxu0 0.0
        %2669 = vmatpush.msra.mxu0 0.0
        %2670 = vmatpush.msra.mxu0 0.0
        %2671 = vmatpush.msra.mxu0 0.0
        %2672 = vmatpush.msra.mxu0 0.0
        %2673 = vmatpush.msra.mxu0 0.0
        %2674 = vmatpush.msra.mxu0 %v2602
        %2675 = vmatpush.msra.mxu0 %v2598
        %2676 = vmatpush.msra.mxu0 %v2594
        %2677 = vmatpush.msra.mxu0 %v2590
        %2678 = vmatpush.msra.mxu0 %v2586
        %2679 = vmatpush.msra.mxu0 %v2582
        %2680 = vmatpush.msra.mxu0 %v2578
        %2681 = vmatpush.msra.mxu0 %v2574
        %2682 = vmatmul.f32.gmra.mxu0 %v2604
        %v2683 = vpop.f32.mrf.mxu0
        %v2684 = vadd.f32 0.0, %v2683
        %2685 = vdwg.mxu0
        %v2686 = vadd.f32 %v2484, %v2624
        %v2687 = vadd.f32 %v2485, %v2644
        %v2688 = vadd.f32 %v2486, %v2664
        %v2689 = vadd.f32 %v2487, %v2684
        %v2691 = vsel %vm2287, %v965, 0
        %v2694 = vsel %vm2287, %v1545, 0
        %2696 = vmatpush.xpose.msra.mxu0 0.0
        %2697 = vmatpush.xpose.msra.mxu0 0.0
        %2698 = vmatpush.xpose.msra.mxu0 0.0
        %2699 = vmatpush.xpose.msra.mxu0 0.0
        %2700 = vmatpush.xpose.msra.mxu0 0.0
        %2701 = vmatpush.xpose.msra.mxu0 0.0
        %2702 = vmatpush.xpose.msra.mxu0 0.0
        %2703 = vmatpush.xpose.msra.mxu0 0.0
        %2704 = vmatpush.xpose.msra.mxu0 0.0
        %2705 = vmatpush.xpose.msra.mxu0 0.0
        %2706 = vmatpush.xpose.msra.mxu0 0.0
        %2707 = vmatpush.xpose.msra.mxu0 0.0
        %2708 = vmatpush.xpose.msra.mxu0 0.0
        %2709 = vmatpush.xpose.msra.mxu0 0.0
        %2710 = vmatpush.xpose.msra.mxu0 0.0
        %2711 = vmatpush.xpose.msra.mxu0 %v2694
        %2712 = vmatmul.f32.gmra.mxu0 %v2691
        %v2713 = vpop.f32.mrf.mxu0
        %v2714 = vadd.f32 0.0, %v2713
        %2715 = vdwg.mxu0
        %v2716 = vmul.f32 %v2714, 0.125
        %v2717 = vsel %vm2318, -1e+09, %v2716
        %v2718 = vsel %vm2320, %v2717, -inf
        %2719 = vmax.xlane.f32.xlu0 %v2718
        %v2720 = vpop.xlane.xlu0 %2719
        %v2721 = vsub.f32 %v2717, %v2720
        %v2722 = vmul.f32 %v2721, 1.442695
        %v2723 = vpow.pop %v2722
        %v2724 = vsel %vm2320, %v2723, 0.0
        %2725 = vadd.xlane.f32.xlu0 %v2724
        %v2726 = vpop.xlane.xlu0 %2725
        %v2727 = vrcp.pop %v2726
        %v2728 = vmul.f32 %v2726, %v2727
        %v2729 = vsub.f32 1.0, %v2728
        %v2730 = vmul.f32 %v2727, %v2729
        %v2731 = vadd.f32 %v2727, %v2730
        %vm2732 = vweird.f32 %v2726
        %vm2733 = vweird.f32 %v2727
        %vm2734 = vmor %vm2732, %vm2733
        %v2735 = vsel %vm2734, %v2727, %v2731
        %v2736 = vand.u32 2147483647, %v2726
        %vm2737 = vcmp.eq.f32.partialorder %v2736, 8.507059e+37
        %v2738 = vand.u32 %v2726, 2147483648
        %v2739 = vor.u32 1.1754944e-38, %v2738
        %v2740 = vsel %vm2737, %v2739, %v2735
        %v2741 = vmul.f32 %v2723, %v2740
        %s2742 = scalar_lea.vmem %s543, 16 [#allocation17]
        %2743 = vst.msk [vmem:[%s2742] sm:$0xff] %vm2320, %v2741
        %v2745 = vsel %vm2320, %v2741, 0
        %2747 = vmatpush.msra.mxu0 0.0
        %2748 = vmatpush.msra.mxu0 0.0
        %2749 = vmatpush.msra.mxu0 0.0
        %2750 = vmatpush.msra.mxu0 0.0
        %2751 = vmatpush.msra.mxu0 0.0
        %2752 = vmatpush.msra.mxu0 0.0
        %2753 = vmatpush.msra.mxu0 0.0
        %2754 = vmatpush.msra.mxu0 0.0
        %2755 = vmatpush.msra.mxu0 0.0
        %2756 = vmatpush.msra.mxu0 0.0
        %2757 = vmatpush.msra.mxu0 0.0
        %2758 = vmatpush.msra.mxu0 0.0
        %2759 = vmatpush.msra.mxu0 0.0
        %2760 = vmatpush.msra.mxu0 0.0
        %2761 = vmatpush.msra.mxu0 0.0
        %2762 = vmatpush.msra.mxu0 %v2125
        %2763 = vmatmul.f32.gmra.mxu0 %v2745
        %v2764 = vpop.f32.mrf.mxu0
        %v2765 = vadd.f32 0.0, %v2764
        %2766 = vdwg.mxu0
        %v2767 = vld [vmem:[#allocation14 + $0x200] sm:$0xff]
        %v2768 = vld [vmem:[#allocation14 + $0x208] sm:$0xff]
        %v2769 = vld [vmem:[#allocation14 + $0x210] sm:$0xff]
        %v2770 = vld [vmem:[#allocation14 + $0x218] sm:$0xff]
        %v2771 = vld [vmem:[#allocation14 + $0x220] sm:$0xff]
        %v2772 = vld [vmem:[#allocation14 + $0x228] sm:$0xff]
        %v2773 = vld [vmem:[#allocation14 + $0x230] sm:$0xff]
        %v2774 = vld [vmem:[#allocation14 + $0x238] sm:$0xff]
        %v2775 = vld [vmem:[#allocation14 + $0x240] sm:$0xff]
        %v2776 = vld [vmem:[#allocation14 + $0x248] sm:$0xff]
        %v2777 = vld [vmem:[#allocation14 + $0x250] sm:$0xff]
        %v2778 = vld [vmem:[#allocation14 + $0x258] sm:$0xff]
        %v2779 = vld [vmem:[#allocation14 + $0x260] sm:$0xff]
        %v2780 = vld [vmem:[#allocation14 + $0x268] sm:$0xff]
        %v2781 = vld [vmem:[#allocation14 + $0x270] sm:$0xff]
        %v2782 = vld [vmem:[#allocation14 + $0x278] sm:$0xff]
        %v2783 = vld [vmem:[#allocation14 + $0x280] sm:$0xff]
        %v2784 = vld [vmem:[#allocation14 + $0x288] sm:$0xff]
        %v2785 = vld [vmem:[#allocation14 + $0x290] sm:$0xff]
        %v2786 = vld [vmem:[#allocation14 + $0x298] sm:$0xff]
        %v2787 = vld [vmem:[#allocation14 + $0x2a0] sm:$0xff]
        %v2788 = vld [vmem:[#allocation14 + $0x2a8] sm:$0xff]
        %v2789 = vld [vmem:[#allocation14 + $0x2b0] sm:$0xff]
        %v2790 = vld [vmem:[#allocation14 + $0x2b8] sm:$0xff]
        %v2791 = vld [vmem:[#allocation14 + $0x2c0] sm:$0xff]
        %v2792 = vld [vmem:[#allocation14 + $0x2c8] sm:$0xff]
        %v2793 = vld [vmem:[#allocation14 + $0x2d0] sm:$0xff]
        %v2794 = vld [vmem:[#allocation14 + $0x2d8] sm:$0xff]
        %v2795 = vld [vmem:[#allocation14 + $0x2e0] sm:$0xff]
        %v2796 = vld [vmem:[#allocation14 + $0x2e8] sm:$0xff]
        %v2797 = vld [vmem:[#allocation14 + $0x2f0] sm:$0xff]
        %v2798 = vld [vmem:[#allocation14 + $0x2f8] sm:$0xff]
        %v2800 = vsel %vm2287, %v2765, 0
        %2802 = vmatpush.msra.mxu0 0.0
        %2803 = vmatpush.msra.mxu0 0.0
        %2804 = vmatpush.msra.mxu0 0.0
        %2805 = vmatpush.msra.mxu0 0.0
        %2806 = vmatpush.msra.mxu0 0.0
        %2807 = vmatpush.msra.mxu0 0.0
        %2808 = vmatpush.msra.mxu0 0.0
        %2809 = vmatpush.msra.mxu0 0.0
        %2810 = vmatpush.msra.mxu0 %v2795
        %2811 = vmatpush.msra.mxu0 %v2791
        %2812 = vmatpush.msra.mxu0 %v2787
        %2813 = vmatpush.msra.mxu0 %v2783
        %2814 = vmatpush.msra.mxu0 %v2779
        %2815 = vmatpush.msra.mxu0 %v2775
        %2816 = vmatpush.msra.mxu0 %v2771
        %2817 = vmatpush.msra.mxu0 %v2767
        %2818 = vmatmul.f32.gmra.mxu0 %v2800
        %v2819 = vpop.f32.mrf.mxu0
        %v2820 = vadd.f32 0.0, %v2819
        %2821 = vdwg.mxu0
        %2822 = vmatpush.msra.mxu0 0.0
        %2823 = vmatpush.msra.mxu0 0.0
        %2824 = vmatpush.msra.mxu0 0.0
        %2825 = vmatpush.msra.mxu0 0.0
        %2826 = vmatpush.msra.mxu0 0.0
        %2827 = vmatpush.msra.mxu0 0.0
        %2828 = vmatpush.msra.mxu0 0.0
        %2829 = vmatpush.msra.mxu0 0.0
        %2830 = vmatpush.msra.mxu0 %v2796
        %2831 = vmatpush.msra.mxu0 %v2792
        %2832 = vmatpush.msra.mxu0 %v2788
        %2833 = vmatpush.msra.mxu0 %v2784
        %2834 = vmatpush.msra.mxu0 %v2780
        %2835 = vmatpush.msra.mxu0 %v2776
        %2836 = vmatpush.msra.mxu0 %v2772
        %2837 = vmatpush.msra.mxu0 %v2768
        %2838 = vmatmul.f32.gmra.mxu0 %v2800
        %v2839 = vpop.f32.mrf.mxu0
        %v2840 = vadd.f32 0.0, %v2839
        %2841 = vdwg.mxu0
        %2842 = vmatpush.msra.mxu0 0.0
        %2843 = vmatpush.msra.mxu0 0.0
        %2844 = vmatpush.msra.mxu0 0.0
        %2845 = vmatpush.msra.mxu0 0.0
        %2846 = vmatpush.msra.mxu0 0.0
        %2847 = vmatpush.msra.mxu0 0.0
        %2848 = vmatpush.msra.mxu0 0.0
        %2849 = vmatpush.msra.mxu0 0.0
        %2850 = vmatpush.msra.mxu0 %v2797
        %2851 = vmatpush.msra.mxu0 %v2793
        %2852 = vmatpush.msra.mxu0 %v2789
        %2853 = vmatpush.msra.mxu0 %v2785
        %2854 = vmatpush.msra.mxu0 %v2781
        %2855 = vmatpush.msra.mxu0 %v2777
        %2856 = vmatpush.msra.mxu0 %v2773
        %2857 = vmatpush.msra.mxu0 %v2769
        %2858 = vmatmul.f32.gmra.mxu0 %v2800
        %v2859 = vpop.f32.mrf.mxu0
        %v2860 = vadd.f32 0.0, %v2859
        %2861 = vdwg.mxu0
        %2862 = vmatpush.msra.mxu0 0.0
        %2863 = vmatpush.msra.mxu0 0.0
        %2864 = vmatpush.msra.mxu0 0.0
        %2865 = vmatpush.msra.mxu0 0.0
        %2866 = vmatpush.msra.mxu0 0.0
        %2867 = vmatpush.msra.mxu0 0.0
        %2868 = vmatpush.msra.mxu0 0.0
        %2869 = vmatpush.msra.mxu0 0.0
        %2870 = vmatpush.msra.mxu0 %v2798
        %2871 = vmatpush.msra.mxu0 %v2794
        %2872 = vmatpush.msra.mxu0 %v2790
        %2873 = vmatpush.msra.mxu0 %v2786
        %2874 = vmatpush.msra.mxu0 %v2782
        %2875 = vmatpush.msra.mxu0 %v2778
        %2876 = vmatpush.msra.mxu0 %v2774
        %2877 = vmatpush.msra.mxu0 %v2770
        %2878 = vmatmul.f32.gmra.mxu0 %v2800
        %v2879 = vpop.f32.mrf.mxu0
        %v2880 = vadd.f32 0.0, %v2879
        %2881 = vdwg.mxu0
        %v2882 = vadd.f32 %v2686, %v2820
        %v2883 = vadd.f32 %v2687, %v2840
        %v2884 = vadd.f32 %v2688, %v2860
        %v2885 = vadd.f32 %v2689, %v2880
        %2886 = vrot.lane.b32.xlu0 %v965, 64
        %v2887 = vpop.permute.xlu0 %2886
        %2888 = vrot.lane.b32.xlu0 %v1545, 64
        %v2889 = vpop.permute.xlu0 %2888
        %v2890 = vsel %vm2287, %v2887, 0
        %v2892 = vsel %vm2287, %v2889, 0
        %2894 = vmatpush.xpose.msra.mxu0 0.0
        %2895 = vmatpush.xpose.msra.mxu0 0.0
        %2896 = vmatpush.xpose.msra.mxu0 0.0
        %2897 = vmatpush.xpose.msra.mxu0 0.0
        %2898 = vmatpush.xpose.msra.mxu0 0.0
        %2899 = vmatpush.xpose.msra.mxu0 0.0
        %2900 = vmatpush.xpose.msra.mxu0 0.0
        %2901 = vmatpush.xpose.msra.mxu0 0.0
        %2902 = vmatpush.xpose.msra.mxu0 0.0
        %2903 = vmatpush.xpose.msra.mxu0 0.0
        %2904 = vmatpush.xpose.msra.mxu0 0.0
        %2905 = vmatpush.xpose.msra.mxu0 0.0
        %2906 = vmatpush.xpose.msra.mxu0 0.0
        %2907 = vmatpush.xpose.msra.mxu0 0.0
        %2908 = vmatpush.xpose.msra.mxu0 0.0
        %2909 = vmatpush.xpose.msra.mxu0 %v2892
        %2910 = vmatmul.f32.gmra.mxu0 %v2890
        %v2911 = vpop.f32.mrf.mxu0
        %v2912 = vadd.f32 0.0, %v2911
        %2913 = vdwg.mxu0
        %v2914 = vmul.f32 %v2912, 0.125
        %v2915 = vsel %vm2318, -1e+09, %v2914
        %v2916 = vsel %vm2320, %v2915, -inf
        %2917 = vmax.xlane.f32.xlu0 %v2916
        %v2918 = vpop.xlane.xlu0 %2917
        %v2919 = vsub.f32 %v2915, %v2918
        %v2920 = vmul.f32 %v2919, 1.442695
        %v2921 = vpow.pop %v2920
        %v2922 = vsel %vm2320, %v2921, 0.0
        %2923 = vadd.xlane.f32.xlu0 %v2922
        %v2924 = vpop.xlane.xlu0 %2923
        %v2925 = vrcp.pop %v2924
        %v2926 = vmul.f32 %v2924, %v2925
        %v2927 = vsub.f32 1.0, %v2926
        %v2928 = vmul.f32 %v2925, %v2927
        %v2929 = vadd.f32 %v2925, %v2928
        %vm2930 = vweird.f32 %v2924
        %vm2931 = vweird.f32 %v2925
        %vm2932 = vmor %vm2930, %vm2931
        %v2933 = vsel %vm2932, %v2925, %v2929
        %v2934 = vand.u32 2147483647, %v2924
        %vm2935 = vcmp.eq.f32.partialorder %v2934, 8.507059e+37
        %v2936 = vand.u32 %v2924, 2147483648
        %v2937 = vor.u32 1.1754944e-38, %v2936
        %v2938 = vsel %vm2935, %v2937, %v2933
        %v2939 = vmul.f32 %v2921, %v2938
        %s2940 = scalar_lea.vmem %s543, 24 [#allocation17]
        %2941 = vst.msk [vmem:[%s2940] sm:$0xff] %vm2320, %v2939
        %2943 = vrot.lane.b32.xlu0 %v2125, 64
        %v2944 = vpop.permute.xlu0 %2943
        %v2947 = vsel %vm2320, %v2939, 0
        %2949 = vmatpush.msra.mxu0 0.0
        %2950 = vmatpush.msra.mxu0 0.0
        %2951 = vmatpush.msra.mxu0 0.0
        %2952 = vmatpush.msra.mxu0 0.0
        %2953 = vmatpush.msra.mxu0 0.0
        %2954 = vmatpush.msra.mxu0 0.0
        %2955 = vmatpush.msra.mxu0 0.0
        %2956 = vmatpush.msra.mxu0 0.0
        %2957 = vmatpush.msra.mxu0 0.0
        %2958 = vmatpush.msra.mxu0 0.0
        %2959 = vmatpush.msra.mxu0 0.0
        %2960 = vmatpush.msra.mxu0 0.0
        %2961 = vmatpush.msra.mxu0 0.0
        %2962 = vmatpush.msra.mxu0 0.0
        %2963 = vmatpush.msra.mxu0 0.0
        %2964 = vmatpush.msra.mxu0 %v2944
        %2965 = vmatmul.f32.gmra.mxu0 %v2947
        %v2966 = vpop.f32.mrf.mxu0
        %v2967 = vadd.f32 0.0, %v2966
        %2968 = vdwg.mxu0
        %v2969 = vld [vmem:[#allocation14 + $0x300] sm:$0xff]
        %v2970 = vld [vmem:[#allocation14 + $0x308] sm:$0xff]
        %v2971 = vld [vmem:[#allocation14 + $0x310] sm:$0xff]
        %v2972 = vld [vmem:[#allocation14 + $0x318] sm:$0xff]
        %v2973 = vld [vmem:[#allocation14 + $0x320] sm:$0xff]
        %v2974 = vld [vmem:[#allocation14 + $0x328] sm:$0xff]
        %v2975 = vld [vmem:[#allocation14 + $0x330] sm:$0xff]
        %v2976 = vld [vmem:[#allocation14 + $0x338] sm:$0xff]
        %v2977 = vld [vmem:[#allocation14 + $0x340] sm:$0xff]
        %v2978 = vld [vmem:[#allocation14 + $0x348] sm:$0xff]
        %v2979 = vld [vmem:[#allocation14 + $0x350] sm:$0xff]
        %v2980 = vld [vmem:[#allocation14 + $0x358] sm:$0xff]
        %v2981 = vld [vmem:[#allocation14 + $0x360] sm:$0xff]
        %v2982 = vld [vmem:[#allocation14 + $0x368] sm:$0xff]
        %v2983 = vld [vmem:[#allocation14 + $0x370] sm:$0xff]
        %v2984 = vld [vmem:[#allocation14 + $0x378] sm:$0xff]
        %v2985 = vld [vmem:[#allocation14 + $0x380] sm:$0xff]
        %v2986 = vld [vmem:[#allocation14 + $0x388] sm:$0xff]
        %v2987 = vld [vmem:[#allocation14 + $0x390] sm:$0xff]
        %v2988 = vld [vmem:[#allocation14 + $0x398] sm:$0xff]
        %v2989 = vld [vmem:[#allocation14 + $0x3a0] sm:$0xff]
        %v2990 = vld [vmem:[#allocation14 + $0x3a8] sm:$0xff]
        %v2991 = vld [vmem:[#allocation14 + $0x3b0] sm:$0xff]
        %v2992 = vld [vmem:[#allocation14 + $0x3b8] sm:$0xff]
        %v2993 = vld [vmem:[#allocation14 + $0x3c0] sm:$0xff]
        %v2994 = vld [vmem:[#allocation14 + $0x3c8] sm:$0xff]
        %v2995 = vld [vmem:[#allocation14 + $0x3d0] sm:$0xff]
        %v2996 = vld [vmem:[#allocation14 + $0x3d8] sm:$0xff]
        %v2997 = vld [vmem:[#allocation14 + $0x3e0] sm:$0xff]
        %v2998 = vld [vmem:[#allocation14 + $0x3e8] sm:$0xff]
        %v2999 = vld [vmem:[#allocation14 + $0x3f0] sm:$0xff]
        %v3000 = vld [vmem:[#allocation14 + $0x3f8] sm:$0xff]
        %v3002 = vsel %vm2287, %v2967, 0
        %3004 = vmatpush.msra.mxu0 0.0
        %3005 = vmatpush.msra.mxu0 0.0
        %3006 = vmatpush.msra.mxu0 0.0
        %3007 = vmatpush.msra.mxu0 0.0
        %3008 = vmatpush.msra.mxu0 0.0
        %3009 = vmatpush.msra.mxu0 0.0
        %3010 = vmatpush.msra.mxu0 0.0
        %3011 = vmatpush.msra.mxu0 0.0
        %3012 = vmatpush.msra.mxu0 %v2997
        %3013 = vmatpush.msra.mxu0 %v2993
        %3014 = vmatpush.msra.mxu0 %v2989
        %3015 = vmatpush.msra.mxu0 %v2985
        %3016 = vmatpush.msra.mxu0 %v2981
        %3017 = vmatpush.msra.mxu0 %v2977
        %3018 = vmatpush.msra.mxu0 %v2973
        %3019 = vmatpush.msra.mxu0 %v2969
        %3020 = vmatmul.f32.gmra.mxu0 %v3002
        %v3021 = vpop.f32.mrf.mxu0
        %v3022 = vadd.f32 0.0, %v3021
        %3023 = vdwg.mxu0
        %3024 = vmatpush.msra.mxu0 0.0
        %3025 = vmatpush.msra.mxu0 0.0
        %3026 = vmatpush.msra.mxu0 0.0
        %3027 = vmatpush.msra.mxu0 0.0
        %3028 = vmatpush.msra.mxu0 0.0
        %3029 = vmatpush.msra.mxu0 0.0
        %3030 = vmatpush.msra.mxu0 0.0
        %3031 = vmatpush.msra.mxu0 0.0
        %3032 = vmatpush.msra.mxu0 %v2998
        %3033 = vmatpush.msra.mxu0 %v2994
        %3034 = vmatpush.msra.mxu0 %v2990
        %3035 = vmatpush.msra.mxu0 %v2986
        %3036 = vmatpush.msra.mxu0 %v2982
        %3037 = vmatpush.msra.mxu0 %v2978
        %3038 = vmatpush.msra.mxu0 %v2974
        %3039 = vmatpush.msra.mxu0 %v2970
        %3040 = vmatmul.f32.gmra.mxu0 %v3002
        %v3041 = vpop.f32.mrf.mxu0
        %v3042 = vadd.f32 0.0, %v3041
        %3043 = vdwg.mxu0
        %3044 = vmatpush.msra.mxu0 0.0
        %3045 = vmatpush.msra.mxu0 0.0
        %3046 = vmatpush.msra.mxu0 0.0
        %3047 = vmatpush.msra.mxu0 0.0
        %3048 = vmatpush.msra.mxu0 0.0
        %3049 = vmatpush.msra.mxu0 0.0
        %3050 = vmatpush.msra.mxu0 0.0
        %3051 = vmatpush.msra.mxu0 0.0
        %3052 = vmatpush.msra.mxu0 %v2999
        %3053 = vmatpush.msra.mxu0 %v2995
        %3054 = vmatpush.msra.mxu0 %v2991
        %3055 = vmatpush.msra.mxu0 %v2987
        %3056 = vmatpush.msra.mxu0 %v2983
        %3057 = vmatpush.msra.mxu0 %v2979
        %3058 = vmatpush.msra.mxu0 %v2975
        %3059 = vmatpush.msra.mxu0 %v2971
        %3060 = vmatmul.f32.gmra.mxu0 %v3002
        %v3061 = vpop.f32.mrf.mxu0
        %v3062 = vadd.f32 0.0, %v3061
        %3063 = vdwg.mxu0
        %3064 = vmatpush.msra.mxu0 0.0
        %3065 = vmatpush.msra.mxu0 0.0
        %3066 = vmatpush.msra.mxu0 0.0
        %3067 = vmatpush.msra.mxu0 0.0
        %3068 = vmatpush.msra.mxu0 0.0
        %3069 = vmatpush.msra.mxu0 0.0
        %3070 = vmatpush.msra.mxu0 0.0
        %3071 = vmatpush.msra.mxu0 0.0
        %3072 = vmatpush.msra.mxu0 %v3000
        %3073 = vmatpush.msra.mxu0 %v2996
        %3074 = vmatpush.msra.mxu0 %v2992
        %3075 = vmatpush.msra.mxu0 %v2988
        %3076 = vmatpush.msra.mxu0 %v2984
        %3077 = vmatpush.msra.mxu0 %v2980
        %3078 = vmatpush.msra.mxu0 %v2976
        %3079 = vmatpush.msra.mxu0 %v2972
        %3080 = vmatmul.f32.gmra.mxu0 %v3002
        %v3081 = vpop.f32.mrf.mxu0
        %v3082 = vadd.f32 0.0, %v3081
        %3083 = vdwg.mxu0
        %v3084 = vadd.f32 %v2882, %v3022
        %v3085 = vadd.f32 %v2883, %v3042
        %v3086 = vadd.f32 %v2884, %v3062
        %v3087 = vadd.f32 %v2885, %v3082
        %v3089 = vsel %vm2287, %v1045, 0
        %v3092 = vsel %vm2287, %v1625, 0
        %3094 = vmatpush.xpose.msra.mxu0 0.0
        %3095 = vmatpush.xpose.msra.mxu0 0.0
        %3096 = vmatpush.xpose.msra.mxu0 0.0
        %3097 = vmatpush.xpose.msra.mxu0 0.0
        %3098 = vmatpush.xpose.msra.mxu0 0.0
        %3099 = vmatpush.xpose.msra.mxu0 0.0
        %3100 = vmatpush.xpose.msra.mxu0 0.0
        %3101 = vmatpush.xpose.msra.mxu0 0.0
        %3102 = vmatpush.xpose.msra.mxu0 0.0
        %3103 = vmatpush.xpose.msra.mxu0 0.0
        %3104 = vmatpush.xpose.msra.mxu0 0.0
        %3105 = vmatpush.xpose.msra.mxu0 0.0
        %3106 = vmatpush.xpose.msra.mxu0 0.0
        %3107 = vmatpush.xpose.msra.mxu0 0.0
        %3108 = vmatpush.xpose.msra.mxu0 0.0
        %3109 = vmatpush.xpose.msra.mxu0 %v3092
        %3110 = vmatmul.f32.gmra.mxu0 %v3089
        %v3111 = vpop.f32.mrf.mxu0
        %v3112 = vadd.f32 0.0, %v3111
        %3113 = vdwg.mxu0
        %v3114 = vmul.f32 %v3112, 0.125
        %v3115 = vsel %vm2318, -1e+09, %v3114
        %v3116 = vsel %vm2320, %v3115, -inf
        %3117 = vmax.xlane.f32.xlu0 %v3116
        %v3118 = vpop.xlane.xlu0 %3117
        %v3119 = vsub.f32 %v3115, %v3118
        %v3120 = vmul.f32 %v3119, 1.442695
        %v3121 = vpow.pop %v3120
        %v3122 = vsel %vm2320, %v3121, 0.0
        %3123 = vadd.xlane.f32.xlu0 %v3122
        %v3124 = vpop.xlane.xlu0 %3123
        %v3125 = vrcp.pop %v3124
        %v3126 = vmul.f32 %v3124, %v3125
        %v3127 = vsub.f32 1.0, %v3126
        %v3128 = vmul.f32 %v3125, %v3127
        %v3129 = vadd.f32 %v3125, %v3128
        %vm3130 = vweird.f32 %v3124
        %vm3131 = vweird.f32 %v3125
        %vm3132 = vmor %vm3130, %vm3131
        %v3133 = vsel %vm3132, %v3125, %v3129
        %v3134 = vand.u32 2147483647, %v3124
        %vm3135 = vcmp.eq.f32.partialorder %v3134, 8.507059e+37
        %v3136 = vand.u32 %v3124, 2147483648
        %v3137 = vor.u32 1.1754944e-38, %v3136
        %v3138 = vsel %vm3135, %v3137, %v3133
        %v3139 = vmul.f32 %v3121, %v3138
        %s3140 = scalar_lea.vmem %s543, 32 [#allocation17]
        %3141 = vst.msk [vmem:[%s3140] sm:$0xff] %vm2320, %v3139
        %v3143 = vsel %vm2320, %v3139, 0
        %3145 = vmatpush.msra.mxu0 0.0
        %3146 = vmatpush.msra.mxu0 0.0
        %3147 = vmatpush.msra.mxu0 0.0
        %3148 = vmatpush.msra.mxu0 0.0
        %3149 = vmatpush.msra.mxu0 0.0
        %3150 = vmatpush.msra.mxu0 0.0
        %3151 = vmatpush.msra.mxu0 0.0
        %3152 = vmatpush.msra.mxu0 0.0
        %3153 = vmatpush.msra.mxu0 0.0
        %3154 = vmatpush.msra.mxu0 0.0
        %3155 = vmatpush.msra.mxu0 0.0
        %3156 = vmatpush.msra.mxu0 0.0
        %3157 = vmatpush.msra.mxu0 0.0
        %3158 = vmatpush.msra.mxu0 0.0
        %3159 = vmatpush.msra.mxu0 0.0
        %3160 = vmatpush.msra.mxu0 %v2205
        %3161 = vmatmul.f32.gmra.mxu0 %v3143
        %v3162 = vpop.f32.mrf.mxu0
        %v3163 = vadd.f32 0.0, %v3162
        %3164 = vdwg.mxu0
        %v3165 = vld [vmem:[#allocation14 + $0x400] sm:$0xff]
        %v3166 = vld [vmem:[#allocation14 + $0x408] sm:$0xff]
        %v3167 = vld [vmem:[#allocation14 + $0x410] sm:$0xff]
        %v3168 = vld [vmem:[#allocation14 + $0x418] sm:$0xff]
        %v3169 = vld [vmem:[#allocation14 + $0x420] sm:$0xff]
        %v3170 = vld [vmem:[#allocation14 + $0x428] sm:$0xff]
        %v3171 = vld [vmem:[#allocation14 + $0x430] sm:$0xff]
        %v3172 = vld [vmem:[#allocation14 + $0x438] sm:$0xff]
        %v3173 = vld [vmem:[#allocation14 + $0x440] sm:$0xff]
        %v3174 = vld [vmem:[#allocation14 + $0x448] sm:$0xff]
        %v3175 = vld [vmem:[#allocation14 + $0x450] sm:$0xff]
        %v3176 = vld [vmem:[#allocation14 + $0x458] sm:$0xff]
        %v3177 = vld [vmem:[#allocation14 + $0x460] sm:$0xff]
        %v3178 = vld [vmem:[#allocation14 + $0x468] sm:$0xff]
        %v3179 = vld [vmem:[#allocation14 + $0x470] sm:$0xff]
        %v3180 = vld [vmem:[#allocation14 + $0x478] sm:$0xff]
        %v3181 = vld [vmem:[#allocation14 + $0x480] sm:$0xff]
        %v3182 = vld [vmem:[#allocation14 + $0x488] sm:$0xff]
        %v3183 = vld [vmem:[#allocation14 + $0x490] sm:$0xff]
        %v3184 = vld [vmem:[#allocation14 + $0x498] sm:$0xff]
        %v3185 = vld [vmem:[#allocation14 + $0x4a0] sm:$0xff]
        %v3186 = vld [vmem:[#allocation14 + $0x4a8] sm:$0xff]
        %v3187 = vld [vmem:[#allocation14 + $0x4b0] sm:$0xff]
        %v3188 = vld [vmem:[#allocation14 + $0x4b8] sm:$0xff]
        %v3189 = vld [vmem:[#allocation14 + $0x4c0] sm:$0xff]
        %v3190 = vld [vmem:[#allocation14 + $0x4c8] sm:$0xff]
        %v3191 = vld [vmem:[#allocation14 + $0x4d0] sm:$0xff]
        %v3192 = vld [vmem:[#allocation14 + $0x4d8] sm:$0xff]
        %v3193 = vld [vmem:[#allocation14 + $0x4e0] sm:$0xff]
        %v3194 = vld [vmem:[#allocation14 + $0x4e8] sm:$0xff]
        %v3195 = vld [vmem:[#allocation14 + $0x4f0] sm:$0xff]
        %v3196 = vld [vmem:[#allocation14 + $0x4f8] sm:$0xff]
        %v3198 = vsel %vm2287, %v3163, 0
        %3200 = vmatpush.msra.mxu0 0.0
        %3201 = vmatpush.msra.mxu0 0.0
        %3202 = vmatpush.msra.mxu0 0.0
        %3203 = vmatpush.msra.mxu0 0.0
        %3204 = vmatpush.msra.mxu0 0.0
        %3205 = vmatpush.msra.mxu0 0.0
        %3206 = vmatpush.msra.mxu0 0.0
        %3207 = vmatpush.msra.mxu0 0.0
        %3208 = vmatpush.msra.mxu0 %v3193
        %3209 = vmatpush.msra.mxu0 %v3189
        %3210 = vmatpush.msra.mxu0 %v3185
        %3211 = vmatpush.msra.mxu0 %v3181
        %3212 = vmatpush.msra.mxu0 %v3177
        %3213 = vmatpush.msra.mxu0 %v3173
        %3214 = vmatpush.msra.mxu0 %v3169
        %3215 = vmatpush.msra.mxu0 %v3165
        %3216 = vmatmul.f32.gmra.mxu0 %v3198
        %v3217 = vpop.f32.mrf.mxu0
        %v3218 = vadd.f32 0.0, %v3217
        %3219 = vdwg.mxu0
        %3220 = vmatpush.msra.mxu0 0.0
        %3221 = vmatpush.msra.mxu0 0.0
        %3222 = vmatpush.msra.mxu0 0.0
        %3223 = vmatpush.msra.mxu0 0.0
        %3224 = vmatpush.msra.mxu0 0.0
        %3225 = vmatpush.msra.mxu0 0.0
        %3226 = vmatpush.msra.mxu0 0.0
        %3227 = vmatpush.msra.mxu0 0.0
        %3228 = vmatpush.msra.mxu0 %v3194
        %3229 = vmatpush.msra.mxu0 %v3190
        %3230 = vmatpush.msra.mxu0 %v3186
        %3231 = vmatpush.msra.mxu0 %v3182
        %3232 = vmatpush.msra.mxu0 %v3178
        %3233 = vmatpush.msra.mxu0 %v3174
        %3234 = vmatpush.msra.mxu0 %v3170
        %3235 = vmatpush.msra.mxu0 %v3166
        %3236 = vmatmul.f32.gmra.mxu0 %v3198
        %v3237 = vpop.f32.mrf.mxu0
        %v3238 = vadd.f32 0.0, %v3237
        %3239 = vdwg.mxu0
        %3240 = vmatpush.msra.mxu0 0.0
        %3241 = vmatpush.msra.mxu0 0.0
        %3242 = vmatpush.msra.mxu0 0.0
        %3243 = vmatpush.msra.mxu0 0.0
        %3244 = vmatpush.msra.mxu0 0.0
        %3245 = vmatpush.msra.mxu0 0.0
        %3246 = vmatpush.msra.mxu0 0.0
        %3247 = vmatpush.msra.mxu0 0.0
        %3248 = vmatpush.msra.mxu0 %v3195
        %3249 = vmatpush.msra.mxu0 %v3191
        %3250 = vmatpush.msra.mxu0 %v3187
        %3251 = vmatpush.msra.mxu0 %v3183
        %3252 = vmatpush.msra.mxu0 %v3179
        %3253 = vmatpush.msra.mxu0 %v3175
        %3254 = vmatpush.msra.mxu0 %v3171
        %3255 = vmatpush.msra.mxu0 %v3167
        %3256 = vmatmul.f32.gmra.mxu0 %v3198
        %v3257 = vpop.f32.mrf.mxu0
        %v3258 = vadd.f32 0.0, %v3257
        %3259 = vdwg.mxu0
        %3260 = vmatpush.msra.mxu0 0.0
        %3261 = vmatpush.msra.mxu0 0.0
        %3262 = vmatpush.msra.mxu0 0.0
        %3263 = vmatpush.msra.mxu0 0.0
        %3264 = vmatpush.msra.mxu0 0.0
        %3265 = vmatpush.msra.mxu0 0.0
        %3266 = vmatpush.msra.mxu0 0.0
        %3267 = vmatpush.msra.mxu0 0.0
        %3268 = vmatpush.msra.mxu0 %v3196
        %3269 = vmatpush.msra.mxu0 %v3192
        %3270 = vmatpush.msra.mxu0 %v3188
        %3271 = vmatpush.msra.mxu0 %v3184
        %3272 = vmatpush.msra.mxu0 %v3180
        %3273 = vmatpush.msra.mxu0 %v3176
        %3274 = vmatpush.msra.mxu0 %v3172
        %3275 = vmatpush.msra.mxu0 %v3168
        %3276 = vmatmul.f32.gmra.mxu0 %v3198
        %v3277 = vpop.f32.mrf.mxu0
        %v3278 = vadd.f32 0.0, %v3277
        %3279 = vdwg.mxu0
        %v3280 = vadd.f32 %v3084, %v3218
        %v3281 = vadd.f32 %v3085, %v3238
        %v3282 = vadd.f32 %v3086, %v3258
        %v3283 = vadd.f32 %v3087, %v3278
        %3284 = vrot.lane.b32.xlu0 %v1045, 64
        %v3285 = vpop.permute.xlu0 %3284
        %3286 = vrot.lane.b32.xlu0 %v1625, 64
        %v3287 = vpop.permute.xlu0 %3286
        %v3288 = vsel %vm2287, %v3285, 0
        %v3290 = vsel %vm2287, %v3287, 0
        %3292 = vmatpush.xpose.msra.mxu0 0.0
        %3293 = vmatpush.xpose.msra.mxu0 0.0
        %3294 = vmatpush.xpose.msra.mxu0 0.0
        %3295 = vmatpush.xpose.msra.mxu0 0.0
        %3296 = vmatpush.xpose.msra.mxu0 0.0
        %3297 = vmatpush.xpose.msra.mxu0 0.0
        %3298 = vmatpush.xpose.msra.mxu0 0.0
        %3299 = vmatpush.xpose.msra.mxu0 0.0
        %3300 = vmatpush.xpose.msra.mxu0 0.0
        %3301 = vmatpush.xpose.msra.mxu0 0.0
        %3302 = vmatpush.xpose.msra.mxu0 0.0
        %3303 = vmatpush.xpose.msra.mxu0 0.0
        %3304 = vmatpush.xpose.msra.mxu0 0.0
        %3305 = vmatpush.xpose.msra.mxu0 0.0
        %3306 = vmatpush.xpose.msra.mxu0 0.0
        %3307 = vmatpush.xpose.msra.mxu0 %v3290
        %3308 = vmatmul.f32.gmra.mxu0 %v3288
        %v3309 = vpop.f32.mrf.mxu0
        %v3310 = vadd.f32 0.0, %v3309
        %3311 = vdwg.mxu0
        %v3312 = vmul.f32 %v3310, 0.125
        %v3313 = vsel %vm2318, -1e+09, %v3312
        %v3314 = vsel %vm2320, %v3313, -inf
        %3315 = vmax.xlane.f32.xlu0 %v3314
        %v3316 = vpop.xlane.xlu0 %3315
        %v3317 = vsub.f32 %v3313, %v3316
        %v3318 = vmul.f32 %v3317, 1.442695
        %v3319 = vpow.pop %v3318
        %v3320 = vsel %vm2320, %v3319, 0.0
        %3321 = vadd.xlane.f32.xlu0 %v3320
        %v3322 = vpop.xlane.xlu0 %3321
        %v3323 = vrcp.pop %v3322
        %v3324 = vmul.f32 %v3322, %v3323
        %v3325 = vsub.f32 1.0, %v3324
        %v3326 = vmul.f32 %v3323, %v3325
        %v3327 = vadd.f32 %v3323, %v3326
        %vm3328 = vweird.f32 %v3322
        %vm3329 = vweird.f32 %v3323
        %vm3330 = vmor %vm3328, %vm3329
        %v3331 = vsel %vm3330, %v3323, %v3327
        %v3332 = vand.u32 2147483647, %v3322
        %vm3333 = vcmp.eq.f32.partialorder %v3332, 8.507059e+37
        %v3334 = vand.u32 %v3322, 2147483648
        %v3335 = vor.u32 1.1754944e-38, %v3334
        %v3336 = vsel %vm3333, %v3335, %v3331
        %v3337 = vmul.f32 %v3319, %v3336
        %s3338 = scalar_lea.vmem %s543, 40 [#allocation17]
        %3339 = vst.msk [vmem:[%s3338] sm:$0xff] %vm2320, %v3337
        %3341 = vrot.lane.b32.xlu0 %v2205, 64
        %v3342 = vpop.permute.xlu0 %3341
        %v3345 = vsel %vm2320, %v3337, 0
        %3347 = vmatpush.msra.mxu0 0.0
        %3348 = vmatpush.msra.mxu0 0.0
        %3349 = vmatpush.msra.mxu0 0.0
        %3350 = vmatpush.msra.mxu0 0.0
        %3351 = vmatpush.msra.mxu0 0.0
        %3352 = vmatpush.msra.mxu0 0.0
        %3353 = vmatpush.msra.mxu0 0.0
        %3354 = vmatpush.msra.mxu0 0.0
        %3355 = vmatpush.msra.mxu0 0.0
        %3356 = vmatpush.msra.mxu0 0.0
        %3357 = vmatpush.msra.mxu0 0.0
        %3358 = vmatpush.msra.mxu0 0.0
        %3359 = vmatpush.msra.mxu0 0.0
        %3360 = vmatpush.msra.mxu0 0.0
        %3361 = vmatpush.msra.mxu0 0.0
        %3362 = vmatpush.msra.mxu0 %v3342
        %3363 = vmatmul.f32.gmra.mxu0 %v3345
        %v3364 = vpop.f32.mrf.mxu0
        %v3365 = vadd.f32 0.0, %v3364
        %3366 = vdwg.mxu0
        %v3367 = vld [vmem:[#allocation14 + $0x500] sm:$0xff]
        %v3368 = vld [vmem:[#allocation14 + $0x508] sm:$0xff]
        %v3369 = vld [vmem:[#allocation14 + $0x510] sm:$0xff]
        %v3370 = vld [vmem:[#allocation14 + $0x518] sm:$0xff]
        %v3371 = vld [vmem:[#allocation14 + $0x520] sm:$0xff]
        %v3372 = vld [vmem:[#allocation14 + $0x528] sm:$0xff]
        %v3373 = vld [vmem:[#allocation14 + $0x530] sm:$0xff]
        %v3374 = vld [vmem:[#allocation14 + $0x538] sm:$0xff]
        %v3375 = vld [vmem:[#allocation14 + $0x540] sm:$0xff]
        %v3376 = vld [vmem:[#allocation14 + $0x548] sm:$0xff]
        %v3377 = vld [vmem:[#allocation14 + $0x550] sm:$0xff]
        %v3378 = vld [vmem:[#allocation14 + $0x558] sm:$0xff]
        %v3379 = vld [vmem:[#allocation14 + $0x560] sm:$0xff]
        %v3380 = vld [vmem:[#allocation14 + $0x568] sm:$0xff]
        %v3381 = vld [vmem:[#allocation14 + $0x570] sm:$0xff]
        %v3382 = vld [vmem:[#allocation14 + $0x578] sm:$0xff]
        %v3383 = vld [vmem:[#allocation14 + $0x580] sm:$0xff]
        %v3384 = vld [vmem:[#allocation14 + $0x588] sm:$0xff]
        %v3385 = vld [vmem:[#allocation14 + $0x590] sm:$0xff]
        %v3386 = vld [vmem:[#allocation14 + $0x598] sm:$0xff]
        %v3387 = vld [vmem:[#allocation14 + $0x5a0] sm:$0xff]
        %v3388 = vld [vmem:[#allocation14 + $0x5a8] sm:$0xff]
        %v3389 = vld [vmem:[#allocation14 + $0x5b0] sm:$0xff]
        %v3390 = vld [vmem:[#allocation14 + $0x5b8] sm:$0xff]
        %v3391 = vld [vmem:[#allocation14 + $0x5c0] sm:$0xff]
        %v3392 = vld [vmem:[#allocation14 + $0x5c8] sm:$0xff]
        %v3393 = vld [vmem:[#allocation14 + $0x5d0] sm:$0xff]
        %v3394 = vld [vmem:[#allocation14 + $0x5d8] sm:$0xff]
        %v3395 = vld [vmem:[#allocation14 + $0x5e0] sm:$0xff]
        %v3396 = vld [vmem:[#allocation14 + $0x5e8] sm:$0xff]
        %v3397 = vld [vmem:[#allocation14 + $0x5f0] sm:$0xff]
        %v3398 = vld [vmem:[#allocation14 + $0x5f8] sm:$0xff]
        %v3400 = vsel %vm2287, %v3365, 0
        %3402 = vmatpush.msra.mxu0 0.0
        %3403 = vmatpush.msra.mxu0 0.0
        %3404 = vmatpush.msra.mxu0 0.0
        %3405 = vmatpush.msra.mxu0 0.0
        %3406 = vmatpush.msra.mxu0 0.0
        %3407 = vmatpush.msra.mxu0 0.0
        %3408 = vmatpush.msra.mxu0 0.0
        %3409 = vmatpush.msra.mxu0 0.0
        %3410 = vmatpush.msra.mxu0 %v3395
        %3411 = vmatpush.msra.mxu0 %v3391
        %3412 = vmatpush.msra.mxu0 %v3387
        %3413 = vmatpush.msra.mxu0 %v3383
        %3414 = vmatpush.msra.mxu0 %v3379
        %3415 = vmatpush.msra.mxu0 %v3375
        %3416 = vmatpush.msra.mxu0 %v3371
        %3417 = vmatpush.msra.mxu0 %v3367
        %3418 = vmatmul.f32.gmra.mxu0 %v3400
        %v3419 = vpop.f32.mrf.mxu0
        %v3420 = vadd.f32 0.0, %v3419
        %3421 = vdwg.mxu0
        %3422 = vmatpush.msra.mxu0 0.0
        %3423 = vmatpush.msra.mxu0 0.0
        %3424 = vmatpush.msra.mxu0 0.0
        %3425 = vmatpush.msra.mxu0 0.0
        %3426 = vmatpush.msra.mxu0 0.0
        %3427 = vmatpush.msra.mxu0 0.0
        %3428 = vmatpush.msra.mxu0 0.0
        %3429 = vmatpush.msra.mxu0 0.0
        %3430 = vmatpush.msra.mxu0 %v3396
        %3431 = vmatpush.msra.mxu0 %v3392
        %3432 = vmatpush.msra.mxu0 %v3388
        %3433 = vmatpush.msra.mxu0 %v3384
        %3434 = vmatpush.msra.mxu0 %v3380
        %3435 = vmatpush.msra.mxu0 %v3376
        %3436 = vmatpush.msra.mxu0 %v3372
        %3437 = vmatpush.msra.mxu0 %v3368
        %3438 = vmatmul.f32.gmra.mxu0 %v3400
        %v3439 = vpop.f32.mrf.mxu0
        %v3440 = vadd.f32 0.0, %v3439
        %3441 = vdwg.mxu0
        %3442 = vmatpush.msra.mxu0 0.0
        %3443 = vmatpush.msra.mxu0 0.0
        %3444 = vmatpush.msra.mxu0 0.0
        %3445 = vmatpush.msra.mxu0 0.0
        %3446 = vmatpush.msra.mxu0 0.0
        %3447 = vmatpush.msra.mxu0 0.0
        %3448 = vmatpush.msra.mxu0 0.0
        %3449 = vmatpush.msra.mxu0 0.0
        %3450 = vmatpush.msra.mxu0 %v3397
        %3451 = vmatpush.msra.mxu0 %v3393
        %3452 = vmatpush.msra.mxu0 %v3389
        %3453 = vmatpush.msra.mxu0 %v3385
        %3454 = vmatpush.msra.mxu0 %v3381
        %3455 = vmatpush.msra.mxu0 %v3377
        %3456 = vmatpush.msra.mxu0 %v3373
        %3457 = vmatpush.msra.mxu0 %v3369
        %3458 = vmatmul.f32.gmra.mxu0 %v3400
        %v3459 = vpop.f32.mrf.mxu0
        %v3460 = vadd.f32 0.0, %v3459
        %3461 = vdwg.mxu0
        %3462 = vmatpush.msra.mxu0 0.0
        %3463 = vmatpush.msra.mxu0 0.0
        %3464 = vmatpush.msra.mxu0 0.0
        %3465 = vmatpush.msra.mxu0 0.0
        %3466 = vmatpush.msra.mxu0 0.0
        %3467 = vmatpush.msra.mxu0 0.0
        %3468 = vmatpush.msra.mxu0 0.0
        %3469 = vmatpush.msra.mxu0 0.0
        %3470 = vmatpush.msra.mxu0 %v3398
        %3471 = vmatpush.msra.mxu0 %v3394
        %3472 = vmatpush.msra.mxu0 %v3390
        %3473 = vmatpush.msra.mxu0 %v3386
        %3474 = vmatpush.msra.mxu0 %v3382
        %3475 = vmatpush.msra.mxu0 %v3378
        %3476 = vmatpush.msra.mxu0 %v3374
        %3477 = vmatpush.msra.mxu0 %v3370
        %3478 = vmatmul.f32.gmra.mxu0 %v3400
        %v3479 = vpop.f32.mrf.mxu0
        %v3480 = vadd.f32 0.0, %v3479
        %3481 = vdwg.mxu0
        %v3482 = vadd.f32 %v3280, %v3420
        %v3483 = vadd.f32 %v3281, %v3440
        %v3484 = vadd.f32 %v3282, %v3460
        %v3485 = vadd.f32 %v3283, %v3480
        %v3487 = vsel %vm2287, %v1125, 0
        %v3490 = vsel %vm2287, %v1705, 0
        %3492 = vmatpush.xpose.msra.mxu0 0.0
        %3493 = vmatpush.xpose.msra.mxu0 0.0
        %3494 = vmatpush.xpose.msra.mxu0 0.0
        %3495 = vmatpush.xpose.msra.mxu0 0.0
        %3496 = vmatpush.xpose.msra.mxu0 0.0
        %3497 = vmatpush.xpose.msra.mxu0 0.0
        %3498 = vmatpush.xpose.msra.mxu0 0.0
        %3499 = vmatpush.xpose.msra.mxu0 0.0
        %3500 = vmatpush.xpose.msra.mxu0 0.0
        %3501 = vmatpush.xpose.msra.mxu0 0.0
        %3502 = vmatpush.xpose.msra.mxu0 0.0
        %3503 = vmatpush.xpose.msra.mxu0 0.0
        %3504 = vmatpush.xpose.msra.mxu0 0.0
        %3505 = vmatpush.xpose.msra.mxu0 0.0
        %3506 = vmatpush.xpose.msra.mxu0 0.0
        %3507 = vmatpush.xpose.msra.mxu0 %v3490
        %3508 = vmatmul.f32.gmra.mxu0 %v3487
        %v3509 = vpop.f32.mrf.mxu0
        %v3510 = vadd.f32 0.0, %v3509
        %3511 = vdwg.mxu0
        %v3512 = vmul.f32 %v3510, 0.125
        %v3513 = vsel %vm2318, -1e+09, %v3512
        %v3514 = vsel %vm2320, %v3513, -inf
        %3515 = vmax.xlane.f32.xlu0 %v3514
        %v3516 = vpop.xlane.xlu0 %3515
        %v3517 = vsub.f32 %v3513, %v3516
        %v3518 = vmul.f32 %v3517, 1.442695
        %v3519 = vpow.pop %v3518
        %v3520 = vsel %vm2320, %v3519, 0.0
        %3521 = vadd.xlane.f32.xlu0 %v3520
        %v3522 = vpop.xlane.xlu0 %3521
        %v3523 = vrcp.pop %v3522
        %v3524 = vmul.f32 %v3522, %v3523
        %v3525 = vsub.f32 1.0, %v3524
        %v3526 = vmul.f32 %v3523, %v3525
        %v3527 = vadd.f32 %v3523, %v3526
        %vm3528 = vweird.f32 %v3522
        %vm3529 = vweird.f32 %v3523
        %vm3530 = vmor %vm3528, %vm3529
        %v3531 = vsel %vm3530, %v3523, %v3527
        %v3532 = vand.u32 2147483647, %v3522
        %vm3533 = vcmp.eq.f32.partialorder %v3532, 8.507059e+37
        %v3534 = vand.u32 %v3522, 2147483648
        %v3535 = vor.u32 1.1754944e-38, %v3534
        %v3536 = vsel %vm3533, %v3535, %v3531
        %v3537 = vmul.f32 %v3519, %v3536
        %s3538 = scalar_lea.vmem %s543, 48 [#allocation17]
        %3539 = vst.msk [vmem:[%s3538] sm:$0xff] %vm2320, %v3537
        %v3541 = vsel %vm2320, %v3537, 0
        %3543 = vmatpush.msra.mxu0 0.0
        %3544 = vmatpush.msra.mxu0 0.0
        %3545 = vmatpush.msra.mxu0 0.0
        %3546 = vmatpush.msra.mxu0 0.0
        %3547 = vmatpush.msra.mxu0 0.0
        %3548 = vmatpush.msra.mxu0 0.0
        %3549 = vmatpush.msra.mxu0 0.0
        %3550 = vmatpush.msra.mxu0 0.0
        %3551 = vmatpush.msra.mxu0 0.0
        %3552 = vmatpush.msra.mxu0 0.0
        %3553 = vmatpush.msra.mxu0 0.0
        %3554 = vmatpush.msra.mxu0 0.0
        %3555 = vmatpush.msra.mxu0 0.0
        %3556 = vmatpush.msra.mxu0 0.0
        %3557 = vmatpush.msra.mxu0 0.0
        %3558 = vmatpush.msra.mxu0 %v2285
        %3559 = vmatmul.f32.gmra.mxu0 %v3541
        %v3560 = vpop.f32.mrf.mxu0
        %v3561 = vadd.f32 0.0, %v3560
        %3562 = vdwg.mxu0
        %v3563 = vld [vmem:[#allocation14 + $0x600] sm:$0xff]
        %v3564 = vld [vmem:[#allocation14 + $0x608] sm:$0xff]
        %v3565 = vld [vmem:[#allocation14 + $0x610] sm:$0xff]
        %v3566 = vld [vmem:[#allocation14 + $0x618] sm:$0xff]
        %v3567 = vld [vmem:[#allocation14 + $0x620] sm:$0xff]
        %v3568 = vld [vmem:[#allocation14 + $0x628] sm:$0xff]
        %v3569 = vld [vmem:[#allocation14 + $0x630] sm:$0xff]
        %v3570 = vld [vmem:[#allocation14 + $0x638] sm:$0xff]
        %v3571 = vld [vmem:[#allocation14 + $0x640] sm:$0xff]
        %v3572 = vld [vmem:[#allocation14 + $0x648] sm:$0xff]
        %v3573 = vld [vmem:[#allocation14 + $0x650] sm:$0xff]
        %v3574 = vld [vmem:[#allocation14 + $0x658] sm:$0xff]
        %v3575 = vld [vmem:[#allocation14 + $0x660] sm:$0xff]
        %v3576 = vld [vmem:[#allocation14 + $0x668] sm:$0xff]
        %v3577 = vld [vmem:[#allocation14 + $0x670] sm:$0xff]
        %v3578 = vld [vmem:[#allocation14 + $0x678] sm:$0xff]
        %v3579 = vld [vmem:[#allocation14 + $0x680] sm:$0xff]
        %v3580 = vld [vmem:[#allocation14 + $0x688] sm:$0xff]
        %v3581 = vld [vmem:[#allocation14 + $0x690] sm:$0xff]
        %v3582 = vld [vmem:[#allocation14 + $0x698] sm:$0xff]
        %v3583 = vld [vmem:[#allocation14 + $0x6a0] sm:$0xff]
        %v3584 = vld [vmem:[#allocation14 + $0x6a8] sm:$0xff]
        %v3585 = vld [vmem:[#allocation14 + $0x6b0] sm:$0xff]
        %v3586 = vld [vmem:[#allocation14 + $0x6b8] sm:$0xff]
        %v3587 = vld [vmem:[#allocation14 + $0x6c0] sm:$0xff]
        %v3588 = vld [vmem:[#allocation14 + $0x6c8] sm:$0xff]
        %v3589 = vld [vmem:[#allocation14 + $0x6d0] sm:$0xff]
        %v3590 = vld [vmem:[#allocation14 + $0x6d8] sm:$0xff]
        %v3591 = vld [vmem:[#allocation14 + $0x6e0] sm:$0xff]
        %v3592 = vld [vmem:[#allocation14 + $0x6e8] sm:$0xff]
        %v3593 = vld [vmem:[#allocation14 + $0x6f0] sm:$0xff]
        %v3594 = vld [vmem:[#allocation14 + $0x6f8] sm:$0xff]
        %v3596 = vsel %vm2287, %v3561, 0
        %3598 = vmatpush.msra.mxu0 0.0
        %3599 = vmatpush.msra.mxu0 0.0
        %3600 = vmatpush.msra.mxu0 0.0
        %3601 = vmatpush.msra.mxu0 0.0
        %3602 = vmatpush.msra.mxu0 0.0
        %3603 = vmatpush.msra.mxu0 0.0
        %3604 = vmatpush.msra.mxu0 0.0
        %3605 = vmatpush.msra.mxu0 0.0
        %3606 = vmatpush.msra.mxu0 %v3591
        %3607 = vmatpush.msra.mxu0 %v3587
        %3608 = vmatpush.msra.mxu0 %v3583
        %3609 = vmatpush.msra.mxu0 %v3579
        %3610 = vmatpush.msra.mxu0 %v3575
        %3611 = vmatpush.msra.mxu0 %v3571
        %3612 = vmatpush.msra.mxu0 %v3567
        %3613 = vmatpush.msra.mxu0 %v3563
        %3614 = vmatmul.f32.gmra.mxu0 %v3596
        %v3615 = vpop.f32.mrf.mxu0
        %v3616 = vadd.f32 0.0, %v3615
        %3617 = vdwg.mxu0
        %3618 = vmatpush.msra.mxu0 0.0
        %3619 = vmatpush.msra.mxu0 0.0
        %3620 = vmatpush.msra.mxu0 0.0
        %3621 = vmatpush.msra.mxu0 0.0
        %3622 = vmatpush.msra.mxu0 0.0
        %3623 = vmatpush.msra.mxu0 0.0
        %3624 = vmatpush.msra.mxu0 0.0
        %3625 = vmatpush.msra.mxu0 0.0
        %3626 = vmatpush.msra.mxu0 %v3592
        %3627 = vmatpush.msra.mxu0 %v3588
        %3628 = vmatpush.msra.mxu0 %v3584
        %3629 = vmatpush.msra.mxu0 %v3580
        %3630 = vmatpush.msra.mxu0 %v3576
        %3631 = vmatpush.msra.mxu0 %v3572
        %3632 = vmatpush.msra.mxu0 %v3568
        %3633 = vmatpush.msra.mxu0 %v3564
        %3634 = vmatmul.f32.gmra.mxu0 %v3596
        %v3635 = vpop.f32.mrf.mxu0
        %v3636 = vadd.f32 0.0, %v3635
        %3637 = vdwg.mxu0
        %3638 = vmatpush.msra.mxu0 0.0
        %3639 = vmatpush.msra.mxu0 0.0
        %3640 = vmatpush.msra.mxu0 0.0
        %3641 = vmatpush.msra.mxu0 0.0
        %3642 = vmatpush.msra.mxu0 0.0
        %3643 = vmatpush.msra.mxu0 0.0
        %3644 = vmatpush.msra.mxu0 0.0
        %3645 = vmatpush.msra.mxu0 0.0
        %3646 = vmatpush.msra.mxu0 %v3593
        %3647 = vmatpush.msra.mxu0 %v3589
        %3648 = vmatpush.msra.mxu0 %v3585
        %3649 = vmatpush.msra.mxu0 %v3581
        %3650 = vmatpush.msra.mxu0 %v3577
        %3651 = vmatpush.msra.mxu0 %v3573
        %3652 = vmatpush.msra.mxu0 %v3569
        %3653 = vmatpush.msra.mxu0 %v3565
        %3654 = vmatmul.f32.gmra.mxu0 %v3596
        %v3655 = vpop.f32.mrf.mxu0
        %v3656 = vadd.f32 0.0, %v3655
        %3657 = vdwg.mxu0
        %3658 = vmatpush.msra.mxu0 0.0
        %3659 = vmatpush.msra.mxu0 0.0
        %3660 = vmatpush.msra.mxu0 0.0
        %3661 = vmatpush.msra.mxu0 0.0
        %3662 = vmatpush.msra.mxu0 0.0
        %3663 = vmatpush.msra.mxu0 0.0
        %3664 = vmatpush.msra.mxu0 0.0
        %3665 = vmatpush.msra.mxu0 0.0
        %3666 = vmatpush.msra.mxu0 %v3594
        %3667 = vmatpush.msra.mxu0 %v3590
        %3668 = vmatpush.msra.mxu0 %v3586
        %3669 = vmatpush.msra.mxu0 %v3582
        %3670 = vmatpush.msra.mxu0 %v3578
        %3671 = vmatpush.msra.mxu0 %v3574
        %3672 = vmatpush.msra.mxu0 %v3570
        %3673 = vmatpush.msra.mxu0 %v3566
        %3674 = vmatmul.f32.gmra.mxu0 %v3596
        %v3675 = vpop.f32.mrf.mxu0
        %v3676 = vadd.f32 0.0, %v3675
        %3677 = vdwg.mxu0
        %v3678 = vadd.f32 %v3482, %v3616
        %v3679 = vadd.f32 %v3483, %v3636
        %v3680 = vadd.f32 %v3484, %v3656
        %v3681 = vadd.f32 %v3485, %v3676
        %3682 = vrot.lane.b32.xlu0 %v1125, 64
        %v3683 = vpop.permute.xlu0 %3682
        %3684 = vrot.lane.b32.xlu0 %v1705, 64
        %v3685 = vpop.permute.xlu0 %3684
        %v3686 = vsel %vm2287, %v3683, 0
        %v3688 = vsel %vm2287, %v3685, 0
        %3690 = vmatpush.xpose.msra.mxu0 0.0
        %3691 = vmatpush.xpose.msra.mxu0 0.0
        %3692 = vmatpush.xpose.msra.mxu0 0.0
        %3693 = vmatpush.xpose.msra.mxu0 0.0
        %3694 = vmatpush.xpose.msra.mxu0 0.0
        %3695 = vmatpush.xpose.msra.mxu0 0.0
        %3696 = vmatpush.xpose.msra.mxu0 0.0
        %3697 = vmatpush.xpose.msra.mxu0 0.0
        %3698 = vmatpush.xpose.msra.mxu0 0.0
        %3699 = vmatpush.xpose.msra.mxu0 0.0
        %3700 = vmatpush.xpose.msra.mxu0 0.0
        %3701 = vmatpush.xpose.msra.mxu0 0.0
        %3702 = vmatpush.xpose.msra.mxu0 0.0
        %3703 = vmatpush.xpose.msra.mxu0 0.0
        %3704 = vmatpush.xpose.msra.mxu0 0.0
        %3705 = vmatpush.xpose.msra.mxu0 %v3688
        %3706 = vmatmul.f32.gmra.mxu0 %v3686
        %v3707 = vpop.f32.mrf.mxu0
        %v3708 = vadd.f32 0.0, %v3707
        %3709 = vdwg.mxu0
        %v3710 = vmul.f32 %v3708, 0.125
        %v3711 = vsel %vm2318, -1e+09, %v3710
        %v3712 = vsel %vm2320, %v3711, -inf
        %3713 = vmax.xlane.f32.xlu0 %v3712
        %v3714 = vpop.xlane.xlu0 %3713
        %v3715 = vsub.f32 %v3711, %v3714
        %v3716 = vmul.f32 %v3715, 1.442695
        %v3717 = vpow.pop %v3716
        %v3718 = vsel %vm2320, %v3717, 0.0
        %3719 = vadd.xlane.f32.xlu0 %v3718
        %v3720 = vpop.xlane.xlu0 %3719
        %v3721 = vrcp.pop %v3720
        %v3722 = vmul.f32 %v3720, %v3721
        %v3723 = vsub.f32 1.0, %v3722
        %v3724 = vmul.f32 %v3721, %v3723
        %v3725 = vadd.f32 %v3721, %v3724
        %vm3726 = vweird.f32 %v3720
        %vm3727 = vweird.f32 %v3721
        %vm3728 = vmor %vm3726, %vm3727
        %v3729 = vsel %vm3728, %v3721, %v3725
        %v3730 = vand.u32 2147483647, %v3720
        %vm3731 = vcmp.eq.f32.partialorder %v3730, 8.507059e+37
        %v3732 = vand.u32 %v3720, 2147483648
        %v3733 = vor.u32 1.1754944e-38, %v3732
        %v3734 = vsel %vm3731, %v3733, %v3729
        %v3735 = vmul.f32 %v3717, %v3734
        %s3736 = scalar_lea.vmem %s543, 56 [#allocation17]
        %3737 = vst.msk [vmem:[%s3736] sm:$0xff] %vm2320, %v3735
        %3739 = vrot.lane.b32.xlu0 %v2285, 64
        %v3740 = vpop.permute.xlu0 %3739
        %v3743 = vsel %vm2320, %v3735, 0
        %3745 = vmatpush.msra.mxu0 0.0
        %3746 = vmatpush.msra.mxu0 0.0
        %3747 = vmatpush.msra.mxu0 0.0
        %3748 = vmatpush.msra.mxu0 0.0
        %3749 = vmatpush.msra.mxu0 0.0
        %3750 = vmatpush.msra.mxu0 0.0
        %3751 = vmatpush.msra.mxu0 0.0
        %3752 = vmatpush.msra.mxu0 0.0
        %3753 = vmatpush.msra.mxu0 0.0
        %3754 = vmatpush.msra.mxu0 0.0
        %3755 = vmatpush.msra.mxu0 0.0
        %3756 = vmatpush.msra.mxu0 0.0
        %3757 = vmatpush.msra.mxu0 0.0
        %3758 = vmatpush.msra.mxu0 0.0
        %3759 = vmatpush.msra.mxu0 0.0
        %3760 = vmatpush.msra.mxu0 %v3740
        %3761 = vmatmul.f32.gmra.mxu0 %v3743
        %v3762 = vpop.f32.mrf.mxu0
        %v3763 = vadd.f32 0.0, %v3762
        %3764 = vdwg.mxu0
        %v3765 = vld [vmem:[#allocation14 + $0x700] sm:$0xff]
        %v3766 = vld [vmem:[#allocation14 + $0x708] sm:$0xff]
        %v3767 = vld [vmem:[#allocation14 + $0x710] sm:$0xff]
        %v3768 = vld [vmem:[#allocation14 + $0x718] sm:$0xff]
        %v3769 = vld [vmem:[#allocation14 + $0x720] sm:$0xff]
        %v3770 = vld [vmem:[#allocation14 + $0x728] sm:$0xff]
        %v3771 = vld [vmem:[#allocation14 + $0x730] sm:$0xff]
        %v3772 = vld [vmem:[#allocation14 + $0x738] sm:$0xff]
        %v3773 = vld [vmem:[#allocation14 + $0x740] sm:$0xff]
        %v3774 = vld [vmem:[#allocation14 + $0x748] sm:$0xff]
        %v3775 = vld [vmem:[#allocation14 + $0x750] sm:$0xff]
        %v3776 = vld [vmem:[#allocation14 + $0x758] sm:$0xff]
        %v3777 = vld [vmem:[#allocation14 + $0x760] sm:$0xff]
        %v3778 = vld [vmem:[#allocation14 + $0x768] sm:$0xff]
        %v3779 = vld [vmem:[#allocation14 + $0x770] sm:$0xff]
        %v3780 = vld [vmem:[#allocation14 + $0x778] sm:$0xff]
        %v3781 = vld [vmem:[#allocation14 + $0x780] sm:$0xff]
        %v3782 = vld [vmem:[#allocation14 + $0x788] sm:$0xff]
        %v3783 = vld [vmem:[#allocation14 + $0x790] sm:$0xff]
        %v3784 = vld [vmem:[#allocation14 + $0x798] sm:$0xff]
        %v3785 = vld [vmem:[#allocation14 + $0x7a0] sm:$0xff]
        %v3786 = vld [vmem:[#allocation14 + $0x7a8] sm:$0xff]
        %v3787 = vld [vmem:[#allocation14 + $0x7b0] sm:$0xff]
        %v3788 = vld [vmem:[#allocation14 + $0x7b8] sm:$0xff]
        %v3789 = vld [vmem:[#allocation14 + $0x7c0] sm:$0xff]
        %v3790 = vld [vmem:[#allocation14 + $0x7c8] sm:$0xff]
        %v3791 = vld [vmem:[#allocation14 + $0x7d0] sm:$0xff]
        %v3792 = vld [vmem:[#allocation14 + $0x7d8] sm:$0xff]
        %v3793 = vld [vmem:[#allocation14 + $0x7e0] sm:$0xff]
        %v3794 = vld [vmem:[#allocation14 + $0x7e8] sm:$0xff]
        %v3795 = vld [vmem:[#allocation14 + $0x7f0] sm:$0xff]
        %v3796 = vld [vmem:[#allocation14 + $0x7f8] sm:$0xff]
        %v3798 = vsel %vm2287, %v3763, 0
        %3800 = vmatpush.msra.mxu0 0.0
        %3801 = vmatpush.msra.mxu0 0.0
        %3802 = vmatpush.msra.mxu0 0.0
        %3803 = vmatpush.msra.mxu0 0.0
        %3804 = vmatpush.msra.mxu0 0.0
        %3805 = vmatpush.msra.mxu0 0.0
        %3806 = vmatpush.msra.mxu0 0.0
        %3807 = vmatpush.msra.mxu0 0.0
        %3808 = vmatpush.msra.mxu0 %v3793
        %3809 = vmatpush.msra.mxu0 %v3789
        %3810 = vmatpush.msra.mxu0 %v3785
        %3811 = vmatpush.msra.mxu0 %v3781
        %3812 = vmatpush.msra.mxu0 %v3777
        %3813 = vmatpush.msra.mxu0 %v3773
        %3814 = vmatpush.msra.mxu0 %v3769
        %3815 = vmatpush.msra.mxu0 %v3765
        %3816 = vmatmul.f32.gmra.mxu0 %v3798
        %v3817 = vpop.f32.mrf.mxu0
        %v3818 = vadd.f32 0.0, %v3817
        %3819 = vdwg.mxu0
        %3820 = vmatpush.msra.mxu0 0.0
        %3821 = vmatpush.msra.mxu0 0.0
        %3822 = vmatpush.msra.mxu0 0.0
        %3823 = vmatpush.msra.mxu0 0.0
        %3824 = vmatpush.msra.mxu0 0.0
        %3825 = vmatpush.msra.mxu0 0.0
        %3826 = vmatpush.msra.mxu0 0.0
        %3827 = vmatpush.msra.mxu0 0.0
        %3828 = vmatpush.msra.mxu0 %v3794
        %3829 = vmatpush.msra.mxu0 %v3790
        %3830 = vmatpush.msra.mxu0 %v3786
        %3831 = vmatpush.msra.mxu0 %v3782
        %3832 = vmatpush.msra.mxu0 %v3778
        %3833 = vmatpush.msra.mxu0 %v3774
        %3834 = vmatpush.msra.mxu0 %v3770
        %3835 = vmatpush.msra.mxu0 %v3766
        %3836 = vmatmul.f32.gmra.mxu0 %v3798
        %v3837 = vpop.f32.mrf.mxu0
        %v3838 = vadd.f32 0.0, %v3837
        %3839 = vdwg.mxu0
        %3840 = vmatpush.msra.mxu0 0.0
        %3841 = vmatpush.msra.mxu0 0.0
        %3842 = vmatpush.msra.mxu0 0.0
        %3843 = vmatpush.msra.mxu0 0.0
        %3844 = vmatpush.msra.mxu0 0.0
        %3845 = vmatpush.msra.mxu0 0.0
        %3846 = vmatpush.msra.mxu0 0.0
        %3847 = vmatpush.msra.mxu0 0.0
        %3848 = vmatpush.msra.mxu0 %v3795
        %3849 = vmatpush.msra.mxu0 %v3791
        %3850 = vmatpush.msra.mxu0 %v3787
        %3851 = vmatpush.msra.mxu0 %v3783
        %3852 = vmatpush.msra.mxu0 %v3779
        %3853 = vmatpush.msra.mxu0 %v3775
        %3854 = vmatpush.msra.mxu0 %v3771
        %3855 = vmatpush.msra.mxu0 %v3767
        %3856 = vmatmul.f32.gmra.mxu0 %v3798
        %v3857 = vpop.f32.mrf.mxu0
        %v3858 = vadd.f32 0.0, %v3857
        %3859 = vdwg.mxu0
        %3860 = vmatpush.msra.mxu0 0.0
        %3861 = vmatpush.msra.mxu0 0.0
        %3862 = vmatpush.msra.mxu0 0.0
        %3863 = vmatpush.msra.mxu0 0.0
        %3864 = vmatpush.msra.mxu0 0.0
        %3865 = vmatpush.msra.mxu0 0.0
        %3866 = vmatpush.msra.mxu0 0.0
        %3867 = vmatpush.msra.mxu0 0.0
        %3868 = vmatpush.msra.mxu0 %v3796
        %3869 = vmatpush.msra.mxu0 %v3792
        %3870 = vmatpush.msra.mxu0 %v3788
        %3871 = vmatpush.msra.mxu0 %v3784
        %3872 = vmatpush.msra.mxu0 %v3780
        %3873 = vmatpush.msra.mxu0 %v3776
        %3874 = vmatpush.msra.mxu0 %v3772
        %3875 = vmatpush.msra.mxu0 %v3768
        %3876 = vmatmul.f32.gmra.mxu0 %v3798
        %v3877 = vpop.f32.mrf.mxu0
        %v3878 = vadd.f32 0.0, %v3877
        %3879 = vdwg.mxu0
        %v3880 = vadd.f32 %v3678, %v3818
        %v3881 = vadd.f32 %v3679, %v3838
        %v3882 = vadd.f32 %v3680, %v3858
        %v3883 = vadd.f32 %v3681, %v3878
        %v3884 = vadd.f32 %v3880, %v3881
        %v3885 = vadd.f32 %v3884, %v3882
        %v3886 = vadd.f32 %v3885, %v3883
        %3887 = vadd.xlane.f32.xlu0 %v3886
        %v3888 = vpop.xlane.xlu0 %3887
        %v3889 = vrcp.pop 512.0
        %v3890 = vmul.f32 512.0, %v3889
        %v3891 = vsub.f32 1.0, %v3890
        %v3892 = vmul.f32 %v3889, %v3891
        %v3893 = vadd.f32 %v3889, %v3892
        %vm3894 = vweird.f32 %v3889
        %v3895 = vsel %vm3894, %v3889, %v3893
        %v3896 = vmul.f32 %v3888, %v3895
        %v3897 = vsub.f32 %v3880, %v3896
        %v3898 = vsub.f32 %v3881, %v3896
        %v3899 = vsub.f32 %v3882, %v3896
        %v3900 = vsub.f32 %v3883, %v3896
        %v3901 = vmul.f32 %v3897, %v3897
        %v3902 = vmul.f32 %v3898, %v3898
        %v3903 = vmul.f32 %v3899, %v3899
        %v3904 = vmul.f32 %v3900, %v3900
        %v3905 = vadd.f32 %v3901, %v3902
        %v3906 = vadd.f32 %v3905, %v3903
        %v3907 = vadd.f32 %v3906, %v3904
        %3908 = vadd.xlane.f32.xlu0 %v3907
        %v3909 = vpop.xlane.xlu0 %3908
        %v3910 = vmul.f32 %v3909, %v3895
        %v3911 = vadd.f32 %v3910, 1e-05
        %v3912 = vrsqrt.pop %v3911
        %v3913 = vmul.f32 %v3912, %v3911
        %v3914 = vmul.f32 %v3913, %v3912
        %v3915 = vmul.f32 0.5, %v3914
        %v3916 = vsub.f32 1.5, %v3915
        %v3917 = vmul.f32 %v3912, %v3916
        %vm3918 = vweird.f32 %v3911
        %vm3919 = vweird.f32 %v3912
        %vm3920 = vmor %vm3918, %vm3919
        %v3921 = vsel %vm3920, %v3912, %v3917
        %v3922 = vmul.f32 %v3897, %v3921
        %v3923 = vmul.f32 %v3898, %v3921
        %v3924 = vmul.f32 %v3899, %v3921
        %v3925 = vmul.f32 %v3900, %v3921
        %3926 = vst [vmem:[%s536] sm:$0xff] %v3922
        %3927 = vst [vmem:[%s536 + $0x8] sm:$0xff] %v3923
        %3928 = vst [vmem:[%s536 + $0x10] sm:$0xff] %v3924
        %3929 = vst [vmem:[%s536 + $0x18] sm:$0xff] %v3925
        %s3930 = sand.u32 %s234, 1
        %s3931 = scalar_lea.sflag [#allocation4], %s3930
        %s3932 = sand.u32 %s234, 1
        %s3933 = smul.addr %s3932, 32
        %s3934 = scalar_lea.vmem [#allocation16], %s3933
        %s3935 = sand.u32 %s260, 1
        %s3936 = scalar_lea.sflag [#allocation18], %s3935
        %s3937 = sand.u32 %s260, 1
        %s3938 = smul.addr %s3937, 64
        %s3939 = scalar_lea.vmem [#allocation17], %s3938
        // Predicated region
        $region85: #{tpu_custom_call.1} parent=51 // pred_check
          %p3940 = pneg %p244
        $region86: #{tpu_custom_call.1} parent=51 // pred_check_branch
          %3942 = sbr.rel (%p3940) target = $region88
        $region87: #{tpu_custom_call.1} parent=51 // pred_region
          %3944 = vsyncadd %s3931, 0
          %s3945 = smul.addr %s38, 4
          %s3946 = smul.addr %s3945, 8
          %s3947 = scalar_lea.hbm %s8, %s3946
          %s3949 = sshll.u32 %s3934, 4
          %s3950 = int_to_ptr.vmem [resolvable:$true] %s3949
          %s3951 = sshll.u32 %s3947, 4
          %s3952 = int_to_ptr.hbm [resolvable:$true] %s3951
          %3954 = dma.vmem_to_hbm [thread:$0]  %s3950, 512, %s3952, %s3931
        $region88: #{tpu_custom_call.1} parent=51 // pred_fallthru
          _
        // Predicated region
        $region89: #{tpu_custom_call.1} parent=51 // pred_check
          %p3955 = pneg %p270
        $region90: #{tpu_custom_call.1} parent=51 // pred_check_branch
          %3957 = sbr.rel (%p3955) target = $region92
        $region91: #{tpu_custom_call.1} parent=51 // pred_region
          %3959 = vsyncadd %s3936, 0
          %s3960 = smul.addr %s38, 8
          %s3961 = smul.addr %s3960, 8
          %s3962 = scalar_lea.hbm %s9, %s3961
          %s3963 = sshll.u32 %s3939, 4
          %s3964 = int_to_ptr.vmem [resolvable:$true] %s3963
          %s3965 = sshll.u32 %s3962, 4
          %s3966 = int_to_ptr.hbm [resolvable:$true] %s3965
          %3971 = dma.vmem_to_hbm [thread:$0]  %s3964, 1024, %s3966, %s3936, 128, 128, 8
        $region92: #{tpu_custom_call.1} parent=51 // pred_fallthru
          _
      $region52: #{tpu_custom_call.1} parent=5 // pred_fallthru
        _
      %p3972 = scmp.le.s32.totalorder 2, %s33
      // Predicated region
      $region93: #{tpu_custom_call.1} parent=5 // pred_check
        %p3973 = pneg %p3972
      $region94: #{tpu_custom_call.1} parent=5 // pred_check_branch
        %3975 = sbr.rel (%p3973) target = $region96
      $region95: #{tpu_custom_call.1} parent=5 // pred_region
        %s3976 = ssub.s32 %s33, 2
        // Predicated region
        $region97: #{tpu_custom_call.1} parent=95 // pred_check
          %p3977 = pneg %p250
        $region98: #{tpu_custom_call.1} parent=95 // pred_check_branch
          %3979 = sbr.rel (%p3977) target = $region100
        $region99: #{tpu_custom_call.1} parent=95 // pred_region
          %s3980 = sand.u32 %s235, 1
          %s3981 = scalar_lea.sflag [#allocation4], %s3980
          %s3982 = sand.u32 %s235, 1
          %s3983 = smul.addr %s3982, 32
          %s3984 = scalar_lea.vmem [#allocation16], %s3983
          %3986 = dma.done %s3981, 512
        $region100: #{tpu_custom_call.1} parent=95 // pred_fallthru
          _
        // Predicated region
        $region101: #{tpu_custom_call.1} parent=95 // pred_check
          %p3987 = pneg %p276
        $region102: #{tpu_custom_call.1} parent=95 // pred_check_branch
          %3989 = sbr.rel (%p3987) target = $region104
        $region103: #{tpu_custom_call.1} parent=95 // pred_region
          %s3990 = sand.u32 %s261, 1
          %s3991 = scalar_lea.sflag [#allocation18], %s3990
          %s3992 = sand.u32 %s261, 1
          %s3993 = smul.addr %s3992, 64
          %s3994 = scalar_lea.vmem [#allocation17], %s3993
          %3996 = dma.done %s3991, 1024
        $region104: #{tpu_custom_call.1} parent=95 // pred_fallthru
          _
      $region96: #{tpu_custom_call.1} parent=5 // pred_fallthru
        _
    $region6: #{tpu_custom_call.1} parent=1 // loop_footer
      %s37 = sadd.s32 1, %s33
    $region7: #{tpu_custom_call.1} parent=1 // loop_footer_branch
      %32 = sbr.rel target = $region3
    $region8: #{tpu_custom_call.1} parent=1 // loop_exit
      _
    %3997 = vsyncpa [#allocation3], 1
    %s3998 = scalar_lea.sflag [#allocation3], 1
    %3999 = vsyncpa %s3998, 1
    %4000 = vsyncpa [#allocation6], 1
    %s4001 = scalar_lea.sflag [#allocation6], 1
    %4002 = vsyncpa %s4001, 1
    %4003 = vsyncpa [#allocation9], 1
    %s4004 = scalar_lea.sflag [#allocation9], 1
    %4005 = vsyncpa %s4004, 1
    %4006 = vsyncpa [#allocation12], 1
    %4007 = vsyncpa [#allocation15], 1
    %4008 = vsyncpa [#allocation4], 1
    %s4009 = scalar_lea.sflag [#allocation4], 1
    %4010 = vsyncpa %s4009, 1
    %4011 = vsyncpa [#allocation18], 1
    %s4012 = scalar_lea.sflag [#allocation18], 1
    %4013 = vsyncpa %s4012, 1

</llo_original>
